<compile_context>
chip_gen: v5e
topology: v5e:2x2
jax: 0.10.0
libtpu: 0.0.40
codegen_flags: <defaults>
</compile_context>

<pallas_src>
import numpy as np

import jax
import jax.numpy as jnp
from jax import lax
from jax.experimental import pallas as pl
from jax.experimental.pallas import tpu as pltpu


# ------------------------------ fused Pallas kernel ---------------------------

def _fused_forward_kernel(x_ref, yemb_ref,
                          m1_ref, s1_ref, t1_ref,
                          m2_ref, s2_ref, t2_ref,
                          m3_ref, s3_ref, t3_ref,
                          w3a_ref, b3_ref,
                          w4_ref, b4_ref,
                          wf_ref, bf_ref,
                          o_ref):
    f32 = jnp.float32
    bf16 = jnp.bfloat16

    # conv1 + BN1 + ReLU   (conv lowered to a flat Toeplitz matmul; conv bias
    # and replicate H-padding folded into t1 / m1; bf16 operands, f32 accum)
    h = jnp.dot(x_ref[...].astype(bf16), m1_ref[...], preferred_element_type=f32)
    h = jnp.maximum(h * s1_ref[...] + t1_ref[...], 0.0)

    # conv2 + BN2 + ReLU   (nn.Dropout(p=0.1) is identity in eval mode)
    h = jnp.dot(h.astype(bf16), m2_ref[...], preferred_element_type=f32)
    h = jnp.maximum(h * s2_ref[...] + t2_ref[...], 0.0)

    # conv3 + BN3 + ReLU   (nn.Dropout(p=0.1) is identity in eval mode)
    h = jnp.dot(h.astype(bf16), m3_ref[...], preferred_element_type=f32)
    h = jnp.maximum(h * s3_ref[...] + t3_ref[...], 0.0)

    # flatten + concat(label embedding) + fc3 + ReLU.  The label contribution
    # (emb_table @ fc3_embedding_rows)[y] is gathered on the host (yemb) and
    # simply added here.
    z = (jnp.dot(h.astype(bf16), w3a_ref[...], preferred_element_type=f32)
         + yemb_ref[...] + b3_ref[...])
    z = jnp.maximum(z, 0.0)

    # TODO(synk): F.dropout(training=self.training) between fc3 and fc4 is
    #             identity in eval mode and is therefore omitted.
    z = jnp.maximum(jnp.dot(z.astype(bf16), w4_ref[...], preferred_element_type=f32)
                    + b4_ref[...], 0.0)                       # relu(fc4)

    # fc_final kept in f32 (tiny matmul) for extra headroom on the logit.
    z = jnp.dot(z, wf_ref[...], preferred_element_type=f32) + bf_ref[...]

    # numerically stable sigmoid
    ez = jnp.exp(-jnp.abs(z))
    inv = 1.0 / (1.0 + ez)
    o_ref[...] = jnp.where(z >= 0.0, inv, ez * inv)


_VMEM = pl.BlockSpec(memory_space=pltpu.MemorySpace.VMEM)


def imu_lara_discriminator_forward(fused, x, y):
    """x: [B, 1, H, W] float32 (NCHW), y: [B] int32 class labels."""
    B = x.shape[0]
    # bf16 matmul LHS packs 16 rows per sublane tile -> pad batch to 16.
    b_pad = ((B + 15) // 16) * 16
    k1 = fused["m1"].shape[0]
    n_out = fused["wf"].shape[1]

    x_flat = x.reshape(B, -1).astype(jnp.float32)             # C=1: NCHW flatten
    x_flat = jnp.pad(x_flat, ((0, b_pad - B), (0, k1 - x_flat.shape[1])))

    # Host-side label embedding: (emb_table @ fc3_embedding_rows)[y]  -> [B,256].
    # Tiny XLA gather; replaces the in-kernel one-hot matmul and the w3e operand.
    yemb = jnp.take(fused["emb_fc3"], y.astype(jnp.int32), axis=0)
    yemb = jnp.pad(yemb, ((0, b_pad - B), (0, 0)))

    operands = (x_flat, yemb,
                fused["m1"], fused["s1"], fused["t1"],
                fused["m2"], fused["s2"], fused["t2"],
                fused["m3"], fused["s3"], fused["t3"],
                fused["w3a"], fused["b3"],
                fused["w4"], fused["b4"],
                fused["wf"], fused["bf"])

    mats = [fused[k] for k in ("m1", "m2", "m3", "w3a", "w4", "wf")]
    flops = 2 * b_pad * sum(int(m.shape[0]) * int(m.shape[1]) for m in mats)
    bytes_accessed = (sum(int(v.size) * int(v.dtype.itemsize) for v in operands)
                      + b_pad * n_out * 4)

    out = pl.pallas_call(
        _fused_forward_kernel,
        out_shape=jax.ShapeDtypeStruct((b_pad, n_out), jnp.float32),
        in_specs=[_VMEM] * len(operands),
        out_specs=_VMEM,
        compiler_params=pltpu.CompilerParams(vmem_limit_bytes=16 * 1024 * 1024),
        cost_estimate=pl.CostEstimate(flops=flops,
                                      transcendentals=b_pad * n_out,
                                      bytes_accessed=bytes_accessed),
    )(*operands)
    return out[:B, :1]


# -------------------- host-side (once, numpy) parameter folding ---------------

def _pad_to(n, m):
    return ((n + m - 1) // m) * m


def _conv_as_flat_matrix(w, hin, win, stride, pad_h):
    """Dense M such that flat_out = flat_in @ M reproduces
    Conv2d(kernel=4, stride=stride, padding=(pad_h,0), padding_mode='replicate',
    bias=False) on per-sample NCHW-flattened ((c,h,w) order) activations."""
    cout, cin, kh, kw = w.shape
    ho = (hin + 2 * pad_h - kh) // stride + 1
    wo = (win - kw) // stride + 1
    m = np.zeros((cin * hin * win, cout * ho * wo), np.float32)
    for co in range(cout):
        for oh in range(ho):
            for ow in range(wo):
                ocol = (co * ho + oh) * wo + ow
                for ci in range(cin):
                    for dh in range(kh):
                        # replicate padding on the H axis only
                        h_src = min(max(oh * stride + dh - pad_h, 0), hin - 1)
                        for dw in range(kw):
                            w_src = ow * stride + dw
                            irow = (ci * hin + h_src) * win + w_src
                            m[irow, ocol] += w[co, ci, dh, dw]
    return m, ho, wo


def _bn_affine_columns(gamma, beta, rmean, rvar, conv_bias, cout, ho, wo, n_pad,
                       eps=1e-5):
    """Eval-mode BN folded with the conv bias, expanded to per-flat-column
    scale/shift vectors (pad columns get scale=1, shift=0 -> stay exactly 0)."""
    scale_c = gamma / np.sqrt(rvar + eps)
    shift_c = beta - rmean * scale_c + conv_bias * scale_c
    s = np.ones((1, n_pad), np.float32)
    t = np.zeros((1, n_pad), np.float32)
    n_real = cout * ho * wo
    ch = np.arange(n_real) // (ho * wo)
    s[0, :n_real] = scale_c[ch]
    t[0, :n_real] = shift_c[ch]
    return s, t


def build_fused_params(raw, H, W, num_classes):
    LANE = 128
    k1 = _pad_to(H * W, LANE)

    m1, h1, w1 = _conv_as_flat_matrix(raw["conv1_w"], H, W, 2, 5)
    m2, h2, w2 = _conv_as_flat_matrix(raw["conv2_w"], h1, w1, 2, 0)
    m3, h3, w3 = _conv_as_flat_matrix(raw["conv3_w"], h2, w2, 2, 0)

    n1, n2, n3 = m1.shape[1], m2.shape[1], m3.shape[1]
    n1p, n2p, n3p = _pad_to(n1, LANE), _pad_to(n2, LANE), _pad_to(n3, LANE)

    def embed(mat, rows, cols):
        out = np.zeros((rows, cols), np.float32)
        out[:mat.shape[0], :mat.shape[1]] = mat
        return out

    fused = {}
    fused["m1"] = embed(m1, k1, n1p)
    fused["s1"], fused["t1"] = _bn_affine_columns(
        *raw["bn1"], raw["conv1_b"], raw["conv1_w"].shape[0], h1, w1, n1p)
    fused["m2"] = embed(m2, n1p, n2p)
    fused["s2"], fused["t2"] = _bn_affine_columns(
        *raw["bn2"], raw["conv2_b"], raw["conv2_w"].shape[0], h2, w2, n2p)
    fused["m3"] = embed(m3, n2p, n3p)
    fused["s3"], fused["t3"] = _bn_affine_columns(
        *raw["bn3"], raw["conv3_b"], raw["conv3_w"].shape[0], h3, w3, n3p)

    # fc3 acts on concat([conv_flat (n3), label_embedding (num_classes)])
    fc3_w = raw["fc3_w"]                       # [n3 + num_classes, 256]
    fused["w3a"] = embed(fc3_w[:n3], n3p, fc3_w.shape[1])
    # precomposed label path, gathered per-call on the host: [num_classes, 256]
    fused["emb_fc3"] = (raw["emb"] @ fc3_w[n3:]).astype(np.float32)
    fused["b3"] = raw["fc3_b"].reshape(1, -1).astype(np.float32)

    n4p = _pad_to(raw["fc4_w"].shape[1], LANE)
    fused["w4"] = embed(raw["fc4_w"], raw["fc4_w"].shape[0], n4p)
    fused["b4"] = embed(raw["fc4_b"].reshape(1, -1), 1, n4p)
    nfp = _pad_to(raw["fcf_w"].shape[1], LANE)
    fused["wf"] = embed(raw["fcf_w"], n4p, nfp)
    fused["bf"] = embed(raw["fcf_b"].reshape(1, -1), 1, nfp)

    # bf16 for the big streamed matmul operands; everything else stays f32.
    bf16_keys = ("m1", "m2", "m3", "w3a", "w4")
    return {k: jnp.asarray(v, dtype=(jnp.bfloat16 if k in bf16_keys else jnp.float32))
            for k, v in fused.items()}


# ------------------------------ parameter init --------------------------------

def init_raw_params(seed, H, W, num_classes):
    rng = np.random.default_rng(seed)

    def conv_layer(cin, cout, k=4):
        s = 1.0 / np.sqrt(cin * k * k)
        w = rng.uniform(-s, s, (cout, cin, k, k)).astype(np.float32)
        b = rng.uniform(-s, s, cout).astype(np.float32)
        gamma = rng.uniform(0.5, 1.5, cout).astype(np.float32)
        beta = rng.uniform(-0.1, 0.1, cout).astype(np.float32)
        rmean = rng.uniform(-0.1, 0.1, cout).astype(np.float32)
        rvar = rng.uniform(0.5, 1.5, cout).astype(np.float32)
        return w, b, (gamma, beta, rmean, rvar)

    def linear(fin, fout):
        s = 1.0 / np.sqrt(fin)
        w = rng.uniform(-s, s, (fin, fout)).astype(np.float32)
        b = rng.uniform(-s, s, fout).astype(np.float32)
        return w, b

    def out_hw(h, w, k, st, ph):
        return (h + 2 * ph - k) // st + 1, (w - k) // st + 1

    h1, w1 = out_hw(H, W, 4, 2, 5)
    h2, w2 = out_hw(h1, w1, 4, 2, 0)
    h3, w3 = out_hw(h2, w2, 4, 2, 0)
    # TODO(synk): the module hard-codes fc3 in_features = 34*4*10 (only valid
    # for one input resolution); here it is derived from the actual conv
    # output + num_classes, preserving the forward-pass structure.
    fc3_in = 4 * h3 * w3 + num_classes

    raw = {}
    raw["conv1_w"], raw["conv1_b"], raw["bn1"] = conv_layer(1, 2)
    raw["conv2_w"], raw["conv2_b"], raw["bn2"] = conv_layer(2, 4)
    raw["conv3_w"], raw["conv3_b"], raw["bn3"] = conv_layer(4, 4)
    raw["fc3_w"], raw["fc3_b"] = linear(fc3_in, 256)
    raw["fc4_w"], raw["fc4_b"] = linear(256, 126)
    raw["fcf_w"], raw["fcf_b"] = linear(126, 1)
    raw["emb"] = rng.normal(0.0, 1.0, (num_classes, num_classes)).astype(np.float32)
    # Note: self.avgpool is defined by the module but never used in forward().
    return raw


# ------------------------ plain-JAX reference (checking) ----------------------

def reference_forward(raw, x, y):
    hi = jax.lax.Precision.HIGHEST

    def conv_bn_relu(h, w, b, bn, stride, pad_h):
        if pad_h:
            h = jnp.pad(h, ((0, 0), (0, 0), (pad_h, pad_h), (0, 0)), mode="edge")
        h = lax.conv_general_dilated(
            h, jnp.asarray(w), (stride, stride), "VALID",
            dimension_numbers=("NCHW", "OIHW", "NCHW"), precision=hi)
        h = h + jnp.asarray(b).reshape(1, -1, 1, 1)
        gamma, beta, rmean, rvar = (jnp.asarray(a).reshape(1, -1, 1, 1) for a in bn)
        h = gamma * (h - rmean) / jnp.sqrt(rvar + 1e-5) + beta
        return jnp.maximum(h, 0.0)

    h = conv_bn_relu(x, raw["conv1_w"], raw["conv1_b"], raw["bn1"], 2, 5)
    h = conv_bn_relu(h, raw["conv2_w"], raw["conv2_b"], raw["bn2"], 2, 0)
    h = conv_bn_relu(h, raw["conv3_w"], raw["conv3_b"], raw["bn3"], 2, 0)
    B = h.shape[0]
    flat = h.reshape(B, -1)
    emb = jnp.asarray(raw["emb"])[y]
    z = jnp.concatenate([flat, emb], axis=1)
    z = jnp.maximum(jnp.dot(z, jnp.asarray(raw["fc3_w"]), precision=hi) + raw["fc3_b"], 0.0)
    z = jnp.maximum(jnp.dot(z, jnp.asarray(raw["fc4_w"]), precision=hi) + raw["fc4_b"], 0.0)
    z = jnp.dot(z, jnp.asarray(raw["fcf_w"]), precision=hi) + raw["fcf_b"]
    return jax.nn.sigmoid(z)


# ------------------------------------ main -------------------------------------

if __name__ == "__main__":
    B, H, W = 2, 32, 40          # small [batch, 1, Channels, Time] consistent with the module
    NUM_CLASSES = 16

    key = jax.random.PRNGKey(0)
    kx, ky = jax.random.split(key)
    x = jax.random.normal(kx, (B, 1, H, W), dtype=jnp.float32)
    y = jax.random.randint(ky, (B,), 0, NUM_CLASSES, dtype=jnp.int32)

    raw = init_raw_params(0, H, W, NUM_CLASSES)
    fused = build_fused_params(raw, H, W, NUM_CLASSES)

    fwd = jax.jit(imu_lara_discriminator_forward)
    out = fwd(fused, x, y)
    jax.block_until_ready(out)

    assert out.shape == (B, 1)
    assert bool(jnp.all(jnp.isfinite(out)))
    assert bool(jnp.all((out >= 0.0) & (out <= 1.0)))

    ref = reference_forward(raw, x, y)
    assert bool(jnp.max(jnp.abs(out - ref)) < 5e-2), (out, ref)

    print("KERNEL_OK")
</pallas_src>

<mosaic_0001>
module attributes {stable_mosaic.version = 11 : i64} {
  func.func @_fused_forward_kernel(%arg0: memref<16x1280xf32, #tpu.memory_space<vmem>>, %arg1: memref<16x256xf32, #tpu.memory_space<vmem>>, %arg2: memref<1280x768xbf16, #tpu.memory_space<vmem>>, %arg3: memref<1x768xf32, #tpu.memory_space<vmem>>, %arg4: memref<1x768xf32, #tpu.memory_space<vmem>>, %arg5: memref<768x384xbf16, #tpu.memory_space<vmem>>, %arg6: memref<1x384xf32, #tpu.memory_space<vmem>>, %arg7: memref<1x384xf32, #tpu.memory_space<vmem>>, %arg8: memref<384x128xbf16, #tpu.memory_space<vmem>>, %arg9: memref<1x128xf32, #tpu.memory_space<vmem>>, %arg10: memref<1x128xf32, #tpu.memory_space<vmem>>, %arg11: memref<128x256xbf16, #tpu.memory_space<vmem>>, %arg12: memref<1x256xf32, #tpu.memory_space<vmem>>, %arg13: memref<256x128xbf16, #tpu.memory_space<vmem>>, %arg14: memref<1x128xf32, #tpu.memory_space<vmem>>, %arg15: memref<128x128xf32, #tpu.memory_space<vmem>>, %arg16: memref<1x128xf32, #tpu.memory_space<vmem>>, %arg17: memref<16x128xf32, #tpu.memory_space<vmem>>) attributes {dimension_semantics = [], scalar_prefetch = 0 : i64, scratch_operands = 0 : i64, tpu.core_type = #tpu.core_type<tc>} {
    %c0 = arith.constant 0 : index
    %c0_0 = arith.constant 0 : index
    %0 = vector.load %arg0[%c0, %c0_0] : memref<16x1280xf32, #tpu.memory_space<vmem>>, vector<16x1280xf32>
    %1 = arith.truncf %0 : vector<16x1280xf32> to vector<16x1280xbf16>
    %c0_1 = arith.constant 0 : index
    %c0_2 = arith.constant 0 : index
    %2 = vector.load %arg2[%c0_1, %c0_2] : memref<1280x768xbf16, #tpu.memory_space<vmem>>, vector<1280x768xbf16>
    %cst = arith.constant dense<0.000000e+00> : vector<16x768xf32>
    %3 = tpu.matmul %1, %2, %cst {dimension_numbers = #tpu.dot_dimension_numbers<[1], [0], [0], [1], [0, 0, 1, 1], [], []>} : vector<16x1280xbf16>, vector<1280x768xbf16>, vector<16x768xf32> -> vector<16x768xf32>
    %c0_3 = arith.constant 0 : index
    %c0_4 = arith.constant 0 : index
    %4 = vector.load %arg3[%c0_3, %c0_4] : memref<1x768xf32, #tpu.memory_space<vmem>>, vector<1x768xf32>
    %5 = vector.broadcast %4 : vector<1x768xf32> to vector<16x768xf32>
    %6 = arith.mulf %3, %5 : vector<16x768xf32>
    %c0_5 = arith.constant 0 : index
    %c0_6 = arith.constant 0 : index
    %7 = vector.load %arg4[%c0_5, %c0_6] : memref<1x768xf32, #tpu.memory_space<vmem>>, vector<1x768xf32>
    %8 = vector.broadcast %7 : vector<1x768xf32> to vector<16x768xf32>
    %9 = arith.addf %6, %8 : vector<16x768xf32>
    %cst_7 = arith.constant 0.000000e+00 : f32
    %10 = vector.broadcast %cst_7 : f32 to vector<16x768xf32>
    %11 = arith.maximumf %9, %10 : vector<16x768xf32>
    %12 = arith.truncf %11 : vector<16x768xf32> to vector<16x768xbf16>
    %c0_8 = arith.constant 0 : index
    %c0_9 = arith.constant 0 : index
    %13 = vector.load %arg5[%c0_8, %c0_9] : memref<768x384xbf16, #tpu.memory_space<vmem>>, vector<768x384xbf16>
    %cst_10 = arith.constant dense<0.000000e+00> : vector<16x384xf32>
    %14 = tpu.matmul %12, %13, %cst_10 {dimension_numbers = #tpu.dot_dimension_numbers<[1], [0], [0], [1], [0, 0, 1, 1], [], []>} : vector<16x768xbf16>, vector<768x384xbf16>, vector<16x384xf32> -> vector<16x384xf32>
    %c0_11 = arith.constant 0 : index
    %c0_12 = arith.constant 0 : index
    %15 = vector.load %arg6[%c0_11, %c0_12] : memref<1x384xf32, #tpu.memory_space<vmem>>, vector<1x384xf32>
    %16 = vector.broadcast %15 : vector<1x384xf32> to vector<16x384xf32>
    %17 = arith.mulf %14, %16 : vector<16x384xf32>
    %c0_13 = arith.constant 0 : index
    %c0_14 = arith.constant 0 : index
    %18 = vector.load %arg7[%c0_13, %c0_14] : memref<1x384xf32, #tpu.memory_space<vmem>>, vector<1x384xf32>
    %19 = vector.broadcast %18 : vector<1x384xf32> to vector<16x384xf32>
    %20 = arith.addf %17, %19 : vector<16x384xf32>
    %cst_15 = arith.constant 0.000000e+00 : f32
    %21 = vector.broadcast %cst_15 : f32 to vector<16x384xf32>
    %22 = arith.maximumf %20, %21 : vector<16x384xf32>
    %23 = arith.truncf %22 : vector<16x384xf32> to vector<16x384xbf16>
    %c0_16 = arith.constant 0 : index
    %c0_17 = arith.constant 0 : index
    %24 = vector.load %arg8[%c0_16, %c0_17] : memref<384x128xbf16, #tpu.memory_space<vmem>>, vector<384x128xbf16>
    %cst_18 = arith.constant dense<0.000000e+00> : vector<16x128xf32>
    %25 = tpu.matmul %23, %24, %cst_18 {dimension_numbers = #tpu.dot_dimension_numbers<[1], [0], [0], [1], [0, 0, 1, 1], [], []>} : vector<16x384xbf16>, vector<384x128xbf16>, vector<16x128xf32> -> vector<16x128xf32>
    %c0_19 = arith.constant 0 : index
    %c0_20 = arith.constant 0 : index
    %26 = vector.load %arg9[%c0_19, %c0_20] : memref<1x128xf32, #tpu.memory_space<vmem>>, vector<1x128xf32>
    %27 = vector.broadcast %26 : vector<1x128xf32> to vector<16x128xf32>
    %28 = arith.mulf %25, %27 : vector<16x128xf32>
    %c0_21 = arith.constant 0 : index
    %c0_22 = arith.constant 0 : index
    %29 = vector.load %arg10[%c0_21, %c0_22] : memref<1x128xf32, #tpu.memory_space<vmem>>, vector<1x128xf32>
    %30 = vector.broadcast %29 : vector<1x128xf32> to vector<16x128xf32>
    %31 = arith.addf %28, %30 : vector<16x128xf32>
    %cst_23 = arith.constant 0.000000e+00 : f32
    %32 = vector.broadcast %cst_23 : f32 to vector<16x128xf32>
    %33 = arith.maximumf %31, %32 : vector<16x128xf32>
    %34 = arith.truncf %33 : vector<16x128xf32> to vector<16x128xbf16>
    %c0_24 = arith.constant 0 : index
    %c0_25 = arith.constant 0 : index
    %35 = vector.load %arg11[%c0_24, %c0_25] : memref<128x256xbf16, #tpu.memory_space<vmem>>, vector<128x256xbf16>
    %cst_26 = arith.constant dense<0.000000e+00> : vector<16x256xf32>
    %36 = tpu.matmul %34, %35, %cst_26 {dimension_numbers = #tpu.dot_dimension_numbers<[1], [0], [0], [1], [0, 0, 1, 1], [], []>} : vector<16x128xbf16>, vector<128x256xbf16>, vector<16x256xf32> -> vector<16x256xf32>
    %c0_27 = arith.constant 0 : index
    %c0_28 = arith.constant 0 : index
    %37 = vector.load %arg1[%c0_27, %c0_28] : memref<16x256xf32, #tpu.memory_space<vmem>>, vector<16x256xf32>
    %38 = arith.addf %36, %37 : vector<16x256xf32>
    %c0_29 = arith.constant 0 : index
    %c0_30 = arith.constant 0 : index
    %39 = vector.load %arg12[%c0_29, %c0_30] : memref<1x256xf32, #tpu.memory_space<vmem>>, vector<1x256xf32>
    %40 = vector.broadcast %39 : vector<1x256xf32> to vector<16x256xf32>
    %41 = arith.addf %38, %40 : vector<16x256xf32>
    %cst_31 = arith.constant 0.000000e+00 : f32
    %42 = vector.broadcast %cst_31 : f32 to vector<16x256xf32>
    %43 = arith.maximumf %41, %42 : vector<16x256xf32>
    %44 = arith.truncf %43 : vector<16x256xf32> to vector<16x256xbf16>
    %c0_32 = arith.constant 0 : index
    %c0_33 = arith.constant 0 : index
    %45 = vector.load %arg13[%c0_32, %c0_33] : memref<256x128xbf16, #tpu.memory_space<vmem>>, vector<256x128xbf16>
    %cst_34 = arith.constant dense<0.000000e+00> : vector<16x128xf32>
    %46 = tpu.matmul %44, %45, %cst_34 {dimension_numbers = #tpu.dot_dimension_numbers<[1], [0], [0], [1], [0, 0, 1, 1], [], []>} : vector<16x256xbf16>, vector<256x128xbf16>, vector<16x128xf32> -> vector<16x128xf32>
    %c0_35 = arith.constant 0 : index
    %c0_36 = arith.constant 0 : index
    %47 = vector.load %arg14[%c0_35, %c0_36] : memref<1x128xf32, #tpu.memory_space<vmem>>, vector<1x128xf32>
    %48 = vector.broadcast %47 : vector<1x128xf32> to vector<16x128xf32>
    %49 = arith.addf %46, %48 : vector<16x128xf32>
    %cst_37 = arith.constant 0.000000e+00 : f32
    %50 = vector.broadcast %cst_37 : f32 to vector<16x128xf32>
    %51 = arith.maximumf %49, %50 : vector<16x128xf32>
    %c0_38 = arith.constant 0 : index
    %c0_39 = arith.constant 0 : index
    %52 = vector.load %arg15[%c0_38, %c0_39] : memref<128x128xf32, #tpu.memory_space<vmem>>, vector<128x128xf32>
    %cst_40 = arith.constant dense<0.000000e+00> : vector<16x128xf32>
    %53 = tpu.matmul %51, %52, %cst_40 {dimension_numbers = #tpu.dot_dimension_numbers<[1], [0], [0], [1], [0, 0, 1, 1], [], []>} : vector<16x128xf32>, vector<128x128xf32>, vector<16x128xf32> -> vector<16x128xf32>
    %c0_41 = arith.constant 0 : index
    %c0_42 = arith.constant 0 : index
    %54 = vector.load %arg16[%c0_41, %c0_42] : memref<1x128xf32, #tpu.memory_space<vmem>>, vector<1x128xf32>
    %55 = vector.broadcast %54 : vector<1x128xf32> to vector<16x128xf32>
    %56 = arith.addf %53, %55 : vector<16x128xf32>
    %57 = math.absf %56 : vector<16x128xf32>
    %cst_43 = arith.constant 0.000000e+00 : f32
    %58 = vector.broadcast %cst_43 : f32 to vector<16x128xf32>
    %59 = arith.subf %58, %57 : vector<16x128xf32>
    %60 = math.exp %59 : vector<16x128xf32>
    %cst_44 = arith.constant 1.000000e+00 : f32
    %61 = vector.broadcast %cst_44 : f32 to vector<16x128xf32>
    %62 = arith.addf %61, %60 : vector<16x128xf32>
    %cst_45 = arith.constant 1.000000e+00 : f32
    %63 = vector.broadcast %cst_45 : f32 to vector<16x128xf32>
    %64 = arith.divf %63, %62 : vector<16x128xf32>
    %cst_46 = arith.constant 0.000000e+00 : f32
    %65 = vector.broadcast %cst_46 : f32 to vector<16x128xf32>
    %66 = arith.cmpf oge, %56, %65 : vector<16x128xf32>
    %67 = arith.mulf %60, %64 : vector<16x128xf32>
    %68 = arith.select %66, %64, %67 : vector<16x128xi1>, vector<16x128xf32>
    %c0_47 = arith.constant 0 : index
    %c0_48 = arith.constant 0 : index
    %69 = vector.load %arg17[%c0_47, %c0_48] : memref<16x128xf32, #tpu.memory_space<vmem>>, vector<16x128xf32>
    tpu.vector_store %arg17[%c0_47, %c0_48], %68 {strides = array<i32>} : memref<16x128xf32, #tpu.memory_space<vmem>>, vector<16x128xf32>,
    return
  }
}

</mosaic_0001>

<llo_original>
// kernel: imu_lara_discriminator_forward.1
$region0: #{imu_lara_discriminator_forward.1}
  #allocation0 [shape = 'u32[]', space=smem, size = 0x4, offset = 0x4, fixed_abs, tag = 'smem constant byte address 0x4 - core index']
  #allocation1 [shape = 'u32[72,128]{1,0:T(1,128)}', space=vmem, size = 0x9000, scoped, tag = 'internal scratch']
  %s0 = inlined_call_operand.vmem [shape: f32[16,1280], index: 0, kind: input, shape index: {}]
  %s1 = inlined_call_operand.vmem [shape: f32[16,256], index: 1, kind: input, shape index: {}]
  %s2 = inlined_call_operand.hbm [shape: bf16[1280,768], index: 2, kind: input, shape index: {}]
  %s3 = inlined_call_operand.hbm [shape: f32[1,768], index: 3, kind: input, shape index: {}]
  %s4 = inlined_call_operand.hbm [shape: f32[1,768], index: 4, kind: input, shape index: {}]
  %s5 = inlined_call_operand.hbm [shape: bf16[768,384], index: 5, kind: input, shape index: {}]
  %s6 = inlined_call_operand.hbm [shape: f32[1,384], index: 6, kind: input, shape index: {}]
  %s7 = inlined_call_operand.hbm [shape: f32[1,384], index: 7, kind: input, shape index: {}]
  %s8 = inlined_call_operand.hbm [shape: bf16[384,128], index: 8, kind: input, shape index: {}]
  %s9 = inlined_call_operand.hbm [shape: f32[1,128], index: 9, kind: input, shape index: {}]
  %s10 = inlined_call_operand.hbm [shape: f32[1,128], index: 10, kind: input, shape index: {}]
  %s11 = inlined_call_operand.hbm [shape: bf16[128,256], index: 11, kind: input, shape index: {}]
  %s12 = inlined_call_operand.hbm [shape: f32[1,256], index: 12, kind: input, shape index: {}]
  %s13 = inlined_call_operand.hbm [shape: bf16[256,128], index: 13, kind: input, shape index: {}]
  %s14 = inlined_call_operand.hbm [shape: f32[1,128], index: 14, kind: input, shape index: {}]
  %s15 = inlined_call_operand.hbm [shape: f32[128,128], index: 15, kind: input, shape index: {}]
  %s16 = inlined_call_operand.hbm [shape: f32[1,128], index: 16, kind: input, shape index: {}]
  %s17 = inlined_call_operand.vmem [shape: f32[16,128], index: 17, kind: output, shape index: {}]
  %s18 = sld [smem:[#allocation0]]
  $region138: #{imu_lara_discriminator_forward.1} parent=0
    _
  %s20 = ssub.s32 1, %s18
  %s21 = scalar_select 0, %s20, %s18
  $region1: #{imu_lara_discriminator_forward.1} parent=0
    #allocation2 [shape = 'u8[1966080]{0}', space=vmem, size = 0x1e0000, scoped, tag = 'input window, operand 2, single buffered']
    #allocation3 [shape = 's32[1]{0}', space=sflag, size = 0x4, scoped, tag = 'scoped memory for imu_lara_discriminator_forward.1']
    #allocation4 [shape = 'u8[3072]{0}', space=vmem, size = 0xc00, scoped, tag = 'input window, operand 3, single buffered']
    #allocation5 [shape = 's32[1]{0}', space=sflag, size = 0x4, scoped, tag = 'scoped memory for imu_lara_discriminator_forward.1']
    #allocation6 [shape = 'u8[3072]{0}', space=vmem, size = 0xc00, scoped, tag = 'input window, operand 4, single buffered']
    #allocation7 [shape = 'u8[589824]{0}', space=vmem, size = 0x90000, scoped, tag = 'input window, operand 5, single buffered']
    #allocation8 [shape = 's32[1]{0}', space=sflag, size = 0x4, scoped, tag = 'scoped memory for imu_lara_discriminator_forward.1']
    #allocation9 [shape = 'u8[1536]{0}', space=vmem, size = 0x800, scoped, tag = 'input window, operand 6, single buffered']
    #allocation10 [shape = 'u8[1536]{0}', space=vmem, size = 0x800, scoped, tag = 'input window, operand 7, single buffered']
    #allocation11 [shape = 's32[1]{0}', space=sflag, size = 0x4, scoped, tag = 'scoped memory for imu_lara_discriminator_forward.1']
    #allocation12 [shape = 'u8[98304]{0}', space=vmem, size = 0x18000, scoped, tag = 'input window, operand 8, single buffered']
    #allocation13 [shape = 'u8[512]{0}', space=vmem, size = 0x400, scoped, tag = 'input window, operand 9, single buffered']
    #allocation14 [shape = 's32[1]{0}', space=sflag, size = 0x4, scoped, tag = 'scoped memory for imu_lara_discriminator_forward.1']
    #allocation15 [shape = 'u8[512]{0}', space=vmem, size = 0x400, scoped, tag = 'input window, operand 10, single buffered']
    #allocation16 [shape = 'u8[65536]{0}', space=vmem, size = 0x10000, scoped, tag = 'input window, operand 11, single buffered']
    #allocation17 [shape = 's32[1]{0}', space=sflag, size = 0x4, scoped, tag = 'scoped memory for imu_lara_discriminator_forward.1']
    #allocation18 [shape = 'u8[1024]{0}', space=vmem, size = 0x400, scoped, tag = 'input window, operand 12, single buffered']
    #allocation19 [shape = 'u8[65536]{0}', space=vmem, size = 0x10000, scoped, tag = 'input window, operand 13, single buffered']
    #allocation20 [shape = 's32[1]{0}', space=sflag, size = 0x4, scoped, tag = 'scoped memory for imu_lara_discriminator_forward.1']
    #allocation21 [shape = 'u8[512]{0}', space=vmem, size = 0x400, scoped, tag = 'input window, operand 14, single buffered']
    #allocation22 [shape = 'u8[65536]{0}', space=vmem, size = 0x10000, scoped, tag = 'input window, operand 15, single buffered']
    #allocation23 [shape = 's32[1]{0}', space=sflag, size = 0x4, scoped, tag = 'scoped memory for imu_lara_discriminator_forward.1']
    #allocation24 [shape = 'u8[512]{0}', space=vmem, size = 0x400, scoped, tag = 'input window, operand 16, single buffered']
    %22 = vsyncpa [#allocation3], 0
    %23 = vsyncpa [#allocation5], 0
    %24 = vsyncpa [#allocation8], 0
    %25 = vsyncpa [#allocation11], 0
    %26 = vsyncpa [#allocation14], 0
    %27 = vsyncpa [#allocation17], 0
    %28 = vsyncpa [#allocation20], 0
    %29 = vsyncpa [#allocation23], 0
    // Predicated region
    $region2: #{imu_lara_discriminator_forward.1} parent=1 // pred_check
      _
    $region3: #{imu_lara_discriminator_forward.1} parent=1 // pred_check_branch
      %31 = sbr.rel (0) target = $region5
    $region4: #{imu_lara_discriminator_forward.1} parent=1 // pred_region
      _
    $region5: #{imu_lara_discriminator_forward.1} parent=1 // pred_fallthru
      _
    // Predicated region
    $region6: #{imu_lara_discriminator_forward.1} parent=1 // pred_check
      _
    $region7: #{imu_lara_discriminator_forward.1} parent=1 // pred_check_branch
      %33 = sbr.rel (0) target = $region9
    $region8: #{imu_lara_discriminator_forward.1} parent=1 // pred_region
      _
    $region9: #{imu_lara_discriminator_forward.1} parent=1 // pred_fallthru
      _
    // Predicated region
    $region10: #{imu_lara_discriminator_forward.1} parent=1 // pred_check
      _
    $region11: #{imu_lara_discriminator_forward.1} parent=1 // pred_check_branch
      %35 = sbr.rel (0) target = $region13
    $region12: #{imu_lara_discriminator_forward.1} parent=1 // pred_region
      %37 = vsyncadd [#allocation3], 0
      %s38 = sshll.u32 %s2, 4
      %s39 = int_to_ptr.hbm [resolvable:$true] %s38
      %s40 = sshll.u32 [#allocation2], 4
      %s41 = int_to_ptr.vmem [resolvable:$true] %s40
      %46 = dma.hbm_to_vmem [thread:$0]  %s39, 61440, %s41, [#allocation3], 384, 384, 24
    $region13: #{imu_lara_discriminator_forward.1} parent=1 // pred_fallthru
      _
    // Predicated region
    $region14: #{imu_lara_discriminator_forward.1} parent=1 // pred_check
      _
    $region15: #{imu_lara_discriminator_forward.1} parent=1 // pred_check_branch
      %48 = sbr.rel (0) target = $region17
    $region16: #{imu_lara_discriminator_forward.1} parent=1 // pred_region
      %50 = vsyncadd [#allocation5], 0
      %s52 = sshll.u32 %s3, 4
      %s53 = int_to_ptr.hbm [resolvable:$true] %s52
      %s54 = sshll.u32 [#allocation4], 4
      %s55 = int_to_ptr.vmem [resolvable:$true] %s54
      %57 = dma.hbm_to_vmem [thread:$0]  %s53, 96, %s55, [#allocation5]
    $region17: #{imu_lara_discriminator_forward.1} parent=1 // pred_fallthru
      _
    // Predicated region
    $region18: #{imu_lara_discriminator_forward.1} parent=1 // pred_check
      _
    $region19: #{imu_lara_discriminator_forward.1} parent=1 // pred_check_branch
      %59 = sbr.rel (0) target = $region21
    $region20: #{imu_lara_discriminator_forward.1} parent=1 // pred_region
      %61 = vsyncadd [#allocation5], 0
      %s63 = sshll.u32 %s4, 4
      %s64 = int_to_ptr.hbm [resolvable:$true] %s63
      %s65 = sshll.u32 [#allocation6], 4
      %s66 = int_to_ptr.vmem [resolvable:$true] %s65
      %68 = dma.hbm_to_vmem [thread:$0]  %s64, 96, %s66, [#allocation5]
    $region21: #{imu_lara_discriminator_forward.1} parent=1 // pred_fallthru
      _
    // Predicated region
    $region22: #{imu_lara_discriminator_forward.1} parent=1 // pred_check
      _
    $region23: #{imu_lara_discriminator_forward.1} parent=1 // pred_check_branch
      %70 = sbr.rel (0) target = $region25
    $region24: #{imu_lara_discriminator_forward.1} parent=1 // pred_region
      %72 = vsyncadd [#allocation8], 0
      %s73 = sshll.u32 %s5, 4
      %s74 = int_to_ptr.hbm [resolvable:$true] %s73
      %s75 = sshll.u32 [#allocation7], 4
      %s76 = int_to_ptr.vmem [resolvable:$true] %s75
      %81 = dma.hbm_to_vmem [thread:$0]  %s74, 18432, %s76, [#allocation8], 192, 192, 12
    $region25: #{imu_lara_discriminator_forward.1} parent=1 // pred_fallthru
      _
    // Predicated region
    $region26: #{imu_lara_discriminator_forward.1} parent=1 // pred_check
      _
    $region27: #{imu_lara_discriminator_forward.1} parent=1 // pred_check_branch
      %83 = sbr.rel (0) target = $region29
    $region28: #{imu_lara_discriminator_forward.1} parent=1 // pred_region
      %85 = vsyncadd [#allocation8], 0
      %s87 = sshll.u32 %s6, 4
      %s88 = int_to_ptr.hbm [resolvable:$true] %s87
      %s89 = sshll.u32 [#allocation9], 4
      %s90 = int_to_ptr.vmem [resolvable:$true] %s89
      %92 = dma.hbm_to_vmem [thread:$0]  %s88, 48, %s90, [#allocation8]
    $region29: #{imu_lara_discriminator_forward.1} parent=1 // pred_fallthru
      _
    // Predicated region
    $region30: #{imu_lara_discriminator_forward.1} parent=1 // pred_check
      _
    $region31: #{imu_lara_discriminator_forward.1} parent=1 // pred_check_branch
      %94 = sbr.rel (0) target = $region33
    $region32: #{imu_lara_discriminator_forward.1} parent=1 // pred_region
      %96 = vsyncadd [#allocation11], 0
      %s98 = sshll.u32 %s7, 4
      %s99 = int_to_ptr.hbm [resolvable:$true] %s98
      %s100 = sshll.u32 [#allocation10], 4
      %s101 = int_to_ptr.vmem [resolvable:$true] %s100
      %103 = dma.hbm_to_vmem [thread:$0]  %s99, 48, %s101, [#allocation11]
    $region33: #{imu_lara_discriminator_forward.1} parent=1 // pred_fallthru
      _
    // Predicated region
    $region34: #{imu_lara_discriminator_forward.1} parent=1 // pred_check
      _
    $region35: #{imu_lara_discriminator_forward.1} parent=1 // pred_check_branch
      %105 = sbr.rel (0) target = $region37
    $region36: #{imu_lara_discriminator_forward.1} parent=1 // pred_region
      %107 = vsyncadd [#allocation11], 0
      %s108 = sshll.u32 %s8, 4
      %s109 = int_to_ptr.hbm [resolvable:$true] %s108
      %s110 = sshll.u32 [#allocation12], 4
      %s111 = int_to_ptr.vmem [resolvable:$true] %s110
      %116 = dma.hbm_to_vmem [thread:$0]  %s109, 3072, %s111, [#allocation11], 64, 64, 4
    $region37: #{imu_lara_discriminator_forward.1} parent=1 // pred_fallthru
      _
    // Predicated region
    $region38: #{imu_lara_discriminator_forward.1} parent=1 // pred_check
      _
    $region39: #{imu_lara_discriminator_forward.1} parent=1 // pred_check_branch
      %118 = sbr.rel (0) target = $region41
    $region40: #{imu_lara_discriminator_forward.1} parent=1 // pred_region
      %120 = vsyncadd [#allocation14], 0
      %s122 = sshll.u32 %s9, 4
      %s123 = int_to_ptr.hbm [resolvable:$true] %s122
      %s124 = sshll.u32 [#allocation13], 4
      %s125 = int_to_ptr.vmem [resolvable:$true] %s124
      %127 = dma.hbm_to_vmem [thread:$0]  %s123, 16, %s125, [#allocation14]
    $region41: #{imu_lara_discriminator_forward.1} parent=1 // pred_fallthru
      _
    // Predicated region
    $region42: #{imu_lara_discriminator_forward.1} parent=1 // pred_check
      _
    $region43: #{imu_lara_discriminator_forward.1} parent=1 // pred_check_branch
      %129 = sbr.rel (0) target = $region45
    $region44: #{imu_lara_discriminator_forward.1} parent=1 // pred_region
      %131 = vsyncadd [#allocation14], 0
      %s133 = sshll.u32 %s10, 4
      %s134 = int_to_ptr.hbm [resolvable:$true] %s133
      %s135 = sshll.u32 [#allocation15], 4
      %s136 = int_to_ptr.vmem [resolvable:$true] %s135
      %138 = dma.hbm_to_vmem [thread:$0]  %s134, 16, %s136, [#allocation14]
    $region45: #{imu_lara_discriminator_forward.1} parent=1 // pred_fallthru
      _
    // Predicated region
    $region46: #{imu_lara_discriminator_forward.1} parent=1 // pred_check
      _
    $region47: #{imu_lara_discriminator_forward.1} parent=1 // pred_check_branch
      %140 = sbr.rel (0) target = $region49
    $region48: #{imu_lara_discriminator_forward.1} parent=1 // pred_region
      %142 = vsyncadd [#allocation17], 0
      %s143 = sshll.u32 %s11, 4
      %s144 = int_to_ptr.hbm [resolvable:$true] %s143
      %s145 = sshll.u32 [#allocation16], 4
      %s146 = int_to_ptr.vmem [resolvable:$true] %s145
      %151 = dma.hbm_to_vmem [thread:$0]  %s144, 2048, %s146, [#allocation17], 128, 128, 8
    $region49: #{imu_lara_discriminator_forward.1} parent=1 // pred_fallthru
      _
    // Predicated region
    $region50: #{imu_lara_discriminator_forward.1} parent=1 // pred_check
      _
    $region51: #{imu_lara_discriminator_forward.1} parent=1 // pred_check_branch
      %153 = sbr.rel (0) target = $region53
    $region52: #{imu_lara_discriminator_forward.1} parent=1 // pred_region
      %155 = vsyncadd [#allocation17], 0
      %s157 = sshll.u32 %s12, 4
      %s158 = int_to_ptr.hbm [resolvable:$true] %s157
      %s159 = sshll.u32 [#allocation18], 4
      %s160 = int_to_ptr.vmem [resolvable:$true] %s159
      %162 = dma.hbm_to_vmem [thread:$0]  %s158, 32, %s160, [#allocation17]
    $region53: #{imu_lara_discriminator_forward.1} parent=1 // pred_fallthru
      _
    // Predicated region
    $region54: #{imu_lara_discriminator_forward.1} parent=1 // pred_check
      _
    $region55: #{imu_lara_discriminator_forward.1} parent=1 // pred_check_branch
      %164 = sbr.rel (0) target = $region57
    $region56: #{imu_lara_discriminator_forward.1} parent=1 // pred_region
      %166 = vsyncadd [#allocation20], 0
      %s167 = sshll.u32 %s13, 4
      %s168 = int_to_ptr.hbm [resolvable:$true] %s167
      %s169 = sshll.u32 [#allocation19], 4
      %s170 = int_to_ptr.vmem [resolvable:$true] %s169
      %175 = dma.hbm_to_vmem [thread:$0]  %s168, 2048, %s170, [#allocation20], 64, 64, 4
    $region57: #{imu_lara_discriminator_forward.1} parent=1 // pred_fallthru
      _
    // Predicated region
    $region58: #{imu_lara_discriminator_forward.1} parent=1 // pred_check
      _
    $region59: #{imu_lara_discriminator_forward.1} parent=1 // pred_check_branch
      %177 = sbr.rel (0) target = $region61
    $region60: #{imu_lara_discriminator_forward.1} parent=1 // pred_region
      %179 = vsyncadd [#allocation20], 0
      %s181 = sshll.u32 %s14, 4
      %s182 = int_to_ptr.hbm [resolvable:$true] %s181
      %s183 = sshll.u32 [#allocation21], 4
      %s184 = int_to_ptr.vmem [resolvable:$true] %s183
      %186 = dma.hbm_to_vmem [thread:$0]  %s182, 16, %s184, [#allocation20]
    $region61: #{imu_lara_discriminator_forward.1} parent=1 // pred_fallthru
      _
    // Predicated region
    $region62: #{imu_lara_discriminator_forward.1} parent=1 // pred_check
      _
    $region63: #{imu_lara_discriminator_forward.1} parent=1 // pred_check_branch
      %188 = sbr.rel (0) target = $region65
    $region64: #{imu_lara_discriminator_forward.1} parent=1 // pred_region
      %190 = vsyncadd [#allocation23], 0
      %s191 = sshll.u32 %s15, 4
      %s192 = int_to_ptr.hbm [resolvable:$true] %s191
      %s193 = sshll.u32 [#allocation22], 4
      %s194 = int_to_ptr.vmem [resolvable:$true] %s193
      %199 = dma.hbm_to_vmem [thread:$0]  %s192, 2048, %s194, [#allocation23], 128, 128, 8
    $region65: #{imu_lara_discriminator_forward.1} parent=1 // pred_fallthru
      _
    // Predicated region
    $region66: #{imu_lara_discriminator_forward.1} parent=1 // pred_check
      _
    $region67: #{imu_lara_discriminator_forward.1} parent=1 // pred_check_branch
      %201 = sbr.rel (0) target = $region69
    $region68: #{imu_lara_discriminator_forward.1} parent=1 // pred_region
      %203 = vsyncadd [#allocation23], 0
      %s205 = sshll.u32 %s16, 4
      %s206 = int_to_ptr.hbm [resolvable:$true] %s205
      %s207 = sshll.u32 [#allocation24], 4
      %s208 = int_to_ptr.vmem [resolvable:$true] %s207
      %210 = dma.hbm_to_vmem [thread:$0]  %s206, 16, %s208, [#allocation23]
    $region69: #{imu_lara_discriminator_forward.1} parent=1 // pred_fallthru
      _
    // Predicated region
    $region70: #{imu_lara_discriminator_forward.1} parent=1 // pred_check
      _
    $region71: #{imu_lara_discriminator_forward.1} parent=1 // pred_check_branch
      %212 = sbr.rel (0) target = $region73
    $region72: #{imu_lara_discriminator_forward.1} parent=1 // pred_region
      %214 = dma.done [#allocation3], 61440
    $region73: #{imu_lara_discriminator_forward.1} parent=1 // pred_fallthru
      _
    // Predicated region
    $region74: #{imu_lara_discriminator_forward.1} parent=1 // pred_check
      _
    $region75: #{imu_lara_discriminator_forward.1} parent=1 // pred_check_branch
      %216 = sbr.rel (0) target = $region77
    $region76: #{imu_lara_discriminator_forward.1} parent=1 // pred_region
      %218 = dma.done [#allocation5], 96
    $region77: #{imu_lara_discriminator_forward.1} parent=1 // pred_fallthru
      _
    // Predicated region
    $region78: #{imu_lara_discriminator_forward.1} parent=1 // pred_check
      _
    $region79: #{imu_lara_discriminator_forward.1} parent=1 // pred_check_branch
      %220 = sbr.rel (0) target = $region81
    $region80: #{imu_lara_discriminator_forward.1} parent=1 // pred_region
      %222 = dma.done [#allocation5], 96
    $region81: #{imu_lara_discriminator_forward.1} parent=1 // pred_fallthru
      _
    // Predicated region
    $region82: #{imu_lara_discriminator_forward.1} parent=1 // pred_check
      _
    $region83: #{imu_lara_discriminator_forward.1} parent=1 // pred_check_branch
      %224 = sbr.rel (0) target = $region85
    $region84: #{imu_lara_discriminator_forward.1} parent=1 // pred_region
      %226 = dma.done [#allocation8], 18432
    $region85: #{imu_lara_discriminator_forward.1} parent=1 // pred_fallthru
      _
    // Predicated region
    $region86: #{imu_lara_discriminator_forward.1} parent=1 // pred_check
      _
    $region87: #{imu_lara_discriminator_forward.1} parent=1 // pred_check_branch
      %228 = sbr.rel (0) target = $region89
    $region88: #{imu_lara_discriminator_forward.1} parent=1 // pred_region
      %230 = dma.done [#allocation8], 48
    $region89: #{imu_lara_discriminator_forward.1} parent=1 // pred_fallthru
      _
    // Predicated region
    $region90: #{imu_lara_discriminator_forward.1} parent=1 // pred_check
      _
    $region91: #{imu_lara_discriminator_forward.1} parent=1 // pred_check_branch
      %232 = sbr.rel (0) target = $region93
    $region92: #{imu_lara_discriminator_forward.1} parent=1 // pred_region
      %234 = dma.done [#allocation11], 48
    $region93: #{imu_lara_discriminator_forward.1} parent=1 // pred_fallthru
      _
    // Predicated region
    $region94: #{imu_lara_discriminator_forward.1} parent=1 // pred_check
      _
    $region95: #{imu_lara_discriminator_forward.1} parent=1 // pred_check_branch
      %236 = sbr.rel (0) target = $region97
    $region96: #{imu_lara_discriminator_forward.1} parent=1 // pred_region
      %238 = dma.done [#allocation11], 3072
    $region97: #{imu_lara_discriminator_forward.1} parent=1 // pred_fallthru
      _
    // Predicated region
    $region98: #{imu_lara_discriminator_forward.1} parent=1 // pred_check
      _
    $region99: #{imu_lara_discriminator_forward.1} parent=1 // pred_check_branch
      %240 = sbr.rel (0) target = $region101
    $region100: #{imu_lara_discriminator_forward.1} parent=1 // pred_region
      %242 = dma.done [#allocation14], 16
    $region101: #{imu_lara_discriminator_forward.1} parent=1 // pred_fallthru
      _
    // Predicated region
    $region102: #{imu_lara_discriminator_forward.1} parent=1 // pred_check
      _
    $region103: #{imu_lara_discriminator_forward.1} parent=1 // pred_check_branch
      %244 = sbr.rel (0) target = $region105
    $region104: #{imu_lara_discriminator_forward.1} parent=1 // pred_region
      %246 = dma.done [#allocation14], 16
    $region105: #{imu_lara_discriminator_forward.1} parent=1 // pred_fallthru
      _
    // Predicated region
    $region106: #{imu_lara_discriminator_forward.1} parent=1 // pred_check
      _
    $region107: #{imu_lara_discriminator_forward.1} parent=1 // pred_check_branch
      %248 = sbr.rel (0) target = $region109
    $region108: #{imu_lara_discriminator_forward.1} parent=1 // pred_region
      %250 = dma.done [#allocation17], 2048
    $region109: #{imu_lara_discriminator_forward.1} parent=1 // pred_fallthru
      _
    // Predicated region
    $region110: #{imu_lara_discriminator_forward.1} parent=1 // pred_check
      _
    $region111: #{imu_lara_discriminator_forward.1} parent=1 // pred_check_branch
      %252 = sbr.rel (0) target = $region113
    $region112: #{imu_lara_discriminator_forward.1} parent=1 // pred_region
      %254 = dma.done [#allocation17], 32
    $region113: #{imu_lara_discriminator_forward.1} parent=1 // pred_fallthru
      _
    // Predicated region
    $region114: #{imu_lara_discriminator_forward.1} parent=1 // pred_check
      _
    $region115: #{imu_lara_discriminator_forward.1} parent=1 // pred_check_branch
      %256 = sbr.rel (0) target = $region117
    $region116: #{imu_lara_discriminator_forward.1} parent=1 // pred_region
      %258 = dma.done [#allocation20], 2048
    $region117: #{imu_lara_discriminator_forward.1} parent=1 // pred_fallthru
      _
    // Predicated region
    $region118: #{imu_lara_discriminator_forward.1} parent=1 // pred_check
      _
    $region119: #{imu_lara_discriminator_forward.1} parent=1 // pred_check_branch
      %260 = sbr.rel (0) target = $region121
    $region120: #{imu_lara_discriminator_forward.1} parent=1 // pred_region
      %262 = dma.done [#allocation20], 16
    $region121: #{imu_lara_discriminator_forward.1} parent=1 // pred_fallthru
      _
    // Predicated region
    $region122: #{imu_lara_discriminator_forward.1} parent=1 // pred_check
      _
    $region123: #{imu_lara_discriminator_forward.1} parent=1 // pred_check_branch
      %264 = sbr.rel (0) target = $region125
    $region124: #{imu_lara_discriminator_forward.1} parent=1 // pred_region
      %266 = dma.done [#allocation23], 2048
    $region125: #{imu_lara_discriminator_forward.1} parent=1 // pred_fallthru
      _
    // Predicated region
    $region126: #{imu_lara_discriminator_forward.1} parent=1 // pred_check
      _
    $region127: #{imu_lara_discriminator_forward.1} parent=1 // pred_check_branch
      %268 = sbr.rel (0) target = $region129
    $region128: #{imu_lara_discriminator_forward.1} parent=1 // pred_region
      %270 = dma.done [#allocation23], 16
    $region129: #{imu_lara_discriminator_forward.1} parent=1 // pred_fallthru
      _
    %v271 = vld [vmem:[%s0] sm:$0xff]
    %v272 = vld [vmem:[%s0 + $0x8] sm:$0xff]
    %v273 = vld [vmem:[%s0 + $0x10] sm:$0xff]
    %v274 = vld [vmem:[%s0 + $0x18] sm:$0xff]
    %v275 = vld [vmem:[%s0 + $0x20] sm:$0xff]
    %v276 = vld [vmem:[%s0 + $0x28] sm:$0xff]
    %v277 = vld [vmem:[%s0 + $0x30] sm:$0xff]
    %v278 = vld [vmem:[%s0 + $0x38] sm:$0xff]
    %v279 = vld [vmem:[%s0 + $0x40] sm:$0xff]
    %v280 = vld [vmem:[%s0 + $0x48] sm:$0xff]
    %v281 = vld [vmem:[%s0 + $0x50] sm:$0xff]
    %v282 = vld [vmem:[%s0 + $0x58] sm:$0xff]
    %v283 = vld [vmem:[%s0 + $0x60] sm:$0xff]
    %v284 = vld [vmem:[%s0 + $0x68] sm:$0xff]
    %v285 = vld [vmem:[%s0 + $0x70] sm:$0xff]
    %v286 = vld [vmem:[%s0 + $0x78] sm:$0xff]
    %v287 = vld [vmem:[%s0 + $0x80] sm:$0xff]
    %v288 = vld [vmem:[%s0 + $0x88] sm:$0xff]
    %v289 = vld [vmem:[%s0 + $0x90] sm:$0xff]
    %v290 = vld [vmem:[%s0 + $0x98] sm:$0xff]
    %v291 = vpack.c.bf16 %v281, %v271
    %v292 = vpack.c.bf16 %v282, %v272
    %v293 = vpack.c.bf16 %v283, %v273
    %v294 = vpack.c.bf16 %v284, %v274
    %v295 = vpack.c.bf16 %v285, %v275
    %v296 = vpack.c.bf16 %v286, %v276
    %v297 = vpack.c.bf16 %v287, %v277
    %v298 = vpack.c.bf16 %v288, %v278
    %v299 = vpack.c.bf16 %v289, %v279
    %v300 = vpack.c.bf16 %v290, %v280
    %v301 = vld [vmem:[#allocation2] sm:$0xff]
    %v302 = vld [vmem:[#allocation2 + $0x8] sm:$0xff]
    %v303 = vld [vmem:[#allocation2 + $0x10] sm:$0xff]
    %v304 = vld [vmem:[#allocation2 + $0x18] sm:$0xff]
    %v305 = vld [vmem:[#allocation2 + $0x20] sm:$0xff]
    %v306 = vld [vmem:[#allocation2 + $0x28] sm:$0xff]
    %v307 = vld [vmem:[#allocation2 + $0x30] sm:$0xff]
    %v308 = vld [vmem:[#allocation2 + $0x38] sm:$0xff]
    %v309 = vld [vmem:[#allocation2 + $0x40] sm:$0xff]
    %v310 = vld [vmem:[#allocation2 + $0x48] sm:$0xff]
    %v311 = vld [vmem:[#allocation2 + $0x50] sm:$0xff]
    %v312 = vld [vmem:[#allocation2 + $0x58] sm:$0xff]
    %v313 = vld [vmem:[#allocation2 + $0x60] sm:$0xff]
    %v314 = vld [vmem:[#allocation2 + $0x68] sm:$0xff]
    %v315 = vld [vmem:[#allocation2 + $0x70] sm:$0xff]
    %v316 = vld [vmem:[#allocation2 + $0x78] sm:$0xff]
    %v317 = vld [vmem:[#allocation2 + $0x80] sm:$0xff]
    %v318 = vld [vmem:[#allocation2 + $0x88] sm:$0xff]
    %v319 = vld [vmem:[#allocation2 + $0x90] sm:$0xff]
    %v320 = vld [vmem:[#allocation2 + $0x98] sm:$0xff]
    %v321 = vld [vmem:[#allocation2 + $0xa0] sm:$0xff]
    %v322 = vld [vmem:[#allocation2 + $0xa8] sm:$0xff]
    %v323 = vld [vmem:[#allocation2 + $0xb0] sm:$0xff]
    %v324 = vld [vmem:[#allocation2 + $0xb8] sm:$0xff]
    %v325 = vld [vmem:[#allocation2 + $0xc0] sm:$0xff]
    %v326 = vld [vmem:[#allocation2 + $0xc8] sm:$0xff]
    %v327 = vld [vmem:[#allocation2 + $0xd0] sm:$0xff]
    %v328 = vld [vmem:[#allocation2 + $0xd8] sm:$0xff]
    %v329 = vld [vmem:[#allocation2 + $0xe0] sm:$0xff]
    %v330 = vld [vmem:[#allocation2 + $0xe8] sm:$0xff]
    %v331 = vld [vmem:[#allocation2 + $0xf0] sm:$0xff]
    %v332 = vld [vmem:[#allocation2 + $0xf8] sm:$0xff]
    %v333 = vld [vmem:[#allocation2 + $0x100] sm:$0xff]
    %v334 = vld [vmem:[#allocation2 + $0x108] sm:$0xff]
    %v335 = vld [vmem:[#allocation2 + $0x110] sm:$0xff]
    %v336 = vld [vmem:[#allocation2 + $0x118] sm:$0xff]
    %v337 = vld [vmem:[#allocation2 + $0x120] sm:$0xff]
    %v338 = vld [vmem:[#allocation2 + $0x128] sm:$0xff]
    %v339 = vld [vmem:[#allocation2 + $0x130] sm:$0xff]
    %v340 = vld [vmem:[#allocation2 + $0x138] sm:$0xff]
    %v341 = vld [vmem:[#allocation2 + $0x140] sm:$0xff]
    %v342 = vld [vmem:[#allocation2 + $0x148] sm:$0xff]
    %v343 = vld [vmem:[#allocation2 + $0x150] sm:$0xff]
    %v344 = vld [vmem:[#allocation2 + $0x158] sm:$0xff]
    %v345 = vld [vmem:[#allocation2 + $0x160] sm:$0xff]
    %v346 = vld [vmem:[#allocation2 + $0x168] sm:$0xff]
    %v347 = vld [vmem:[#allocation2 + $0x170] sm:$0xff]
    %v348 = vld [vmem:[#allocation2 + $0x178] sm:$0xff]
    %v349 = vld [vmem:[#allocation2 + $0x180] sm:$0xff]
    %v350 = vld [vmem:[#allocation2 + $0x188] sm:$0xff]
    %v351 = vld [vmem:[#allocation2 + $0x190] sm:$0xff]
    %v352 = vld [vmem:[#allocation2 + $0x198] sm:$0xff]
    %v353 = vld [vmem:[#allocation2 + $0x1a0] sm:$0xff]
    %v354 = vld [vmem:[#allocation2 + $0x1a8] sm:$0xff]
    %v355 = vld [vmem:[#allocation2 + $0x1b0] sm:$0xff]
    %v356 = vld [vmem:[#allocation2 + $0x1b8] sm:$0xff]
    %v357 = vld [vmem:[#allocation2 + $0x1c0] sm:$0xff]
    %v358 = vld [vmem:[#allocation2 + $0x1c8] sm:$0xff]
    %v359 = vld [vmem:[#allocation2 + $0x1d0] sm:$0xff]
    %v360 = vld [vmem:[#allocation2 + $0x1d8] sm:$0xff]
    %v361 = vld [vmem:[#allocation2 + $0x1e0] sm:$0xff]
    %v362 = vld [vmem:[#allocation2 + $0x1e8] sm:$0xff]
    %v363 = vld [vmem:[#allocation2 + $0x1f0] sm:$0xff]
    %v364 = vld [vmem:[#allocation2 + $0x1f8] sm:$0xff]
    %v365 = vld [vmem:[#allocation2 + $0x200] sm:$0xff]
    %v366 = vld [vmem:[#allocation2 + $0x208] sm:$0xff]
    %v367 = vld [vmem:[#allocation2 + $0x210] sm:$0xff]
    %v368 = vld [vmem:[#allocation2 + $0x218] sm:$0xff]
    %v369 = vld [vmem:[#allocation2 + $0x220] sm:$0xff]
    %v370 = vld [vmem:[#allocation2 + $0x228] sm:$0xff]
    %v371 = vld [vmem:[#allocation2 + $0x230] sm:$0xff]
    %v372 = vld [vmem:[#allocation2 + $0x238] sm:$0xff]
    %v373 = vld [vmem:[#allocation2 + $0x240] sm:$0xff]
    %v374 = vld [vmem:[#allocation2 + $0x248] sm:$0xff]
    %v375 = vld [vmem:[#allocation2 + $0x250] sm:$0xff]
    %v376 = vld [vmem:[#allocation2 + $0x258] sm:$0xff]
    %v377 = vld [vmem:[#allocation2 + $0x260] sm:$0xff]
    %v378 = vld [vmem:[#allocation2 + $0x268] sm:$0xff]
    %v379 = vld [vmem:[#allocation2 + $0x270] sm:$0xff]
    %v380 = vld [vmem:[#allocation2 + $0x278] sm:$0xff]
    %v381 = vld [vmem:[#allocation2 + $0x280] sm:$0xff]
    %v382 = vld [vmem:[#allocation2 + $0x288] sm:$0xff]
    %v383 = vld [vmem:[#allocation2 + $0x290] sm:$0xff]
    %v384 = vld [vmem:[#allocation2 + $0x298] sm:$0xff]
    %v385 = vld [vmem:[#allocation2 + $0x2a0] sm:$0xff]
    %v386 = vld [vmem:[#allocation2 + $0x2a8] sm:$0xff]
    %v387 = vld [vmem:[#allocation2 + $0x2b0] sm:$0xff]
    %v388 = vld [vmem:[#allocation2 + $0x2b8] sm:$0xff]
    %v389 = vld [vmem:[#allocation2 + $0x2c0] sm:$0xff]
    %v390 = vld [vmem:[#allocation2 + $0x2c8] sm:$0xff]
    %v391 = vld [vmem:[#allocation2 + $0x2d0] sm:$0xff]
    %v392 = vld [vmem:[#allocation2 + $0x2d8] sm:$0xff]
    %v393 = vld [vmem:[#allocation2 + $0x2e0] sm:$0xff]
    %v394 = vld [vmem:[#allocation2 + $0x2e8] sm:$0xff]
    %v395 = vld [vmem:[#allocation2 + $0x2f0] sm:$0xff]
    %v396 = vld [vmem:[#allocation2 + $0x2f8] sm:$0xff]
    %v397 = vld [vmem:[#allocation2 + $0x300] sm:$0xff]
    %v398 = vld [vmem:[#allocation2 + $0x308] sm:$0xff]
    %v399 = vld [vmem:[#allocation2 + $0x310] sm:$0xff]
    %v400 = vld [vmem:[#allocation2 + $0x318] sm:$0xff]
    %v401 = vld [vmem:[#allocation2 + $0x320] sm:$0xff]
    %v402 = vld [vmem:[#allocation2 + $0x328] sm:$0xff]
    %v403 = vld [vmem:[#allocation2 + $0x330] sm:$0xff]
    %v404 = vld [vmem:[#allocation2 + $0x338] sm:$0xff]
    %v405 = vld [vmem:[#allocation2 + $0x340] sm:$0xff]
    %v406 = vld [vmem:[#allocation2 + $0x348] sm:$0xff]
    %v407 = vld [vmem:[#allocation2 + $0x350] sm:$0xff]
    %v408 = vld [vmem:[#allocation2 + $0x358] sm:$0xff]
    %v409 = vld [vmem:[#allocation2 + $0x360] sm:$0xff]
    %v410 = vld [vmem:[#allocation2 + $0x368] sm:$0xff]
    %v411 = vld [vmem:[#allocation2 + $0x370] sm:$0xff]
    %v412 = vld [vmem:[#allocation2 + $0x378] sm:$0xff]
    %v413 = vld [vmem:[#allocation2 + $0x380] sm:$0xff]
    %v414 = vld [vmem:[#allocation2 + $0x388] sm:$0xff]
    %v415 = vld [vmem:[#allocation2 + $0x390] sm:$0xff]
    %v416 = vld [vmem:[#allocation2 + $0x398] sm:$0xff]
    %v417 = vld [vmem:[#allocation2 + $0x3a0] sm:$0xff]
    %v418 = vld [vmem:[#allocation2 + $0x3a8] sm:$0xff]
    %v419 = vld [vmem:[#allocation2 + $0x3b0] sm:$0xff]
    %v420 = vld [vmem:[#allocation2 + $0x3b8] sm:$0xff]
    %v421 = vld [vmem:[#allocation2 + $0x3c0] sm:$0xff]
    %v422 = vld [vmem:[#allocation2 + $0x3c8] sm:$0xff]
    %v423 = vld [vmem:[#allocation2 + $0x3d0] sm:$0xff]
    %v424 = vld [vmem:[#allocation2 + $0x3d8] sm:$0xff]
    %v425 = vld [vmem:[#allocation2 + $0x3e0] sm:$0xff]
    %v426 = vld [vmem:[#allocation2 + $0x3e8] sm:$0xff]
    %v427 = vld [vmem:[#allocation2 + $0x3f0] sm:$0xff]
    %v428 = vld [vmem:[#allocation2 + $0x3f8] sm:$0xff]
    %v429 = vld [vmem:[#allocation2 + $0x400] sm:$0xff]
    %v430 = vld [vmem:[#allocation2 + $0x408] sm:$0xff]
    %v431 = vld [vmem:[#allocation2 + $0x410] sm:$0xff]
    %v432 = vld [vmem:[#allocation2 + $0x418] sm:$0xff]
    %v433 = vld [vmem:[#allocation2 + $0x420] sm:$0xff]
    %v434 = vld [vmem:[#allocation2 + $0x428] sm:$0xff]
    %v435 = vld [vmem:[#allocation2 + $0x430] sm:$0xff]
    %v436 = vld [vmem:[#allocation2 + $0x438] sm:$0xff]
    %v437 = vld [vmem:[#allocation2 + $0x440] sm:$0xff]
    %v438 = vld [vmem:[#allocation2 + $0x448] sm:$0xff]
    %v439 = vld [vmem:[#allocation2 + $0x450] sm:$0xff]
    %v440 = vld [vmem:[#allocation2 + $0x458] sm:$0xff]
    %v441 = vld [vmem:[#allocation2 + $0x460] sm:$0xff]
    %v442 = vld [vmem:[#allocation2 + $0x468] sm:$0xff]
    %v443 = vld [vmem:[#allocation2 + $0x470] sm:$0xff]
    %v444 = vld [vmem:[#allocation2 + $0x478] sm:$0xff]
    %v445 = vld [vmem:[#allocation2 + $0x480] sm:$0xff]
    %v446 = vld [vmem:[#allocation2 + $0x488] sm:$0xff]
    %v447 = vld [vmem:[#allocation2 + $0x490] sm:$0xff]
    %v448 = vld [vmem:[#allocation2 + $0x498] sm:$0xff]
    %v449 = vld [vmem:[#allocation2 + $0x4a0] sm:$0xff]
    %v450 = vld [vmem:[#allocation2 + $0x4a8] sm:$0xff]
    %v451 = vld [vmem:[#allocation2 + $0x4b0] sm:$0xff]
    %v452 = vld [vmem:[#allocation2 + $0x4b8] sm:$0xff]
    %v453 = vld [vmem:[#allocation2 + $0x4c0] sm:$0xff]
    %v454 = vld [vmem:[#allocation2 + $0x4c8] sm:$0xff]
    %v455 = vld [vmem:[#allocation2 + $0x4d0] sm:$0xff]
    %v456 = vld [vmem:[#allocation2 + $0x4d8] sm:$0xff]
    %v457 = vld [vmem:[#allocation2 + $0x4e0] sm:$0xff]
    %v458 = vld [vmem:[#allocation2 + $0x4e8] sm:$0xff]
    %v459 = vld [vmem:[#allocation2 + $0x4f0] sm:$0xff]
    %v460 = vld [vmem:[#allocation2 + $0x4f8] sm:$0xff]
    %v461 = vld [vmem:[#allocation2 + $0x500] sm:$0xff]
    %v462 = vld [vmem:[#allocation2 + $0x508] sm:$0xff]
    %v463 = vld [vmem:[#allocation2 + $0x510] sm:$0xff]
    %v464 = vld [vmem:[#allocation2 + $0x518] sm:$0xff]
    %v465 = vld [vmem:[#allocation2 + $0x520] sm:$0xff]
    %v466 = vld [vmem:[#allocation2 + $0x528] sm:$0xff]
    %v467 = vld [vmem:[#allocation2 + $0x530] sm:$0xff]
    %v468 = vld [vmem:[#allocation2 + $0x538] sm:$0xff]
    %v469 = vld [vmem:[#allocation2 + $0x540] sm:$0xff]
    %v470 = vld [vmem:[#allocation2 + $0x548] sm:$0xff]
    %v471 = vld [vmem:[#allocation2 + $0x550] sm:$0xff]
    %v472 = vld [vmem:[#allocation2 + $0x558] sm:$0xff]
    %v473 = vld [vmem:[#allocation2 + $0x560] sm:$0xff]
    %v474 = vld [vmem:[#allocation2 + $0x568] sm:$0xff]
    %v475 = vld [vmem:[#allocation2 + $0x570] sm:$0xff]
    %v476 = vld [vmem:[#allocation2 + $0x578] sm:$0xff]
    %v477 = vld [vmem:[#allocation2 + $0x580] sm:$0xff]
    %v478 = vld [vmem:[#allocation2 + $0x588] sm:$0xff]
    %v479 = vld [vmem:[#allocation2 + $0x590] sm:$0xff]
    %v480 = vld [vmem:[#allocation2 + $0x598] sm:$0xff]
    %v481 = vld [vmem:[#allocation2 + $0x5a0] sm:$0xff]
    %v482 = vld [vmem:[#allocation2 + $0x5a8] sm:$0xff]
    %v483 = vld [vmem:[#allocation2 + $0x5b0] sm:$0xff]
    %v484 = vld [vmem:[#allocation2 + $0x5b8] sm:$0xff]
    %v485 = vld [vmem:[#allocation2 + $0x5c0] sm:$0xff]
    %v486 = vld [vmem:[#allocation2 + $0x5c8] sm:$0xff]
    %v487 = vld [vmem:[#allocation2 + $0x5d0] sm:$0xff]
    %v488 = vld [vmem:[#allocation2 + $0x5d8] sm:$0xff]
    %v489 = vld [vmem:[#allocation2 + $0x5e0] sm:$0xff]
    %v490 = vld [vmem:[#allocation2 + $0x5e8] sm:$0xff]
    %v491 = vld [vmem:[#allocation2 + $0x5f0] sm:$0xff]
    %v492 = vld [vmem:[#allocation2 + $0x5f8] sm:$0xff]
    %v493 = vld [vmem:[#allocation2 + $0x600] sm:$0xff]
    %v494 = vld [vmem:[#allocation2 + $0x608] sm:$0xff]
    %v495 = vld [vmem:[#allocation2 + $0x610] sm:$0xff]
    %v496 = vld [vmem:[#allocation2 + $0x618] sm:$0xff]
    %v497 = vld [vmem:[#allocation2 + $0x620] sm:$0xff]
    %v498 = vld [vmem:[#allocation2 + $0x628] sm:$0xff]
    %v499 = vld [vmem:[#allocation2 + $0x630] sm:$0xff]
    %v500 = vld [vmem:[#allocation2 + $0x638] sm:$0xff]
    %v501 = vld [vmem:[#allocation2 + $0x640] sm:$0xff]
    %v502 = vld [vmem:[#allocation2 + $0x648] sm:$0xff]
    %v503 = vld [vmem:[#allocation2 + $0x650] sm:$0xff]
    %v504 = vld [vmem:[#allocation2 + $0x658] sm:$0xff]
    %v505 = vld [vmem:[#allocation2 + $0x660] sm:$0xff]
    %v506 = vld [vmem:[#allocation2 + $0x668] sm:$0xff]
    %v507 = vld [vmem:[#allocation2 + $0x670] sm:$0xff]
    %v508 = vld [vmem:[#allocation2 + $0x678] sm:$0xff]
    %v509 = vld [vmem:[#allocation2 + $0x680] sm:$0xff]
    %v510 = vld [vmem:[#allocation2 + $0x688] sm:$0xff]
    %v511 = vld [vmem:[#allocation2 + $0x690] sm:$0xff]
    %v512 = vld [vmem:[#allocation2 + $0x698] sm:$0xff]
    %v513 = vld [vmem:[#allocation2 + $0x6a0] sm:$0xff]
    %v514 = vld [vmem:[#allocation2 + $0x6a8] sm:$0xff]
    %v515 = vld [vmem:[#allocation2 + $0x6b0] sm:$0xff]
    %v516 = vld [vmem:[#allocation2 + $0x6b8] sm:$0xff]
    %v517 = vld [vmem:[#allocation2 + $0x6c0] sm:$0xff]
    %v518 = vld [vmem:[#allocation2 + $0x6c8] sm:$0xff]
    %v519 = vld [vmem:[#allocation2 + $0x6d0] sm:$0xff]
    %v520 = vld [vmem:[#allocation2 + $0x6d8] sm:$0xff]
    %v521 = vld [vmem:[#allocation2 + $0x6e0] sm:$0xff]
    %v522 = vld [vmem:[#allocation2 + $0x6e8] sm:$0xff]
    %v523 = vld [vmem:[#allocation2 + $0x6f0] sm:$0xff]
    %v524 = vld [vmem:[#allocation2 + $0x6f8] sm:$0xff]
    %v525 = vld [vmem:[#allocation2 + $0x700] sm:$0xff]
    %v526 = vld [vmem:[#allocation2 + $0x708] sm:$0xff]
    %v527 = vld [vmem:[#allocation2 + $0x710] sm:$0xff]
    %v528 = vld [vmem:[#allocation2 + $0x718] sm:$0xff]
    %v529 = vld [vmem:[#allocation2 + $0x720] sm:$0xff]
    %v530 = vld [vmem:[#allocation2 + $0x728] sm:$0xff]
    %v531 = vld [vmem:[#allocation2 + $0x730] sm:$0xff]
    %v532 = vld [vmem:[#allocation2 + $0x738] sm:$0xff]
    %v533 = vld [vmem:[#allocation2 + $0x740] sm:$0xff]
    %v534 = vld [vmem:[#allocation2 + $0x748] sm:$0xff]
    %v535 = vld [vmem:[#allocation2 + $0x750] sm:$0xff]
    %v536 = vld [vmem:[#allocation2 + $0x758] sm:$0xff]
    %v537 = vld [vmem:[#allocation2 + $0x760] sm:$0xff]
    %v538 = vld [vmem:[#allocation2 + $0x768] sm:$0xff]
    %v539 = vld [vmem:[#allocation2 + $0x770] sm:$0xff]
    %v540 = vld [vmem:[#allocation2 + $0x778] sm:$0xff]
    %v541 = vld [vmem:[#allocation2 + $0x780] sm:$0xff]
    %v542 = vld [vmem:[#allocation2 + $0x788] sm:$0xff]
    %v543 = vld [vmem:[#allocation2 + $0x790] sm:$0xff]
    %v544 = vld [vmem:[#allocation2 + $0x798] sm:$0xff]
    %v545 = vld [vmem:[#allocation2 + $0x7a0] sm:$0xff]
    %v546 = vld [vmem:[#allocation2 + $0x7a8] sm:$0xff]
    %v547 = vld [vmem:[#allocation2 + $0x7b0] sm:$0xff]
    %v548 = vld [vmem:[#allocation2 + $0x7b8] sm:$0xff]
    %v549 = vld [vmem:[#allocation2 + $0x7c0] sm:$0xff]
    %v550 = vld [vmem:[#allocation2 + $0x7c8] sm:$0xff]
    %v551 = vld [vmem:[#allocation2 + $0x7d0] sm:$0xff]
    %v552 = vld [vmem:[#allocation2 + $0x7d8] sm:$0xff]
    %v553 = vld [vmem:[#allocation2 + $0x7e0] sm:$0xff]
    %v554 = vld [vmem:[#allocation2 + $0x7e8] sm:$0xff]
    %v555 = vld [vmem:[#allocation2 + $0x7f0] sm:$0xff]
    %v556 = vld [vmem:[#allocation2 + $0x7f8] sm:$0xff]
    %v557 = vld [vmem:[#allocation2 + $0x800] sm:$0xff]
    %v558 = vld [vmem:[#allocation2 + $0x808] sm:$0xff]
    %v559 = vld [vmem:[#allocation2 + $0x810] sm:$0xff]
    %v560 = vld [vmem:[#allocation2 + $0x818] sm:$0xff]
    %v561 = vld [vmem:[#allocation2 + $0x820] sm:$0xff]
    %v562 = vld [vmem:[#allocation2 + $0x828] sm:$0xff]
    %v563 = vld [vmem:[#allocation2 + $0x830] sm:$0xff]
    %v564 = vld [vmem:[#allocation2 + $0x838] sm:$0xff]
    %v565 = vld [vmem:[#allocation2 + $0x840] sm:$0xff]
    %v566 = vld [vmem:[#allocation2 + $0x848] sm:$0xff]
    %v567 = vld [vmem:[#allocation2 + $0x850] sm:$0xff]
    %v568 = vld [vmem:[#allocation2 + $0x858] sm:$0xff]
    %v569 = vld [vmem:[#allocation2 + $0x860] sm:$0xff]
    %v570 = vld [vmem:[#allocation2 + $0x868] sm:$0xff]
    %v571 = vld [vmem:[#allocation2 + $0x870] sm:$0xff]
    %v572 = vld [vmem:[#allocation2 + $0x878] sm:$0xff]
    %v573 = vld [vmem:[#allocation2 + $0x880] sm:$0xff]
    %v574 = vld [vmem:[#allocation2 + $0x888] sm:$0xff]
    %v575 = vld [vmem:[#allocation2 + $0x890] sm:$0xff]
    %v576 = vld [vmem:[#allocation2 + $0x898] sm:$0xff]
    %v577 = vld [vmem:[#allocation2 + $0x8a0] sm:$0xff]
    %v578 = vld [vmem:[#allocation2 + $0x8a8] sm:$0xff]
    %v579 = vld [vmem:[#allocation2 + $0x8b0] sm:$0xff]
    %v580 = vld [vmem:[#allocation2 + $0x8b8] sm:$0xff]
    %v581 = vld [vmem:[#allocation2 + $0x8c0] sm:$0xff]
    %v582 = vld [vmem:[#allocation2 + $0x8c8] sm:$0xff]
    %v583 = vld [vmem:[#allocation2 + $0x8d0] sm:$0xff]
    %v584 = vld [vmem:[#allocation2 + $0x8d8] sm:$0xff]
    %v585 = vld [vmem:[#allocation2 + $0x8e0] sm:$0xff]
    %v586 = vld [vmem:[#allocation2 + $0x8e8] sm:$0xff]
    %v587 = vld [vmem:[#allocation2 + $0x8f0] sm:$0xff]
    %v588 = vld [vmem:[#allocation2 + $0x8f8] sm:$0xff]
    %v589 = vld [vmem:[#allocation2 + $0x900] sm:$0xff]
    %v590 = vld [vmem:[#allocation2 + $0x908] sm:$0xff]
    %v591 = vld [vmem:[#allocation2 + $0x910] sm:$0xff]
    %v592 = vld [vmem:[#allocation2 + $0x918] sm:$0xff]
    %v593 = vld [vmem:[#allocation2 + $0x920] sm:$0xff]
    %v594 = vld [vmem:[#allocation2 + $0x928] sm:$0xff]
    %v595 = vld [vmem:[#allocation2 + $0x930] sm:$0xff]
    %v596 = vld [vmem:[#allocation2 + $0x938] sm:$0xff]
    %v597 = vld [vmem:[#allocation2 + $0x940] sm:$0xff]
    %v598 = vld [vmem:[#allocation2 + $0x948] sm:$0xff]
    %v599 = vld [vmem:[#allocation2 + $0x950] sm:$0xff]
    %v600 = vld [vmem:[#allocation2 + $0x958] sm:$0xff]
    %v601 = vld [vmem:[#allocation2 + $0x960] sm:$0xff]
    %v602 = vld [vmem:[#allocation2 + $0x968] sm:$0xff]
    %v603 = vld [vmem:[#allocation2 + $0x970] sm:$0xff]
    %v604 = vld [vmem:[#allocation2 + $0x978] sm:$0xff]
    %v605 = vld [vmem:[#allocation2 + $0x980] sm:$0xff]
    %v606 = vld [vmem:[#allocation2 + $0x988] sm:$0xff]
    %v607 = vld [vmem:[#allocation2 + $0x990] sm:$0xff]
    %v608 = vld [vmem:[#allocation2 + $0x998] sm:$0xff]
    %v609 = vld [vmem:[#allocation2 + $0x9a0] sm:$0xff]
    %v610 = vld [vmem:[#allocation2 + $0x9a8] sm:$0xff]
    %v611 = vld [vmem:[#allocation2 + $0x9b0] sm:$0xff]
    %v612 = vld [vmem:[#allocation2 + $0x9b8] sm:$0xff]
    %v613 = vld [vmem:[#allocation2 + $0x9c0] sm:$0xff]
    %v614 = vld [vmem:[#allocation2 + $0x9c8] sm:$0xff]
    %v615 = vld [vmem:[#allocation2 + $0x9d0] sm:$0xff]
    %v616 = vld [vmem:[#allocation2 + $0x9d8] sm:$0xff]
    %v617 = vld [vmem:[#allocation2 + $0x9e0] sm:$0xff]
    %v618 = vld [vmem:[#allocation2 + $0x9e8] sm:$0xff]
    %v619 = vld [vmem:[#allocation2 + $0x9f0] sm:$0xff]
    %v620 = vld [vmem:[#allocation2 + $0x9f8] sm:$0xff]
    %v621 = vld [vmem:[#allocation2 + $0xa00] sm:$0xff]
    %v622 = vld [vmem:[#allocation2 + $0xa08] sm:$0xff]
    %v623 = vld [vmem:[#allocation2 + $0xa10] sm:$0xff]
    %v624 = vld [vmem:[#allocation2 + $0xa18] sm:$0xff]
    %v625 = vld [vmem:[#allocation2 + $0xa20] sm:$0xff]
    %v626 = vld [vmem:[#allocation2 + $0xa28] sm:$0xff]
    %v627 = vld [vmem:[#allocation2 + $0xa30] sm:$0xff]
    %v628 = vld [vmem:[#allocation2 + $0xa38] sm:$0xff]
    %v629 = vld [vmem:[#allocation2 + $0xa40] sm:$0xff]
    %v630 = vld [vmem:[#allocation2 + $0xa48] sm:$0xff]
    %v631 = vld [vmem:[#allocation2 + $0xa50] sm:$0xff]
    %v632 = vld [vmem:[#allocation2 + $0xa58] sm:$0xff]
    %v633 = vld [vmem:[#allocation2 + $0xa60] sm:$0xff]
    %v634 = vld [vmem:[#allocation2 + $0xa68] sm:$0xff]
    %v635 = vld [vmem:[#allocation2 + $0xa70] sm:$0xff]
    %v636 = vld [vmem:[#allocation2 + $0xa78] sm:$0xff]
    %v637 = vld [vmem:[#allocation2 + $0xa80] sm:$0xff]
    %v638 = vld [vmem:[#allocation2 + $0xa88] sm:$0xff]
    %v639 = vld [vmem:[#allocation2 + $0xa90] sm:$0xff]
    %v640 = vld [vmem:[#allocation2 + $0xa98] sm:$0xff]
    %v641 = vld [vmem:[#allocation2 + $0xaa0] sm:$0xff]
    %v642 = vld [vmem:[#allocation2 + $0xaa8] sm:$0xff]
    %v643 = vld [vmem:[#allocation2 + $0xab0] sm:$0xff]
    %v644 = vld [vmem:[#allocation2 + $0xab8] sm:$0xff]
    %v645 = vld [vmem:[#allocation2 + $0xac0] sm:$0xff]
    %v646 = vld [vmem:[#allocation2 + $0xac8] sm:$0xff]
    %v647 = vld [vmem:[#allocation2 + $0xad0] sm:$0xff]
    %v648 = vld [vmem:[#allocation2 + $0xad8] sm:$0xff]
    %v649 = vld [vmem:[#allocation2 + $0xae0] sm:$0xff]
    %v650 = vld [vmem:[#allocation2 + $0xae8] sm:$0xff]
    %v651 = vld [vmem:[#allocation2 + $0xaf0] sm:$0xff]
    %v652 = vld [vmem:[#allocation2 + $0xaf8] sm:$0xff]
    %v653 = vld [vmem:[#allocation2 + $0xb00] sm:$0xff]
    %v654 = vld [vmem:[#allocation2 + $0xb08] sm:$0xff]
    %v655 = vld [vmem:[#allocation2 + $0xb10] sm:$0xff]
    %v656 = vld [vmem:[#allocation2 + $0xb18] sm:$0xff]
    %v657 = vld [vmem:[#allocation2 + $0xb20] sm:$0xff]
    %v658 = vld [vmem:[#allocation2 + $0xb28] sm:$0xff]
    %v659 = vld [vmem:[#allocation2 + $0xb30] sm:$0xff]
    %v660 = vld [vmem:[#allocation2 + $0xb38] sm:$0xff]
    %v661 = vld [vmem:[#allocation2 + $0xb40] sm:$0xff]
    %v662 = vld [vmem:[#allocation2 + $0xb48] sm:$0xff]
    %v663 = vld [vmem:[#allocation2 + $0xb50] sm:$0xff]
    %v664 = vld [vmem:[#allocation2 + $0xb58] sm:$0xff]
    %v665 = vld [vmem:[#allocation2 + $0xb60] sm:$0xff]
    %v666 = vld [vmem:[#allocation2 + $0xb68] sm:$0xff]
    %v667 = vld [vmem:[#allocation2 + $0xb70] sm:$0xff]
    %v668 = vld [vmem:[#allocation2 + $0xb78] sm:$0xff]
    %v669 = vld [vmem:[#allocation2 + $0xb80] sm:$0xff]
    %v670 = vld [vmem:[#allocation2 + $0xb88] sm:$0xff]
    %v671 = vld [vmem:[#allocation2 + $0xb90] sm:$0xff]
    %v672 = vld [vmem:[#allocation2 + $0xb98] sm:$0xff]
    %v673 = vld [vmem:[#allocation2 + $0xba0] sm:$0xff]
    %v674 = vld [vmem:[#allocation2 + $0xba8] sm:$0xff]
    %v675 = vld [vmem:[#allocation2 + $0xbb0] sm:$0xff]
    %v676 = vld [vmem:[#allocation2 + $0xbb8] sm:$0xff]
    %v677 = vld [vmem:[#allocation2 + $0xbc0] sm:$0xff]
    %v678 = vld [vmem:[#allocation2 + $0xbc8] sm:$0xff]
    %v679 = vld [vmem:[#allocation2 + $0xbd0] sm:$0xff]
    %v680 = vld [vmem:[#allocation2 + $0xbd8] sm:$0xff]
    %v681 = vld [vmem:[#allocation2 + $0xbe0] sm:$0xff]
    %v682 = vld [vmem:[#allocation2 + $0xbe8] sm:$0xff]
    %v683 = vld [vmem:[#allocation2 + $0xbf0] sm:$0xff]
    %v684 = vld [vmem:[#allocation2 + $0xbf8] sm:$0xff]
    %v685 = vld [vmem:[#allocation2 + $0xc00] sm:$0xff]
    %v686 = vld [vmem:[#allocation2 + $0xc08] sm:$0xff]
    %v687 = vld [vmem:[#allocation2 + $0xc10] sm:$0xff]
    %v688 = vld [vmem:[#allocation2 + $0xc18] sm:$0xff]
    %v689 = vld [vmem:[#allocation2 + $0xc20] sm:$0xff]
    %v690 = vld [vmem:[#allocation2 + $0xc28] sm:$0xff]
    %v691 = vld [vmem:[#allocation2 + $0xc30] sm:$0xff]
    %v692 = vld [vmem:[#allocation2 + $0xc38] sm:$0xff]
    %v693 = vld [vmem:[#allocation2 + $0xc40] sm:$0xff]
    %v694 = vld [vmem:[#allocation2 + $0xc48] sm:$0xff]
    %v695 = vld [vmem:[#allocation2 + $0xc50] sm:$0xff]
    %v696 = vld [vmem:[#allocation2 + $0xc58] sm:$0xff]
    %v697 = vld [vmem:[#allocation2 + $0xc60] sm:$0xff]
    %v698 = vld [vmem:[#allocation2 + $0xc68] sm:$0xff]
    %v699 = vld [vmem:[#allocation2 + $0xc70] sm:$0xff]
    %v700 = vld [vmem:[#allocation2 + $0xc78] sm:$0xff]
    %v701 = vld [vmem:[#allocation2 + $0xc80] sm:$0xff]
    %v702 = vld [vmem:[#allocation2 + $0xc88] sm:$0xff]
    %v703 = vld [vmem:[#allocation2 + $0xc90] sm:$0xff]
    %v704 = vld [vmem:[#allocation2 + $0xc98] sm:$0xff]
    %v705 = vld [vmem:[#allocation2 + $0xca0] sm:$0xff]
    %v706 = vld [vmem:[#allocation2 + $0xca8] sm:$0xff]
    %v707 = vld [vmem:[#allocation2 + $0xcb0] sm:$0xff]
    %v708 = vld [vmem:[#allocation2 + $0xcb8] sm:$0xff]
    %v709 = vld [vmem:[#allocation2 + $0xcc0] sm:$0xff]
    %v710 = vld [vmem:[#allocation2 + $0xcc8] sm:$0xff]
    %v711 = vld [vmem:[#allocation2 + $0xcd0] sm:$0xff]
    %v712 = vld [vmem:[#allocation2 + $0xcd8] sm:$0xff]
    %v713 = vld [vmem:[#allocation2 + $0xce0] sm:$0xff]
    %v714 = vld [vmem:[#allocation2 + $0xce8] sm:$0xff]
    %v715 = vld [vmem:[#allocation2 + $0xcf0] sm:$0xff]
    %v716 = vld [vmem:[#allocation2 + $0xcf8] sm:$0xff]
    %v717 = vld [vmem:[#allocation2 + $0xd00] sm:$0xff]
    %v718 = vld [vmem:[#allocation2 + $0xd08] sm:$0xff]
    %v719 = vld [vmem:[#allocation2 + $0xd10] sm:$0xff]
    %v720 = vld [vmem:[#allocation2 + $0xd18] sm:$0xff]
    %v721 = vld [vmem:[#allocation2 + $0xd20] sm:$0xff]
    %v722 = vld [vmem:[#allocation2 + $0xd28] sm:$0xff]
    %v723 = vld [vmem:[#allocation2 + $0xd30] sm:$0xff]
    %v724 = vld [vmem:[#allocation2 + $0xd38] sm:$0xff]
    %v725 = vld [vmem:[#allocation2 + $0xd40] sm:$0xff]
    %v726 = vld [vmem:[#allocation2 + $0xd48] sm:$0xff]
    %v727 = vld [vmem:[#allocation2 + $0xd50] sm:$0xff]
    %v728 = vld [vmem:[#allocation2 + $0xd58] sm:$0xff]
    %v729 = vld [vmem:[#allocation2 + $0xd60] sm:$0xff]
    %v730 = vld [vmem:[#allocation2 + $0xd68] sm:$0xff]
    %v731 = vld [vmem:[#allocation2 + $0xd70] sm:$0xff]
    %v732 = vld [vmem:[#allocation2 + $0xd78] sm:$0xff]
    %v733 = vld [vmem:[#allocation2 + $0xd80] sm:$0xff]
    %v734 = vld [vmem:[#allocation2 + $0xd88] sm:$0xff]
    %v735 = vld [vmem:[#allocation2 + $0xd90] sm:$0xff]
    %v736 = vld [vmem:[#allocation2 + $0xd98] sm:$0xff]
    %v737 = vld [vmem:[#allocation2 + $0xda0] sm:$0xff]
    %v738 = vld [vmem:[#allocation2 + $0xda8] sm:$0xff]
    %v739 = vld [vmem:[#allocation2 + $0xdb0] sm:$0xff]
    %v740 = vld [vmem:[#allocation2 + $0xdb8] sm:$0xff]
    %v741 = vld [vmem:[#allocation2 + $0xdc0] sm:$0xff]
    %v742 = vld [vmem:[#allocation2 + $0xdc8] sm:$0xff]
    %v743 = vld [vmem:[#allocation2 + $0xdd0] sm:$0xff]
    %v744 = vld [vmem:[#allocation2 + $0xdd8] sm:$0xff]
    %v745 = vld [vmem:[#allocation2 + $0xde0] sm:$0xff]
    %v746 = vld [vmem:[#allocation2 + $0xde8] sm:$0xff]
    %v747 = vld [vmem:[#allocation2 + $0xdf0] sm:$0xff]
    %v748 = vld [vmem:[#allocation2 + $0xdf8] sm:$0xff]
    %v749 = vld [vmem:[#allocation2 + $0xe00] sm:$0xff]
    %v750 = vld [vmem:[#allocation2 + $0xe08] sm:$0xff]
    %v751 = vld [vmem:[#allocation2 + $0xe10] sm:$0xff]
    %v752 = vld [vmem:[#allocation2 + $0xe18] sm:$0xff]
    %v753 = vld [vmem:[#allocation2 + $0xe20] sm:$0xff]
    %v754 = vld [vmem:[#allocation2 + $0xe28] sm:$0xff]
    %v755 = vld [vmem:[#allocation2 + $0xe30] sm:$0xff]
    %v756 = vld [vmem:[#allocation2 + $0xe38] sm:$0xff]
    %v757 = vld [vmem:[#allocation2 + $0xe40] sm:$0xff]
    %v758 = vld [vmem:[#allocation2 + $0xe48] sm:$0xff]
    %v759 = vld [vmem:[#allocation2 + $0xe50] sm:$0xff]
    %v760 = vld [vmem:[#allocation2 + $0xe58] sm:$0xff]
    %v761 = vld [vmem:[#allocation2 + $0xe60] sm:$0xff]
    %v762 = vld [vmem:[#allocation2 + $0xe68] sm:$0xff]
    %v763 = vld [vmem:[#allocation2 + $0xe70] sm:$0xff]
    %v764 = vld [vmem:[#allocation2 + $0xe78] sm:$0xff]
    %v765 = vld [vmem:[#allocation2 + $0xe80] sm:$0xff]
    %v766 = vld [vmem:[#allocation2 + $0xe88] sm:$0xff]
    %v767 = vld [vmem:[#allocation2 + $0xe90] sm:$0xff]
    %v768 = vld [vmem:[#allocation2 + $0xe98] sm:$0xff]
    %v769 = vld [vmem:[#allocation2 + $0xea0] sm:$0xff]
    %v770 = vld [vmem:[#allocation2 + $0xea8] sm:$0xff]
    %v771 = vld [vmem:[#allocation2 + $0xeb0] sm:$0xff]
    %v772 = vld [vmem:[#allocation2 + $0xeb8] sm:$0xff]
    %v773 = vld [vmem:[#allocation2 + $0xec0] sm:$0xff]
    %v774 = vld [vmem:[#allocation2 + $0xec8] sm:$0xff]
    %v775 = vld [vmem:[#allocation2 + $0xed0] sm:$0xff]
    %v776 = vld [vmem:[#allocation2 + $0xed8] sm:$0xff]
    %v777 = vld [vmem:[#allocation2 + $0xee0] sm:$0xff]
    %v778 = vld [vmem:[#allocation2 + $0xee8] sm:$0xff]
    %v779 = vld [vmem:[#allocation2 + $0xef0] sm:$0xff]
    %v780 = vld [vmem:[#allocation2 + $0xef8] sm:$0xff]
    %v1261 = vunpack.c.l.b16 %v301
    %v1262 = vunpack.c.h.b16 %v301
    %v1263 = vunpack.c.l.b16 %v302
    %v1264 = vunpack.c.h.b16 %v302
    %v1265 = vunpack.c.l.b16 %v303
    %v1266 = vunpack.c.h.b16 %v303
    %v1267 = vunpack.c.l.b16 %v304
    %v1268 = vunpack.c.h.b16 %v304
    %v1269 = vunpack.c.l.b16 %v305
    %v1270 = vunpack.c.h.b16 %v305
    %v1271 = vunpack.c.l.b16 %v306
    %v1272 = vunpack.c.h.b16 %v306
    %v1273 = vunpack.c.l.b16 %v307
    %v1274 = vunpack.c.h.b16 %v307
    %v1275 = vunpack.c.l.b16 %v308
    %v1276 = vunpack.c.h.b16 %v308
    %v1277 = vunpack.c.l.b16 %v309
    %v1278 = vunpack.c.h.b16 %v309
    %v1279 = vunpack.c.l.b16 %v310
    %v1280 = vunpack.c.h.b16 %v310
    %v1281 = vunpack.c.l.b16 %v311
    %v1282 = vunpack.c.h.b16 %v311
    %v1283 = vunpack.c.l.b16 %v312
    %v1284 = vunpack.c.h.b16 %v312
    %v1285 = vunpack.c.l.b16 %v313
    %v1286 = vunpack.c.h.b16 %v313
    %v1287 = vunpack.c.l.b16 %v314
    %v1288 = vunpack.c.h.b16 %v314
    %v1289 = vunpack.c.l.b16 %v315
    %v1290 = vunpack.c.h.b16 %v315
    %v1291 = vunpack.c.l.b16 %v316
    %v1292 = vunpack.c.h.b16 %v316
    %v1293 = vunpack.c.l.b16 %v317
    %v1294 = vunpack.c.h.b16 %v317
    %v1295 = vunpack.c.l.b16 %v318
    %v1296 = vunpack.c.h.b16 %v318
    %v1297 = vunpack.c.l.b16 %v319
    %v1298 = vunpack.c.h.b16 %v319
    %v1299 = vunpack.c.l.b16 %v320
    %v1300 = vunpack.c.h.b16 %v320
    %v1301 = vunpack.c.l.b16 %v321
    %v1302 = vunpack.c.h.b16 %v321
    %v1303 = vunpack.c.l.b16 %v322
    %v1304 = vunpack.c.h.b16 %v322
    %v1305 = vunpack.c.l.b16 %v323
    %v1306 = vunpack.c.h.b16 %v323
    %v1307 = vunpack.c.l.b16 %v324
    %v1308 = vunpack.c.h.b16 %v324
    %v1309 = vunpack.c.l.b16 %v325
    %v1310 = vunpack.c.h.b16 %v325
    %v1311 = vunpack.c.l.b16 %v326
    %v1312 = vunpack.c.h.b16 %v326
    %v1313 = vunpack.c.l.b16 %v327
    %v1314 = vunpack.c.h.b16 %v327
    %v1315 = vunpack.c.l.b16 %v328
    %v1316 = vunpack.c.h.b16 %v328
    %v1317 = vunpack.c.l.b16 %v329
    %v1318 = vunpack.c.h.b16 %v329
    %v1319 = vunpack.c.l.b16 %v330
    %v1320 = vunpack.c.h.b16 %v330
    %v1321 = vunpack.c.l.b16 %v331
    %v1322 = vunpack.c.h.b16 %v331
    %v1323 = vunpack.c.l.b16 %v332
    %v1324 = vunpack.c.h.b16 %v332
    %v1325 = vunpack.c.l.b16 %v333
    %v1326 = vunpack.c.h.b16 %v333
    %v1327 = vunpack.c.l.b16 %v334
    %v1328 = vunpack.c.h.b16 %v334
    %v1329 = vunpack.c.l.b16 %v335
    %v1330 = vunpack.c.h.b16 %v335
    %v1331 = vunpack.c.l.b16 %v336
    %v1332 = vunpack.c.h.b16 %v336
    %v1333 = vunpack.c.l.b16 %v337
    %v1334 = vunpack.c.h.b16 %v337
    %v1335 = vunpack.c.l.b16 %v338
    %v1336 = vunpack.c.h.b16 %v338
    %v1337 = vunpack.c.l.b16 %v339
    %v1338 = vunpack.c.h.b16 %v339
    %v1339 = vunpack.c.l.b16 %v340
    %v1340 = vunpack.c.h.b16 %v340
    %v1341 = vunpack.c.l.b16 %v341
    %v1342 = vunpack.c.h.b16 %v341
    %v1343 = vunpack.c.l.b16 %v342
    %v1344 = vunpack.c.h.b16 %v342
    %v1345 = vunpack.c.l.b16 %v343
    %v1346 = vunpack.c.h.b16 %v343
    %v1347 = vunpack.c.l.b16 %v344
    %v1348 = vunpack.c.h.b16 %v344
    %v1349 = vunpack.c.l.b16 %v345
    %v1350 = vunpack.c.h.b16 %v345
    %v1351 = vunpack.c.l.b16 %v346
    %v1352 = vunpack.c.h.b16 %v346
    %v1353 = vunpack.c.l.b16 %v347
    %v1354 = vunpack.c.h.b16 %v347
    %v1355 = vunpack.c.l.b16 %v348
    %v1356 = vunpack.c.h.b16 %v348
    %v1357 = vunpack.c.l.b16 %v349
    %v1358 = vunpack.c.h.b16 %v349
    %v1359 = vunpack.c.l.b16 %v350
    %v1360 = vunpack.c.h.b16 %v350
    %v1361 = vunpack.c.l.b16 %v351
    %v1362 = vunpack.c.h.b16 %v351
    %v1363 = vunpack.c.l.b16 %v352
    %v1364 = vunpack.c.h.b16 %v352
    %v1365 = vunpack.c.l.b16 %v353
    %v1366 = vunpack.c.h.b16 %v353
    %v1367 = vunpack.c.l.b16 %v354
    %v1368 = vunpack.c.h.b16 %v354
    %v1369 = vunpack.c.l.b16 %v355
    %v1370 = vunpack.c.h.b16 %v355
    %v1371 = vunpack.c.l.b16 %v356
    %v1372 = vunpack.c.h.b16 %v356
    %v1373 = vunpack.c.l.b16 %v357
    %v1374 = vunpack.c.h.b16 %v357
    %v1375 = vunpack.c.l.b16 %v358
    %v1376 = vunpack.c.h.b16 %v358
    %v1377 = vunpack.c.l.b16 %v359
    %v1378 = vunpack.c.h.b16 %v359
    %v1379 = vunpack.c.l.b16 %v360
    %v1380 = vunpack.c.h.b16 %v360
    %v1381 = vunpack.c.l.b16 %v361
    %v1382 = vunpack.c.h.b16 %v361
    %v1383 = vunpack.c.l.b16 %v362
    %v1384 = vunpack.c.h.b16 %v362
    %v1385 = vunpack.c.l.b16 %v363
    %v1386 = vunpack.c.h.b16 %v363
    %v1387 = vunpack.c.l.b16 %v364
    %v1388 = vunpack.c.h.b16 %v364
    %v1389 = vunpack.c.l.b16 %v365
    %v1390 = vunpack.c.h.b16 %v365
    %v1391 = vunpack.c.l.b16 %v366
    %v1392 = vunpack.c.h.b16 %v366
    %v1393 = vunpack.c.l.b16 %v367
    %v1394 = vunpack.c.h.b16 %v367
    %v1395 = vunpack.c.l.b16 %v368
    %v1396 = vunpack.c.h.b16 %v368
    %v1397 = vunpack.c.l.b16 %v369
    %v1398 = vunpack.c.h.b16 %v369
    %v1399 = vunpack.c.l.b16 %v370
    %v1400 = vunpack.c.h.b16 %v370
    %v1401 = vunpack.c.l.b16 %v371
    %v1402 = vunpack.c.h.b16 %v371
    %v1403 = vunpack.c.l.b16 %v372
    %v1404 = vunpack.c.h.b16 %v372
    %v1405 = vunpack.c.l.b16 %v373
    %v1406 = vunpack.c.h.b16 %v373
    %v1407 = vunpack.c.l.b16 %v374
    %v1408 = vunpack.c.h.b16 %v374
    %v1409 = vunpack.c.l.b16 %v375
    %v1410 = vunpack.c.h.b16 %v375
    %v1411 = vunpack.c.l.b16 %v376
    %v1412 = vunpack.c.h.b16 %v376
    %v1413 = vunpack.c.l.b16 %v377
    %v1414 = vunpack.c.h.b16 %v377
    %v1415 = vunpack.c.l.b16 %v378
    %v1416 = vunpack.c.h.b16 %v378
    %v1417 = vunpack.c.l.b16 %v379
    %v1418 = vunpack.c.h.b16 %v379
    %v1419 = vunpack.c.l.b16 %v380
    %v1420 = vunpack.c.h.b16 %v380
    %v1421 = vunpack.c.l.b16 %v381
    %v1422 = vunpack.c.h.b16 %v381
    %v1423 = vunpack.c.l.b16 %v382
    %v1424 = vunpack.c.h.b16 %v382
    %v1425 = vunpack.c.l.b16 %v383
    %v1426 = vunpack.c.h.b16 %v383
    %v1427 = vunpack.c.l.b16 %v384
    %v1428 = vunpack.c.h.b16 %v384
    %v1429 = vunpack.c.l.b16 %v385
    %v1430 = vunpack.c.h.b16 %v385
    %v1431 = vunpack.c.l.b16 %v386
    %v1432 = vunpack.c.h.b16 %v386
    %v1433 = vunpack.c.l.b16 %v387
    %v1434 = vunpack.c.h.b16 %v387
    %v1435 = vunpack.c.l.b16 %v388
    %v1436 = vunpack.c.h.b16 %v388
    %v1437 = vunpack.c.l.b16 %v389
    %v1438 = vunpack.c.h.b16 %v389
    %v1439 = vunpack.c.l.b16 %v390
    %v1440 = vunpack.c.h.b16 %v390
    %v1441 = vunpack.c.l.b16 %v391
    %v1442 = vunpack.c.h.b16 %v391
    %v1443 = vunpack.c.l.b16 %v392
    %v1444 = vunpack.c.h.b16 %v392
    %v1445 = vunpack.c.l.b16 %v393
    %v1446 = vunpack.c.h.b16 %v393
    %v1447 = vunpack.c.l.b16 %v394
    %v1448 = vunpack.c.h.b16 %v394
    %v1449 = vunpack.c.l.b16 %v395
    %v1450 = vunpack.c.h.b16 %v395
    %v1451 = vunpack.c.l.b16 %v396
    %v1452 = vunpack.c.h.b16 %v396
    %v1453 = vunpack.c.l.b16 %v397
    %v1454 = vunpack.c.h.b16 %v397
    %v1455 = vunpack.c.l.b16 %v398
    %v1456 = vunpack.c.h.b16 %v398
    %v1457 = vunpack.c.l.b16 %v399
    %v1458 = vunpack.c.h.b16 %v399
    %v1459 = vunpack.c.l.b16 %v400
    %v1460 = vunpack.c.h.b16 %v400
    %v1461 = vunpack.c.l.b16 %v401
    %v1462 = vunpack.c.h.b16 %v401
    %v1463 = vunpack.c.l.b16 %v402
    %v1464 = vunpack.c.h.b16 %v402
    %v1465 = vunpack.c.l.b16 %v403
    %v1466 = vunpack.c.h.b16 %v403
    %v1467 = vunpack.c.l.b16 %v404
    %v1468 = vunpack.c.h.b16 %v404
    %v1469 = vunpack.c.l.b16 %v405
    %v1470 = vunpack.c.h.b16 %v405
    %v1471 = vunpack.c.l.b16 %v406
    %v1472 = vunpack.c.h.b16 %v406
    %v1473 = vunpack.c.l.b16 %v407
    %v1474 = vunpack.c.h.b16 %v407
    %v1475 = vunpack.c.l.b16 %v408
    %v1476 = vunpack.c.h.b16 %v408
    %v1477 = vunpack.c.l.b16 %v409
    %v1478 = vunpack.c.h.b16 %v409
    %v1479 = vunpack.c.l.b16 %v410
    %v1480 = vunpack.c.h.b16 %v410
    %v1481 = vunpack.c.l.b16 %v411
    %v1482 = vunpack.c.h.b16 %v411
    %v1483 = vunpack.c.l.b16 %v412
    %v1484 = vunpack.c.h.b16 %v412
    %v1485 = vunpack.c.l.b16 %v413
    %v1486 = vunpack.c.h.b16 %v413
    %v1487 = vunpack.c.l.b16 %v414
    %v1488 = vunpack.c.h.b16 %v414
    %v1489 = vunpack.c.l.b16 %v415
    %v1490 = vunpack.c.h.b16 %v415
    %v1491 = vunpack.c.l.b16 %v416
    %v1492 = vunpack.c.h.b16 %v416
    %v1493 = vunpack.c.l.b16 %v417
    %v1494 = vunpack.c.h.b16 %v417
    %v1495 = vunpack.c.l.b16 %v418
    %v1496 = vunpack.c.h.b16 %v418
    %v1497 = vunpack.c.l.b16 %v419
    %v1498 = vunpack.c.h.b16 %v419
    %v1499 = vunpack.c.l.b16 %v420
    %v1500 = vunpack.c.h.b16 %v420
    %v1501 = vunpack.c.l.b16 %v421
    %v1502 = vunpack.c.h.b16 %v421
    %v1503 = vunpack.c.l.b16 %v422
    %v1504 = vunpack.c.h.b16 %v422
    %v1505 = vunpack.c.l.b16 %v423
    %v1506 = vunpack.c.h.b16 %v423
    %v1507 = vunpack.c.l.b16 %v424
    %v1508 = vunpack.c.h.b16 %v424
    %v1509 = vunpack.c.l.b16 %v425
    %v1510 = vunpack.c.h.b16 %v425
    %v1511 = vunpack.c.l.b16 %v426
    %v1512 = vunpack.c.h.b16 %v426
    %v1513 = vunpack.c.l.b16 %v427
    %v1514 = vunpack.c.h.b16 %v427
    %v1515 = vunpack.c.l.b16 %v428
    %v1516 = vunpack.c.h.b16 %v428
    %v1517 = vunpack.c.l.b16 %v429
    %v1518 = vunpack.c.h.b16 %v429
    %v1519 = vunpack.c.l.b16 %v430
    %v1520 = vunpack.c.h.b16 %v430
    %v1521 = vunpack.c.l.b16 %v431
    %v1522 = vunpack.c.h.b16 %v431
    %v1523 = vunpack.c.l.b16 %v432
    %v1524 = vunpack.c.h.b16 %v432
    %v1525 = vunpack.c.l.b16 %v433
    %v1526 = vunpack.c.h.b16 %v433
    %v1527 = vunpack.c.l.b16 %v434
    %v1528 = vunpack.c.h.b16 %v434
    %v1529 = vunpack.c.l.b16 %v435
    %v1530 = vunpack.c.h.b16 %v435
    %v1531 = vunpack.c.l.b16 %v436
    %v1532 = vunpack.c.h.b16 %v436
    %v1533 = vunpack.c.l.b16 %v437
    %v1534 = vunpack.c.h.b16 %v437
    %v1535 = vunpack.c.l.b16 %v438
    %v1536 = vunpack.c.h.b16 %v438
    %v1537 = vunpack.c.l.b16 %v439
    %v1538 = vunpack.c.h.b16 %v439
    %v1539 = vunpack.c.l.b16 %v440
    %v1540 = vunpack.c.h.b16 %v440
    %v1541 = vunpack.c.l.b16 %v441
    %v1542 = vunpack.c.h.b16 %v441
    %v1543 = vunpack.c.l.b16 %v442
    %v1544 = vunpack.c.h.b16 %v442
    %v1545 = vunpack.c.l.b16 %v443
    %v1546 = vunpack.c.h.b16 %v443
    %v1547 = vunpack.c.l.b16 %v444
    %v1548 = vunpack.c.h.b16 %v444
    %v1549 = vunpack.c.l.b16 %v445
    %v1550 = vunpack.c.h.b16 %v445
    %v1551 = vunpack.c.l.b16 %v446
    %v1552 = vunpack.c.h.b16 %v446
    %v1553 = vunpack.c.l.b16 %v447
    %v1554 = vunpack.c.h.b16 %v447
    %v1555 = vunpack.c.l.b16 %v448
    %v1556 = vunpack.c.h.b16 %v448
    %v1557 = vunpack.c.l.b16 %v449
    %v1558 = vunpack.c.h.b16 %v449
    %v1559 = vunpack.c.l.b16 %v450
    %v1560 = vunpack.c.h.b16 %v450
    %v1561 = vunpack.c.l.b16 %v451
    %v1562 = vunpack.c.h.b16 %v451
    %v1563 = vunpack.c.l.b16 %v452
    %v1564 = vunpack.c.h.b16 %v452
    %v1565 = vunpack.c.l.b16 %v453
    %v1566 = vunpack.c.h.b16 %v453
    %v1567 = vunpack.c.l.b16 %v454
    %v1568 = vunpack.c.h.b16 %v454
    %v1569 = vunpack.c.l.b16 %v455
    %v1570 = vunpack.c.h.b16 %v455
    %v1571 = vunpack.c.l.b16 %v456
    %v1572 = vunpack.c.h.b16 %v456
    %v1573 = vunpack.c.l.b16 %v457
    %v1574 = vunpack.c.h.b16 %v457
    %v1575 = vunpack.c.l.b16 %v458
    %v1576 = vunpack.c.h.b16 %v458
    %v1577 = vunpack.c.l.b16 %v459
    %v1578 = vunpack.c.h.b16 %v459
    %v1579 = vunpack.c.l.b16 %v460
    %v1580 = vunpack.c.h.b16 %v460
    %v1581 = vunpack.c.l.b16 %v461
    %v1582 = vunpack.c.h.b16 %v461
    %v1583 = vunpack.c.l.b16 %v462
    %v1584 = vunpack.c.h.b16 %v462
    %v1585 = vunpack.c.l.b16 %v463
    %v1586 = vunpack.c.h.b16 %v463
    %v1587 = vunpack.c.l.b16 %v464
    %v1588 = vunpack.c.h.b16 %v464
    %v1589 = vunpack.c.l.b16 %v465
    %v1590 = vunpack.c.h.b16 %v465
    %v1591 = vunpack.c.l.b16 %v466
    %v1592 = vunpack.c.h.b16 %v466
    %v1593 = vunpack.c.l.b16 %v467
    %v1594 = vunpack.c.h.b16 %v467
    %v1595 = vunpack.c.l.b16 %v468
    %v1596 = vunpack.c.h.b16 %v468
    %v1597 = vunpack.c.l.b16 %v469
    %v1598 = vunpack.c.h.b16 %v469
    %v1599 = vunpack.c.l.b16 %v470
    %v1600 = vunpack.c.h.b16 %v470
    %v1601 = vunpack.c.l.b16 %v471
    %v1602 = vunpack.c.h.b16 %v471
    %v1603 = vunpack.c.l.b16 %v472
    %v1604 = vunpack.c.h.b16 %v472
    %v1605 = vunpack.c.l.b16 %v473
    %v1606 = vunpack.c.h.b16 %v473
    %v1607 = vunpack.c.l.b16 %v474
    %v1608 = vunpack.c.h.b16 %v474
    %v1609 = vunpack.c.l.b16 %v475
    %v1610 = vunpack.c.h.b16 %v475
    %v1611 = vunpack.c.l.b16 %v476
    %v1612 = vunpack.c.h.b16 %v476
    %v1613 = vunpack.c.l.b16 %v477
    %v1614 = vunpack.c.h.b16 %v477
    %v1615 = vunpack.c.l.b16 %v478
    %v1616 = vunpack.c.h.b16 %v478
    %v1617 = vunpack.c.l.b16 %v479
    %v1618 = vunpack.c.h.b16 %v479
    %v1619 = vunpack.c.l.b16 %v480
    %v1620 = vunpack.c.h.b16 %v480
    %v1621 = vunpack.c.l.b16 %v481
    %v1622 = vunpack.c.h.b16 %v481
    %v1623 = vunpack.c.l.b16 %v482
    %v1624 = vunpack.c.h.b16 %v482
    %v1625 = vunpack.c.l.b16 %v483
    %v1626 = vunpack.c.h.b16 %v483
    %v1627 = vunpack.c.l.b16 %v484
    %v1628 = vunpack.c.h.b16 %v484
    %v1629 = vunpack.c.l.b16 %v485
    %v1630 = vunpack.c.h.b16 %v485
    %v1631 = vunpack.c.l.b16 %v486
    %v1632 = vunpack.c.h.b16 %v486
    %v1633 = vunpack.c.l.b16 %v487
    %v1634 = vunpack.c.h.b16 %v487
    %v1635 = vunpack.c.l.b16 %v488
    %v1636 = vunpack.c.h.b16 %v488
    %v1637 = vunpack.c.l.b16 %v489
    %v1638 = vunpack.c.h.b16 %v489
    %v1639 = vunpack.c.l.b16 %v490
    %v1640 = vunpack.c.h.b16 %v490
    %v1641 = vunpack.c.l.b16 %v491
    %v1642 = vunpack.c.h.b16 %v491
    %v1643 = vunpack.c.l.b16 %v492
    %v1644 = vunpack.c.h.b16 %v492
    %v1645 = vunpack.c.l.b16 %v493
    %v1646 = vunpack.c.h.b16 %v493
    %v1647 = vunpack.c.l.b16 %v494
    %v1648 = vunpack.c.h.b16 %v494
    %v1649 = vunpack.c.l.b16 %v495
    %v1650 = vunpack.c.h.b16 %v495
    %v1651 = vunpack.c.l.b16 %v496
    %v1652 = vunpack.c.h.b16 %v496
    %v1653 = vunpack.c.l.b16 %v497
    %v1654 = vunpack.c.h.b16 %v497
    %v1655 = vunpack.c.l.b16 %v498
    %v1656 = vunpack.c.h.b16 %v498
    %v1657 = vunpack.c.l.b16 %v499
    %v1658 = vunpack.c.h.b16 %v499
    %v1659 = vunpack.c.l.b16 %v500
    %v1660 = vunpack.c.h.b16 %v500
    %v1661 = vunpack.c.l.b16 %v501
    %v1662 = vunpack.c.h.b16 %v501
    %v1663 = vunpack.c.l.b16 %v502
    %v1664 = vunpack.c.h.b16 %v502
    %v1665 = vunpack.c.l.b16 %v503
    %v1666 = vunpack.c.h.b16 %v503
    %v1667 = vunpack.c.l.b16 %v504
    %v1668 = vunpack.c.h.b16 %v504
    %v1669 = vunpack.c.l.b16 %v505
    %v1670 = vunpack.c.h.b16 %v505
    %v1671 = vunpack.c.l.b16 %v506
    %v1672 = vunpack.c.h.b16 %v506
    %v1673 = vunpack.c.l.b16 %v507
    %v1674 = vunpack.c.h.b16 %v507
    %v1675 = vunpack.c.l.b16 %v508
    %v1676 = vunpack.c.h.b16 %v508
    %v1677 = vunpack.c.l.b16 %v509
    %v1678 = vunpack.c.h.b16 %v509
    %v1679 = vunpack.c.l.b16 %v510
    %v1680 = vunpack.c.h.b16 %v510
    %v1681 = vunpack.c.l.b16 %v511
    %v1682 = vunpack.c.h.b16 %v511
    %v1683 = vunpack.c.l.b16 %v512
    %v1684 = vunpack.c.h.b16 %v512
    %v1685 = vunpack.c.l.b16 %v513
    %v1686 = vunpack.c.h.b16 %v513
    %v1687 = vunpack.c.l.b16 %v514
    %v1688 = vunpack.c.h.b16 %v514
    %v1689 = vunpack.c.l.b16 %v515
    %v1690 = vunpack.c.h.b16 %v515
    %v1691 = vunpack.c.l.b16 %v516
    %v1692 = vunpack.c.h.b16 %v516
    %v1693 = vunpack.c.l.b16 %v517
    %v1694 = vunpack.c.h.b16 %v517
    %v1695 = vunpack.c.l.b16 %v518
    %v1696 = vunpack.c.h.b16 %v518
    %v1697 = vunpack.c.l.b16 %v519
    %v1698 = vunpack.c.h.b16 %v519
    %v1699 = vunpack.c.l.b16 %v520
    %v1700 = vunpack.c.h.b16 %v520
    %v1701 = vunpack.c.l.b16 %v521
    %v1702 = vunpack.c.h.b16 %v521
    %v1703 = vunpack.c.l.b16 %v522
    %v1704 = vunpack.c.h.b16 %v522
    %v1705 = vunpack.c.l.b16 %v523
    %v1706 = vunpack.c.h.b16 %v523
    %v1707 = vunpack.c.l.b16 %v524
    %v1708 = vunpack.c.h.b16 %v524
    %v1709 = vunpack.c.l.b16 %v525
    %v1710 = vunpack.c.h.b16 %v525
    %v1711 = vunpack.c.l.b16 %v526
    %v1712 = vunpack.c.h.b16 %v526
    %v1713 = vunpack.c.l.b16 %v527
    %v1714 = vunpack.c.h.b16 %v527
    %v1715 = vunpack.c.l.b16 %v528
    %v1716 = vunpack.c.h.b16 %v528
    %v1717 = vunpack.c.l.b16 %v529
    %v1718 = vunpack.c.h.b16 %v529
    %v1719 = vunpack.c.l.b16 %v530
    %v1720 = vunpack.c.h.b16 %v530
    %v1721 = vunpack.c.l.b16 %v531
    %v1722 = vunpack.c.h.b16 %v531
    %v1723 = vunpack.c.l.b16 %v532
    %v1724 = vunpack.c.h.b16 %v532
    %v1725 = vunpack.c.l.b16 %v533
    %v1726 = vunpack.c.h.b16 %v533
    %v1727 = vunpack.c.l.b16 %v534
    %v1728 = vunpack.c.h.b16 %v534
    %v1729 = vunpack.c.l.b16 %v535
    %v1730 = vunpack.c.h.b16 %v535
    %v1731 = vunpack.c.l.b16 %v536
    %v1732 = vunpack.c.h.b16 %v536
    %v1733 = vunpack.c.l.b16 %v537
    %v1734 = vunpack.c.h.b16 %v537
    %v1735 = vunpack.c.l.b16 %v538
    %v1736 = vunpack.c.h.b16 %v538
    %v1737 = vunpack.c.l.b16 %v539
    %v1738 = vunpack.c.h.b16 %v539
    %v1739 = vunpack.c.l.b16 %v540
    %v1740 = vunpack.c.h.b16 %v540
    %v1741 = vunpack.c.l.b16 %v541
    %v1742 = vunpack.c.h.b16 %v541
    %v1743 = vunpack.c.l.b16 %v542
    %v1744 = vunpack.c.h.b16 %v542
    %v1745 = vunpack.c.l.b16 %v543
    %v1746 = vunpack.c.h.b16 %v543
    %v1747 = vunpack.c.l.b16 %v544
    %v1748 = vunpack.c.h.b16 %v544
    %v1749 = vunpack.c.l.b16 %v545
    %v1750 = vunpack.c.h.b16 %v545
    %v1751 = vunpack.c.l.b16 %v546
    %v1752 = vunpack.c.h.b16 %v546
    %v1753 = vunpack.c.l.b16 %v547
    %v1754 = vunpack.c.h.b16 %v547
    %v1755 = vunpack.c.l.b16 %v548
    %v1756 = vunpack.c.h.b16 %v548
    %v1757 = vunpack.c.l.b16 %v549
    %v1758 = vunpack.c.h.b16 %v549
    %v1759 = vunpack.c.l.b16 %v550
    %v1760 = vunpack.c.h.b16 %v550
    %v1761 = vunpack.c.l.b16 %v551
    %v1762 = vunpack.c.h.b16 %v551
    %v1763 = vunpack.c.l.b16 %v552
    %v1764 = vunpack.c.h.b16 %v552
    %v1765 = vunpack.c.l.b16 %v553
    %v1766 = vunpack.c.h.b16 %v553
    %v1767 = vunpack.c.l.b16 %v554
    %v1768 = vunpack.c.h.b16 %v554
    %v1769 = vunpack.c.l.b16 %v555
    %v1770 = vunpack.c.h.b16 %v555
    %v1771 = vunpack.c.l.b16 %v556
    %v1772 = vunpack.c.h.b16 %v556
    %v1773 = vunpack.c.l.b16 %v557
    %v1774 = vunpack.c.h.b16 %v557
    %v1775 = vunpack.c.l.b16 %v558
    %v1776 = vunpack.c.h.b16 %v558
    %v1777 = vunpack.c.l.b16 %v559
    %v1778 = vunpack.c.h.b16 %v559
    %v1779 = vunpack.c.l.b16 %v560
    %v1780 = vunpack.c.h.b16 %v560
    %v1781 = vunpack.c.l.b16 %v561
    %v1782 = vunpack.c.h.b16 %v561
    %v1783 = vunpack.c.l.b16 %v562
    %v1784 = vunpack.c.h.b16 %v562
    %v1785 = vunpack.c.l.b16 %v563
    %v1786 = vunpack.c.h.b16 %v563
    %v1787 = vunpack.c.l.b16 %v564
    %v1788 = vunpack.c.h.b16 %v564
    %v1789 = vunpack.c.l.b16 %v565
    %v1790 = vunpack.c.h.b16 %v565
    %v1791 = vunpack.c.l.b16 %v566
    %v1792 = vunpack.c.h.b16 %v566
    %v1793 = vunpack.c.l.b16 %v567
    %v1794 = vunpack.c.h.b16 %v567
    %v1795 = vunpack.c.l.b16 %v568
    %v1796 = vunpack.c.h.b16 %v568
    %v1797 = vunpack.c.l.b16 %v569
    %v1798 = vunpack.c.h.b16 %v569
    %v1799 = vunpack.c.l.b16 %v570
    %v1800 = vunpack.c.h.b16 %v570
    %v1801 = vunpack.c.l.b16 %v571
    %v1802 = vunpack.c.h.b16 %v571
    %v1803 = vunpack.c.l.b16 %v572
    %v1804 = vunpack.c.h.b16 %v572
    %v1805 = vunpack.c.l.b16 %v573
    %v1806 = vunpack.c.h.b16 %v573
    %v1807 = vunpack.c.l.b16 %v574
    %v1808 = vunpack.c.h.b16 %v574
    %v1809 = vunpack.c.l.b16 %v575
    %v1810 = vunpack.c.h.b16 %v575
    %v1811 = vunpack.c.l.b16 %v576
    %v1812 = vunpack.c.h.b16 %v576
    %v1813 = vunpack.c.l.b16 %v577
    %v1814 = vunpack.c.h.b16 %v577
    %v1815 = vunpack.c.l.b16 %v578
    %v1816 = vunpack.c.h.b16 %v578
    %v1817 = vunpack.c.l.b16 %v579
    %v1818 = vunpack.c.h.b16 %v579
    %v1819 = vunpack.c.l.b16 %v580
    %v1820 = vunpack.c.h.b16 %v580
    %v1821 = vunpack.c.l.b16 %v581
    %v1822 = vunpack.c.h.b16 %v581
    %v1823 = vunpack.c.l.b16 %v582
    %v1824 = vunpack.c.h.b16 %v582
    %v1825 = vunpack.c.l.b16 %v583
    %v1826 = vunpack.c.h.b16 %v583
    %v1827 = vunpack.c.l.b16 %v584
    %v1828 = vunpack.c.h.b16 %v584
    %v1829 = vunpack.c.l.b16 %v585
    %v1830 = vunpack.c.h.b16 %v585
    %v1831 = vunpack.c.l.b16 %v586
    %v1832 = vunpack.c.h.b16 %v586
    %v1833 = vunpack.c.l.b16 %v587
    %v1834 = vunpack.c.h.b16 %v587
    %v1835 = vunpack.c.l.b16 %v588
    %v1836 = vunpack.c.h.b16 %v588
    %v1837 = vunpack.c.l.b16 %v589
    %v1838 = vunpack.c.h.b16 %v589
    %v1839 = vunpack.c.l.b16 %v590
    %v1840 = vunpack.c.h.b16 %v590
    %v1841 = vunpack.c.l.b16 %v591
    %v1842 = vunpack.c.h.b16 %v591
    %v1843 = vunpack.c.l.b16 %v592
    %v1844 = vunpack.c.h.b16 %v592
    %v1845 = vunpack.c.l.b16 %v593
    %v1846 = vunpack.c.h.b16 %v593
    %v1847 = vunpack.c.l.b16 %v594
    %v1848 = vunpack.c.h.b16 %v594
    %v1849 = vunpack.c.l.b16 %v595
    %v1850 = vunpack.c.h.b16 %v595
    %v1851 = vunpack.c.l.b16 %v596
    %v1852 = vunpack.c.h.b16 %v596
    %v1853 = vunpack.c.l.b16 %v597
    %v1854 = vunpack.c.h.b16 %v597
    %v1855 = vunpack.c.l.b16 %v598
    %v1856 = vunpack.c.h.b16 %v598
    %v1857 = vunpack.c.l.b16 %v599
    %v1858 = vunpack.c.h.b16 %v599
    %v1859 = vunpack.c.l.b16 %v600
    %v1860 = vunpack.c.h.b16 %v600
    %v1861 = vunpack.c.l.b16 %v601
    %v1862 = vunpack.c.h.b16 %v601
    %v1863 = vunpack.c.l.b16 %v602
    %v1864 = vunpack.c.h.b16 %v602
    %v1865 = vunpack.c.l.b16 %v603
    %v1866 = vunpack.c.h.b16 %v603
    %v1867 = vunpack.c.l.b16 %v604
    %v1868 = vunpack.c.h.b16 %v604
    %v1869 = vunpack.c.l.b16 %v605
    %v1870 = vunpack.c.h.b16 %v605
    %v1871 = vunpack.c.l.b16 %v606
    %v1872 = vunpack.c.h.b16 %v606
    %v1873 = vunpack.c.l.b16 %v607
    %v1874 = vunpack.c.h.b16 %v607
    %v1875 = vunpack.c.l.b16 %v608
    %v1876 = vunpack.c.h.b16 %v608
    %v1877 = vunpack.c.l.b16 %v609
    %v1878 = vunpack.c.h.b16 %v609
    %v1879 = vunpack.c.l.b16 %v610
    %v1880 = vunpack.c.h.b16 %v610
    %v1881 = vunpack.c.l.b16 %v611
    %v1882 = vunpack.c.h.b16 %v611
    %v1883 = vunpack.c.l.b16 %v612
    %v1884 = vunpack.c.h.b16 %v612
    %v1885 = vunpack.c.l.b16 %v613
    %v1886 = vunpack.c.h.b16 %v613
    %v1887 = vunpack.c.l.b16 %v614
    %v1888 = vunpack.c.h.b16 %v614
    %v1889 = vunpack.c.l.b16 %v615
    %v1890 = vunpack.c.h.b16 %v615
    %v1891 = vunpack.c.l.b16 %v616
    %v1892 = vunpack.c.h.b16 %v616
    %v1893 = vunpack.c.l.b16 %v617
    %v1894 = vunpack.c.h.b16 %v617
    %v1895 = vunpack.c.l.b16 %v618
    %v1896 = vunpack.c.h.b16 %v618
    %v1897 = vunpack.c.l.b16 %v619
    %v1898 = vunpack.c.h.b16 %v619
    %v1899 = vunpack.c.l.b16 %v620
    %v1900 = vunpack.c.h.b16 %v620
    %v1901 = vunpack.c.l.b16 %v621
    %v1902 = vunpack.c.h.b16 %v621
    %v1903 = vunpack.c.l.b16 %v622
    %v1904 = vunpack.c.h.b16 %v622
    %v1905 = vunpack.c.l.b16 %v623
    %v1906 = vunpack.c.h.b16 %v623
    %v1907 = vunpack.c.l.b16 %v624
    %v1908 = vunpack.c.h.b16 %v624
    %v1909 = vunpack.c.l.b16 %v625
    %v1910 = vunpack.c.h.b16 %v625
    %v1911 = vunpack.c.l.b16 %v626
    %v1912 = vunpack.c.h.b16 %v626
    %v1913 = vunpack.c.l.b16 %v627
    %v1914 = vunpack.c.h.b16 %v627
    %v1915 = vunpack.c.l.b16 %v628
    %v1916 = vunpack.c.h.b16 %v628
    %v1917 = vunpack.c.l.b16 %v629
    %v1918 = vunpack.c.h.b16 %v629
    %v1919 = vunpack.c.l.b16 %v630
    %v1920 = vunpack.c.h.b16 %v630
    %v1921 = vunpack.c.l.b16 %v631
    %v1922 = vunpack.c.h.b16 %v631
    %v1923 = vunpack.c.l.b16 %v632
    %v1924 = vunpack.c.h.b16 %v632
    %v1925 = vunpack.c.l.b16 %v633
    %v1926 = vunpack.c.h.b16 %v633
    %v1927 = vunpack.c.l.b16 %v634
    %v1928 = vunpack.c.h.b16 %v634
    %v1929 = vunpack.c.l.b16 %v635
    %v1930 = vunpack.c.h.b16 %v635
    %v1931 = vunpack.c.l.b16 %v636
    %v1932 = vunpack.c.h.b16 %v636
    %v1933 = vunpack.c.l.b16 %v637
    %v1934 = vunpack.c.h.b16 %v637
    %v1935 = vunpack.c.l.b16 %v638
    %v1936 = vunpack.c.h.b16 %v638
    %v1937 = vunpack.c.l.b16 %v639
    %v1938 = vunpack.c.h.b16 %v639
    %v1939 = vunpack.c.l.b16 %v640
    %v1940 = vunpack.c.h.b16 %v640
    %v1941 = vunpack.c.l.b16 %v641
    %v1942 = vunpack.c.h.b16 %v641
    %v1943 = vunpack.c.l.b16 %v642
    %v1944 = vunpack.c.h.b16 %v642
    %v1945 = vunpack.c.l.b16 %v643
    %v1946 = vunpack.c.h.b16 %v643
    %v1947 = vunpack.c.l.b16 %v644
    %v1948 = vunpack.c.h.b16 %v644
    %v1949 = vunpack.c.l.b16 %v645
    %v1950 = vunpack.c.h.b16 %v645
    %v1951 = vunpack.c.l.b16 %v646
    %v1952 = vunpack.c.h.b16 %v646
    %v1953 = vunpack.c.l.b16 %v647
    %v1954 = vunpack.c.h.b16 %v647
    %v1955 = vunpack.c.l.b16 %v648
    %v1956 = vunpack.c.h.b16 %v648
    %v1957 = vunpack.c.l.b16 %v649
    %v1958 = vunpack.c.h.b16 %v649
    %v1959 = vunpack.c.l.b16 %v650
    %v1960 = vunpack.c.h.b16 %v650
    %v1961 = vunpack.c.l.b16 %v651
    %v1962 = vunpack.c.h.b16 %v651
    %v1963 = vunpack.c.l.b16 %v652
    %v1964 = vunpack.c.h.b16 %v652
    %v1965 = vunpack.c.l.b16 %v653
    %v1966 = vunpack.c.h.b16 %v653
    %v1967 = vunpack.c.l.b16 %v654
    %v1968 = vunpack.c.h.b16 %v654
    %v1969 = vunpack.c.l.b16 %v655
    %v1970 = vunpack.c.h.b16 %v655
    %v1971 = vunpack.c.l.b16 %v656
    %v1972 = vunpack.c.h.b16 %v656
    %v1973 = vunpack.c.l.b16 %v657
    %v1974 = vunpack.c.h.b16 %v657
    %v1975 = vunpack.c.l.b16 %v658
    %v1976 = vunpack.c.h.b16 %v658
    %v1977 = vunpack.c.l.b16 %v659
    %v1978 = vunpack.c.h.b16 %v659
    %v1979 = vunpack.c.l.b16 %v660
    %v1980 = vunpack.c.h.b16 %v660
    %v1981 = vunpack.c.l.b16 %v661
    %v1982 = vunpack.c.h.b16 %v661
    %v1983 = vunpack.c.l.b16 %v662
    %v1984 = vunpack.c.h.b16 %v662
    %v1985 = vunpack.c.l.b16 %v663
    %v1986 = vunpack.c.h.b16 %v663
    %v1987 = vunpack.c.l.b16 %v664
    %v1988 = vunpack.c.h.b16 %v664
    %v1989 = vunpack.c.l.b16 %v665
    %v1990 = vunpack.c.h.b16 %v665
    %v1991 = vunpack.c.l.b16 %v666
    %v1992 = vunpack.c.h.b16 %v666
    %v1993 = vunpack.c.l.b16 %v667
    %v1994 = vunpack.c.h.b16 %v667
    %v1995 = vunpack.c.l.b16 %v668
    %v1996 = vunpack.c.h.b16 %v668
    %v1997 = vunpack.c.l.b16 %v669
    %v1998 = vunpack.c.h.b16 %v669
    %v1999 = vunpack.c.l.b16 %v670
    %v2000 = vunpack.c.h.b16 %v670
    %v2001 = vunpack.c.l.b16 %v671
    %v2002 = vunpack.c.h.b16 %v671
    %v2003 = vunpack.c.l.b16 %v672
    %v2004 = vunpack.c.h.b16 %v672
    %v2005 = vunpack.c.l.b16 %v673
    %v2006 = vunpack.c.h.b16 %v673
    %v2007 = vunpack.c.l.b16 %v674
    %v2008 = vunpack.c.h.b16 %v674
    %v2009 = vunpack.c.l.b16 %v675
    %v2010 = vunpack.c.h.b16 %v675
    %v2011 = vunpack.c.l.b16 %v676
    %v2012 = vunpack.c.h.b16 %v676
    %v2013 = vunpack.c.l.b16 %v677
    %v2014 = vunpack.c.h.b16 %v677
    %v2015 = vunpack.c.l.b16 %v678
    %v2016 = vunpack.c.h.b16 %v678
    %v2017 = vunpack.c.l.b16 %v679
    %v2018 = vunpack.c.h.b16 %v679
    %v2019 = vunpack.c.l.b16 %v680
    %v2020 = vunpack.c.h.b16 %v680
    %v2021 = vunpack.c.l.b16 %v681
    %v2022 = vunpack.c.h.b16 %v681
    %v2023 = vunpack.c.l.b16 %v682
    %v2024 = vunpack.c.h.b16 %v682
    %v2025 = vunpack.c.l.b16 %v683
    %v2026 = vunpack.c.h.b16 %v683
    %v2027 = vunpack.c.l.b16 %v684
    %v2028 = vunpack.c.h.b16 %v684
    %v2029 = vunpack.c.l.b16 %v685
    %v2030 = vunpack.c.h.b16 %v685
    %v2031 = vunpack.c.l.b16 %v686
    %v2032 = vunpack.c.h.b16 %v686
    %v2033 = vunpack.c.l.b16 %v687
    %v2034 = vunpack.c.h.b16 %v687
    %v2035 = vunpack.c.l.b16 %v688
    %v2036 = vunpack.c.h.b16 %v688
    %v2037 = vunpack.c.l.b16 %v689
    %v2038 = vunpack.c.h.b16 %v689
    %v2039 = vunpack.c.l.b16 %v690
    %v2040 = vunpack.c.h.b16 %v690
    %v2041 = vunpack.c.l.b16 %v691
    %v2042 = vunpack.c.h.b16 %v691
    %v2043 = vunpack.c.l.b16 %v692
    %v2044 = vunpack.c.h.b16 %v692
    %v2045 = vunpack.c.l.b16 %v693
    %v2046 = vunpack.c.h.b16 %v693
    %v2047 = vunpack.c.l.b16 %v694
    %v2048 = vunpack.c.h.b16 %v694
    %v2049 = vunpack.c.l.b16 %v695
    %v2050 = vunpack.c.h.b16 %v695
    %v2051 = vunpack.c.l.b16 %v696
    %v2052 = vunpack.c.h.b16 %v696
    %v2053 = vunpack.c.l.b16 %v697
    %v2054 = vunpack.c.h.b16 %v697
    %v2055 = vunpack.c.l.b16 %v698
    %v2056 = vunpack.c.h.b16 %v698
    %v2057 = vunpack.c.l.b16 %v699
    %v2058 = vunpack.c.h.b16 %v699
    %v2059 = vunpack.c.l.b16 %v700
    %v2060 = vunpack.c.h.b16 %v700
    %v2061 = vunpack.c.l.b16 %v701
    %v2062 = vunpack.c.h.b16 %v701
    %v2063 = vunpack.c.l.b16 %v702
    %v2064 = vunpack.c.h.b16 %v702
    %v2065 = vunpack.c.l.b16 %v703
    %v2066 = vunpack.c.h.b16 %v703
    %v2067 = vunpack.c.l.b16 %v704
    %v2068 = vunpack.c.h.b16 %v704
    %v2069 = vunpack.c.l.b16 %v705
    %v2070 = vunpack.c.h.b16 %v705
    %v2071 = vunpack.c.l.b16 %v706
    %v2072 = vunpack.c.h.b16 %v706
    %v2073 = vunpack.c.l.b16 %v707
    %v2074 = vunpack.c.h.b16 %v707
    %v2075 = vunpack.c.l.b16 %v708
    %v2076 = vunpack.c.h.b16 %v708
    %v2077 = vunpack.c.l.b16 %v709
    %v2078 = vunpack.c.h.b16 %v709
    %v2079 = vunpack.c.l.b16 %v710
    %v2080 = vunpack.c.h.b16 %v710
    %v2081 = vunpack.c.l.b16 %v711
    %v2082 = vunpack.c.h.b16 %v711
    %v2083 = vunpack.c.l.b16 %v712
    %v2084 = vunpack.c.h.b16 %v712
    %v2085 = vunpack.c.l.b16 %v713
    %v2086 = vunpack.c.h.b16 %v713
    %v2087 = vunpack.c.l.b16 %v714
    %v2088 = vunpack.c.h.b16 %v714
    %v2089 = vunpack.c.l.b16 %v715
    %v2090 = vunpack.c.h.b16 %v715
    %v2091 = vunpack.c.l.b16 %v716
    %v2092 = vunpack.c.h.b16 %v716
    %v2093 = vunpack.c.l.b16 %v717
    %v2094 = vunpack.c.h.b16 %v717
    %v2095 = vunpack.c.l.b16 %v718
    %v2096 = vunpack.c.h.b16 %v718
    %v2097 = vunpack.c.l.b16 %v719
    %v2098 = vunpack.c.h.b16 %v719
    %v2099 = vunpack.c.l.b16 %v720
    %v2100 = vunpack.c.h.b16 %v720
    %v2101 = vunpack.c.l.b16 %v721
    %v2102 = vunpack.c.h.b16 %v721
    %v2103 = vunpack.c.l.b16 %v722
    %v2104 = vunpack.c.h.b16 %v722
    %v2105 = vunpack.c.l.b16 %v723
    %v2106 = vunpack.c.h.b16 %v723
    %v2107 = vunpack.c.l.b16 %v724
    %v2108 = vunpack.c.h.b16 %v724
    %v2109 = vunpack.c.l.b16 %v725
    %v2110 = vunpack.c.h.b16 %v725
    %v2111 = vunpack.c.l.b16 %v726
    %v2112 = vunpack.c.h.b16 %v726
    %v2113 = vunpack.c.l.b16 %v727
    %v2114 = vunpack.c.h.b16 %v727
    %v2115 = vunpack.c.l.b16 %v728
    %v2116 = vunpack.c.h.b16 %v728
    %v2117 = vunpack.c.l.b16 %v729
    %v2118 = vunpack.c.h.b16 %v729
    %v2119 = vunpack.c.l.b16 %v730
    %v2120 = vunpack.c.h.b16 %v730
    %v2121 = vunpack.c.l.b16 %v731
    %v2122 = vunpack.c.h.b16 %v731
    %v2123 = vunpack.c.l.b16 %v732
    %v2124 = vunpack.c.h.b16 %v732
    %v2125 = vunpack.c.l.b16 %v733
    %v2126 = vunpack.c.h.b16 %v733
    %v2127 = vunpack.c.l.b16 %v734
    %v2128 = vunpack.c.h.b16 %v734
    %v2129 = vunpack.c.l.b16 %v735
    %v2130 = vunpack.c.h.b16 %v735
    %v2131 = vunpack.c.l.b16 %v736
    %v2132 = vunpack.c.h.b16 %v736
    %v2133 = vunpack.c.l.b16 %v737
    %v2134 = vunpack.c.h.b16 %v737
    %v2135 = vunpack.c.l.b16 %v738
    %v2136 = vunpack.c.h.b16 %v738
    %v2137 = vunpack.c.l.b16 %v739
    %v2138 = vunpack.c.h.b16 %v739
    %v2139 = vunpack.c.l.b16 %v740
    %v2140 = vunpack.c.h.b16 %v740
    %v2141 = vunpack.c.l.b16 %v741
    %v2142 = vunpack.c.h.b16 %v741
    %v2143 = vunpack.c.l.b16 %v742
    %v2144 = vunpack.c.h.b16 %v742
    %v2145 = vunpack.c.l.b16 %v743
    %v2146 = vunpack.c.h.b16 %v743
    %v2147 = vunpack.c.l.b16 %v744
    %v2148 = vunpack.c.h.b16 %v744
    %v2149 = vunpack.c.l.b16 %v745
    %v2150 = vunpack.c.h.b16 %v745
    %v2151 = vunpack.c.l.b16 %v746
    %v2152 = vunpack.c.h.b16 %v746
    %v2153 = vunpack.c.l.b16 %v747
    %v2154 = vunpack.c.h.b16 %v747
    %v2155 = vunpack.c.l.b16 %v748
    %v2156 = vunpack.c.h.b16 %v748
    %v2157 = vunpack.c.l.b16 %v749
    %v2158 = vunpack.c.h.b16 %v749
    %v2159 = vunpack.c.l.b16 %v750
    %v2160 = vunpack.c.h.b16 %v750
    %v2161 = vunpack.c.l.b16 %v751
    %v2162 = vunpack.c.h.b16 %v751
    %v2163 = vunpack.c.l.b16 %v752
    %v2164 = vunpack.c.h.b16 %v752
    %v2165 = vunpack.c.l.b16 %v753
    %v2166 = vunpack.c.h.b16 %v753
    %v2167 = vunpack.c.l.b16 %v754
    %v2168 = vunpack.c.h.b16 %v754
    %v2169 = vunpack.c.l.b16 %v755
    %v2170 = vunpack.c.h.b16 %v755
    %v2171 = vunpack.c.l.b16 %v756
    %v2172 = vunpack.c.h.b16 %v756
    %v2173 = vunpack.c.l.b16 %v757
    %v2174 = vunpack.c.h.b16 %v757
    %v2175 = vunpack.c.l.b16 %v758
    %v2176 = vunpack.c.h.b16 %v758
    %v2177 = vunpack.c.l.b16 %v759
    %v2178 = vunpack.c.h.b16 %v759
    %v2179 = vunpack.c.l.b16 %v760
    %v2180 = vunpack.c.h.b16 %v760
    %v2181 = vunpack.c.l.b16 %v761
    %v2182 = vunpack.c.h.b16 %v761
    %v2183 = vunpack.c.l.b16 %v762
    %v2184 = vunpack.c.h.b16 %v762
    %v2185 = vunpack.c.l.b16 %v763
    %v2186 = vunpack.c.h.b16 %v763
    %v2187 = vunpack.c.l.b16 %v764
    %v2188 = vunpack.c.h.b16 %v764
    %v2189 = vunpack.c.l.b16 %v765
    %v2190 = vunpack.c.h.b16 %v765
    %v2191 = vunpack.c.l.b16 %v766
    %v2192 = vunpack.c.h.b16 %v766
    %v2193 = vunpack.c.l.b16 %v767
    %v2194 = vunpack.c.h.b16 %v767
    %v2195 = vunpack.c.l.b16 %v768
    %v2196 = vunpack.c.h.b16 %v768
    %v2197 = vunpack.c.l.b16 %v769
    %v2198 = vunpack.c.h.b16 %v769
    %v2199 = vunpack.c.l.b16 %v770
    %v2200 = vunpack.c.h.b16 %v770
    %v2201 = vunpack.c.l.b16 %v771
    %v2202 = vunpack.c.h.b16 %v771
    %v2203 = vunpack.c.l.b16 %v772
    %v2204 = vunpack.c.h.b16 %v772
    %v2205 = vunpack.c.l.b16 %v773
    %v2206 = vunpack.c.h.b16 %v773
    %v2207 = vunpack.c.l.b16 %v774
    %v2208 = vunpack.c.h.b16 %v774
    %v2209 = vunpack.c.l.b16 %v775
    %v2210 = vunpack.c.h.b16 %v775
    %v2211 = vunpack.c.l.b16 %v776
    %v2212 = vunpack.c.h.b16 %v776
    %v2213 = vunpack.c.l.b16 %v777
    %v2214 = vunpack.c.h.b16 %v777
    %v2215 = vunpack.c.l.b16 %v778
    %v2216 = vunpack.c.h.b16 %v778
    %v2217 = vunpack.c.l.b16 %v779
    %v2218 = vunpack.c.h.b16 %v779
    %v2219 = vunpack.c.l.b16 %v780
    %v2220 = vunpack.c.h.b16 %v780
    %v2221 = vpack.c.b16 %v1267, %v1261
    %v2222 = vpack.c.b16 %v1268, %v1262
    %v2223 = vpack.c.b16 %v1269, %v1263
    %v2224 = vpack.c.b16 %v1270, %v1264
    %v2225 = vpack.c.b16 %v1271, %v1265
    %v2226 = vpack.c.b16 %v1272, %v1266
    %v2227 = vpack.c.b16 %v1279, %v1273
    %v2228 = vpack.c.b16 %v1280, %v1274
    %v2229 = vpack.c.b16 %v1281, %v1275
    %v2230 = vpack.c.b16 %v1282, %v1276
    %v2231 = vpack.c.b16 %v1283, %v1277
    %v2232 = vpack.c.b16 %v1284, %v1278
    %v2233 = vpack.c.b16 %v1291, %v1285
    %v2234 = vpack.c.b16 %v1292, %v1286
    %v2235 = vpack.c.b16 %v1293, %v1287
    %v2236 = vpack.c.b16 %v1294, %v1288
    %v2237 = vpack.c.b16 %v1295, %v1289
    %v2238 = vpack.c.b16 %v1296, %v1290
    %v2239 = vpack.c.b16 %v1303, %v1297
    %v2240 = vpack.c.b16 %v1304, %v1298
    %v2241 = vpack.c.b16 %v1305, %v1299
    %v2242 = vpack.c.b16 %v1306, %v1300
    %v2243 = vpack.c.b16 %v1307, %v1301
    %v2244 = vpack.c.b16 %v1308, %v1302
    %v2245 = vpack.c.b16 %v1315, %v1309
    %v2246 = vpack.c.b16 %v1316, %v1310
    %v2247 = vpack.c.b16 %v1317, %v1311
    %v2248 = vpack.c.b16 %v1318, %v1312
    %v2249 = vpack.c.b16 %v1319, %v1313
    %v2250 = vpack.c.b16 %v1320, %v1314
    %v2251 = vpack.c.b16 %v1327, %v1321
    %v2252 = vpack.c.b16 %v1328, %v1322
    %v2253 = vpack.c.b16 %v1329, %v1323
    %v2254 = vpack.c.b16 %v1330, %v1324
    %v2255 = vpack.c.b16 %v1331, %v1325
    %v2256 = vpack.c.b16 %v1332, %v1326
    %v2257 = vpack.c.b16 %v1339, %v1333
    %v2258 = vpack.c.b16 %v1340, %v1334
    %v2259 = vpack.c.b16 %v1341, %v1335
    %v2260 = vpack.c.b16 %v1342, %v1336
    %v2261 = vpack.c.b16 %v1343, %v1337
    %v2262 = vpack.c.b16 %v1344, %v1338
    %v2263 = vpack.c.b16 %v1351, %v1345
    %v2264 = vpack.c.b16 %v1352, %v1346
    %v2265 = vpack.c.b16 %v1353, %v1347
    %v2266 = vpack.c.b16 %v1354, %v1348
    %v2267 = vpack.c.b16 %v1355, %v1349
    %v2268 = vpack.c.b16 %v1356, %v1350
    %v2269 = vpack.c.b16 %v1363, %v1357
    %v2270 = vpack.c.b16 %v1364, %v1358
    %v2271 = vpack.c.b16 %v1365, %v1359
    %v2272 = vpack.c.b16 %v1366, %v1360
    %v2273 = vpack.c.b16 %v1367, %v1361
    %v2274 = vpack.c.b16 %v1368, %v1362
    %v2275 = vpack.c.b16 %v1375, %v1369
    %v2276 = vpack.c.b16 %v1376, %v1370
    %v2277 = vpack.c.b16 %v1377, %v1371
    %v2278 = vpack.c.b16 %v1378, %v1372
    %v2279 = vpack.c.b16 %v1379, %v1373
    %v2280 = vpack.c.b16 %v1380, %v1374
    %v2281 = vpack.c.b16 %v1387, %v1381
    %v2282 = vpack.c.b16 %v1388, %v1382
    %v2283 = vpack.c.b16 %v1389, %v1383
    %v2284 = vpack.c.b16 %v1390, %v1384
    %v2285 = vpack.c.b16 %v1391, %v1385
    %v2286 = vpack.c.b16 %v1392, %v1386
    %v2287 = vpack.c.b16 %v1399, %v1393
    %v2288 = vpack.c.b16 %v1400, %v1394
    %v2289 = vpack.c.b16 %v1401, %v1395
    %v2290 = vpack.c.b16 %v1402, %v1396
    %v2291 = vpack.c.b16 %v1403, %v1397
    %v2292 = vpack.c.b16 %v1404, %v1398
    %v2293 = vpack.c.b16 %v1411, %v1405
    %v2294 = vpack.c.b16 %v1412, %v1406
    %v2295 = vpack.c.b16 %v1413, %v1407
    %v2296 = vpack.c.b16 %v1414, %v1408
    %v2297 = vpack.c.b16 %v1415, %v1409
    %v2298 = vpack.c.b16 %v1416, %v1410
    %v2299 = vpack.c.b16 %v1423, %v1417
    %v2300 = vpack.c.b16 %v1424, %v1418
    %v2301 = vpack.c.b16 %v1425, %v1419
    %v2302 = vpack.c.b16 %v1426, %v1420
    %v2303 = vpack.c.b16 %v1427, %v1421
    %v2304 = vpack.c.b16 %v1428, %v1422
    %v2305 = vpack.c.b16 %v1435, %v1429
    %v2306 = vpack.c.b16 %v1436, %v1430
    %v2307 = vpack.c.b16 %v1437, %v1431
    %v2308 = vpack.c.b16 %v1438, %v1432
    %v2309 = vpack.c.b16 %v1439, %v1433
    %v2310 = vpack.c.b16 %v1440, %v1434
    %v2311 = vpack.c.b16 %v1447, %v1441
    %v2312 = vpack.c.b16 %v1448, %v1442
    %v2313 = vpack.c.b16 %v1449, %v1443
    %v2314 = vpack.c.b16 %v1450, %v1444
    %v2315 = vpack.c.b16 %v1451, %v1445
    %v2316 = vpack.c.b16 %v1452, %v1446
    %v2317 = vpack.c.b16 %v1459, %v1453
    %v2318 = vpack.c.b16 %v1460, %v1454
    %v2319 = vpack.c.b16 %v1461, %v1455
    %v2320 = vpack.c.b16 %v1462, %v1456
    %v2321 = vpack.c.b16 %v1463, %v1457
    %v2322 = vpack.c.b16 %v1464, %v1458
    %v2323 = vpack.c.b16 %v1471, %v1465
    %v2324 = vpack.c.b16 %v1472, %v1466
    %v2325 = vpack.c.b16 %v1473, %v1467
    %v2326 = vpack.c.b16 %v1474, %v1468
    %v2327 = vpack.c.b16 %v1475, %v1469
    %v2328 = vpack.c.b16 %v1476, %v1470
    %v2329 = vpack.c.b16 %v1483, %v1477
    %v2330 = vpack.c.b16 %v1484, %v1478
    %v2331 = vpack.c.b16 %v1485, %v1479
    %v2332 = vpack.c.b16 %v1486, %v1480
    %v2333 = vpack.c.b16 %v1487, %v1481
    %v2334 = vpack.c.b16 %v1488, %v1482
    %v2335 = vpack.c.b16 %v1495, %v1489
    %v2336 = vpack.c.b16 %v1496, %v1490
    %v2337 = vpack.c.b16 %v1497, %v1491
    %v2338 = vpack.c.b16 %v1498, %v1492
    %v2339 = vpack.c.b16 %v1499, %v1493
    %v2340 = vpack.c.b16 %v1500, %v1494
    %v2341 = vpack.c.b16 %v1507, %v1501
    %v2342 = vpack.c.b16 %v1508, %v1502
    %v2343 = vpack.c.b16 %v1509, %v1503
    %v2344 = vpack.c.b16 %v1510, %v1504
    %v2345 = vpack.c.b16 %v1511, %v1505
    %v2346 = vpack.c.b16 %v1512, %v1506
    %v2347 = vpack.c.b16 %v1519, %v1513
    %v2348 = vpack.c.b16 %v1520, %v1514
    %v2349 = vpack.c.b16 %v1521, %v1515
    %v2350 = vpack.c.b16 %v1522, %v1516
    %v2351 = vpack.c.b16 %v1523, %v1517
    %v2352 = vpack.c.b16 %v1524, %v1518
    %v2353 = vpack.c.b16 %v1531, %v1525
    %v2354 = vpack.c.b16 %v1532, %v1526
    %v2355 = vpack.c.b16 %v1533, %v1527
    %v2356 = vpack.c.b16 %v1534, %v1528
    %v2357 = vpack.c.b16 %v1535, %v1529
    %v2358 = vpack.c.b16 %v1536, %v1530
    %v2359 = vpack.c.b16 %v1543, %v1537
    %v2360 = vpack.c.b16 %v1544, %v1538
    %v2361 = vpack.c.b16 %v1545, %v1539
    %v2362 = vpack.c.b16 %v1546, %v1540
    %v2363 = vpack.c.b16 %v1547, %v1541
    %v2364 = vpack.c.b16 %v1548, %v1542
    %v2365 = vpack.c.b16 %v1555, %v1549
    %v2366 = vpack.c.b16 %v1556, %v1550
    %v2367 = vpack.c.b16 %v1557, %v1551
    %v2368 = vpack.c.b16 %v1558, %v1552
    %v2369 = vpack.c.b16 %v1559, %v1553
    %v2370 = vpack.c.b16 %v1560, %v1554
    %v2371 = vpack.c.b16 %v1567, %v1561
    %v2372 = vpack.c.b16 %v1568, %v1562
    %v2373 = vpack.c.b16 %v1569, %v1563
    %v2374 = vpack.c.b16 %v1570, %v1564
    %v2375 = vpack.c.b16 %v1571, %v1565
    %v2376 = vpack.c.b16 %v1572, %v1566
    %v2377 = vpack.c.b16 %v1579, %v1573
    %v2378 = vpack.c.b16 %v1580, %v1574
    %v2379 = vpack.c.b16 %v1581, %v1575
    %v2380 = vpack.c.b16 %v1582, %v1576
    %v2381 = vpack.c.b16 %v1583, %v1577
    %v2382 = vpack.c.b16 %v1584, %v1578
    %v2383 = vpack.c.b16 %v1591, %v1585
    %v2384 = vpack.c.b16 %v1592, %v1586
    %v2385 = vpack.c.b16 %v1593, %v1587
    %v2386 = vpack.c.b16 %v1594, %v1588
    %v2387 = vpack.c.b16 %v1595, %v1589
    %v2388 = vpack.c.b16 %v1596, %v1590
    %v2389 = vpack.c.b16 %v1603, %v1597
    %v2390 = vpack.c.b16 %v1604, %v1598
    %v2391 = vpack.c.b16 %v1605, %v1599
    %v2392 = vpack.c.b16 %v1606, %v1600
    %v2393 = vpack.c.b16 %v1607, %v1601
    %v2394 = vpack.c.b16 %v1608, %v1602
    %v2395 = vpack.c.b16 %v1615, %v1609
    %v2396 = vpack.c.b16 %v1616, %v1610
    %v2397 = vpack.c.b16 %v1617, %v1611
    %v2398 = vpack.c.b16 %v1618, %v1612
    %v2399 = vpack.c.b16 %v1619, %v1613
    %v2400 = vpack.c.b16 %v1620, %v1614
    %v2401 = vpack.c.b16 %v1627, %v1621
    %v2402 = vpack.c.b16 %v1628, %v1622
    %v2403 = vpack.c.b16 %v1629, %v1623
    %v2404 = vpack.c.b16 %v1630, %v1624
    %v2405 = vpack.c.b16 %v1631, %v1625
    %v2406 = vpack.c.b16 %v1632, %v1626
    %v2407 = vpack.c.b16 %v1639, %v1633
    %v2408 = vpack.c.b16 %v1640, %v1634
    %v2409 = vpack.c.b16 %v1641, %v1635
    %v2410 = vpack.c.b16 %v1642, %v1636
    %v2411 = vpack.c.b16 %v1643, %v1637
    %v2412 = vpack.c.b16 %v1644, %v1638
    %v2413 = vpack.c.b16 %v1651, %v1645
    %v2414 = vpack.c.b16 %v1652, %v1646
    %v2415 = vpack.c.b16 %v1653, %v1647
    %v2416 = vpack.c.b16 %v1654, %v1648
    %v2417 = vpack.c.b16 %v1655, %v1649
    %v2418 = vpack.c.b16 %v1656, %v1650
    %v2419 = vpack.c.b16 %v1663, %v1657
    %v2420 = vpack.c.b16 %v1664, %v1658
    %v2421 = vpack.c.b16 %v1665, %v1659
    %v2422 = vpack.c.b16 %v1666, %v1660
    %v2423 = vpack.c.b16 %v1667, %v1661
    %v2424 = vpack.c.b16 %v1668, %v1662
    %v2425 = vpack.c.b16 %v1675, %v1669
    %v2426 = vpack.c.b16 %v1676, %v1670
    %v2427 = vpack.c.b16 %v1677, %v1671
    %v2428 = vpack.c.b16 %v1678, %v1672
    %v2429 = vpack.c.b16 %v1679, %v1673
    %v2430 = vpack.c.b16 %v1680, %v1674
    %v2431 = vpack.c.b16 %v1687, %v1681
    %v2432 = vpack.c.b16 %v1688, %v1682
    %v2433 = vpack.c.b16 %v1689, %v1683
    %v2434 = vpack.c.b16 %v1690, %v1684
    %v2435 = vpack.c.b16 %v1691, %v1685
    %v2436 = vpack.c.b16 %v1692, %v1686
    %v2437 = vpack.c.b16 %v1699, %v1693
    %v2438 = vpack.c.b16 %v1700, %v1694
    %v2439 = vpack.c.b16 %v1701, %v1695
    %v2440 = vpack.c.b16 %v1702, %v1696
    %v2441 = vpack.c.b16 %v1703, %v1697
    %v2442 = vpack.c.b16 %v1704, %v1698
    %v2443 = vpack.c.b16 %v1711, %v1705
    %v2444 = vpack.c.b16 %v1712, %v1706
    %v2445 = vpack.c.b16 %v1713, %v1707
    %v2446 = vpack.c.b16 %v1714, %v1708
    %v2447 = vpack.c.b16 %v1715, %v1709
    %v2448 = vpack.c.b16 %v1716, %v1710
    %v2449 = vpack.c.b16 %v1723, %v1717
    %v2450 = vpack.c.b16 %v1724, %v1718
    %v2451 = vpack.c.b16 %v1725, %v1719
    %v2452 = vpack.c.b16 %v1726, %v1720
    %v2453 = vpack.c.b16 %v1727, %v1721
    %v2454 = vpack.c.b16 %v1728, %v1722
    %v2455 = vpack.c.b16 %v1735, %v1729
    %v2456 = vpack.c.b16 %v1736, %v1730
    %v2457 = vpack.c.b16 %v1737, %v1731
    %v2458 = vpack.c.b16 %v1738, %v1732
    %v2459 = vpack.c.b16 %v1739, %v1733
    %v2460 = vpack.c.b16 %v1740, %v1734
    %v2461 = vpack.c.b16 %v1747, %v1741
    %v2462 = vpack.c.b16 %v1748, %v1742
    %v2463 = vpack.c.b16 %v1749, %v1743
    %v2464 = vpack.c.b16 %v1750, %v1744
    %v2465 = vpack.c.b16 %v1751, %v1745
    %v2466 = vpack.c.b16 %v1752, %v1746
    %v2467 = vpack.c.b16 %v1759, %v1753
    %v2468 = vpack.c.b16 %v1760, %v1754
    %v2469 = vpack.c.b16 %v1761, %v1755
    %v2470 = vpack.c.b16 %v1762, %v1756
    %v2471 = vpack.c.b16 %v1763, %v1757
    %v2472 = vpack.c.b16 %v1764, %v1758
    %v2473 = vpack.c.b16 %v1771, %v1765
    %v2474 = vpack.c.b16 %v1772, %v1766
    %v2475 = vpack.c.b16 %v1773, %v1767
    %v2476 = vpack.c.b16 %v1774, %v1768
    %v2477 = vpack.c.b16 %v1775, %v1769
    %v2478 = vpack.c.b16 %v1776, %v1770
    %v2479 = vpack.c.b16 %v1783, %v1777
    %v2480 = vpack.c.b16 %v1784, %v1778
    %v2481 = vpack.c.b16 %v1785, %v1779
    %v2482 = vpack.c.b16 %v1786, %v1780
    %v2483 = vpack.c.b16 %v1787, %v1781
    %v2484 = vpack.c.b16 %v1788, %v1782
    %v2485 = vpack.c.b16 %v1795, %v1789
    %v2486 = vpack.c.b16 %v1796, %v1790
    %v2487 = vpack.c.b16 %v1797, %v1791
    %v2488 = vpack.c.b16 %v1798, %v1792
    %v2489 = vpack.c.b16 %v1799, %v1793
    %v2490 = vpack.c.b16 %v1800, %v1794
    %v2491 = vpack.c.b16 %v1807, %v1801
    %v2492 = vpack.c.b16 %v1808, %v1802
    %v2493 = vpack.c.b16 %v1809, %v1803
    %v2494 = vpack.c.b16 %v1810, %v1804
    %v2495 = vpack.c.b16 %v1811, %v1805
    %v2496 = vpack.c.b16 %v1812, %v1806
    %v2497 = vpack.c.b16 %v1819, %v1813
    %v2498 = vpack.c.b16 %v1820, %v1814
    %v2499 = vpack.c.b16 %v1821, %v1815
    %v2500 = vpack.c.b16 %v1822, %v1816
    %v2501 = vpack.c.b16 %v1823, %v1817
    %v2502 = vpack.c.b16 %v1824, %v1818
    %v2503 = vpack.c.b16 %v1831, %v1825
    %v2504 = vpack.c.b16 %v1832, %v1826
    %v2505 = vpack.c.b16 %v1833, %v1827
    %v2506 = vpack.c.b16 %v1834, %v1828
    %v2507 = vpack.c.b16 %v1835, %v1829
    %v2508 = vpack.c.b16 %v1836, %v1830
    %v2509 = vpack.c.b16 %v1843, %v1837
    %v2510 = vpack.c.b16 %v1844, %v1838
    %v2511 = vpack.c.b16 %v1845, %v1839
    %v2512 = vpack.c.b16 %v1846, %v1840
    %v2513 = vpack.c.b16 %v1847, %v1841
    %v2514 = vpack.c.b16 %v1848, %v1842
    %v2515 = vpack.c.b16 %v1855, %v1849
    %v2516 = vpack.c.b16 %v1856, %v1850
    %v2517 = vpack.c.b16 %v1857, %v1851
    %v2518 = vpack.c.b16 %v1858, %v1852
    %v2519 = vpack.c.b16 %v1859, %v1853
    %v2520 = vpack.c.b16 %v1860, %v1854
    %v2521 = vpack.c.b16 %v1867, %v1861
    %v2522 = vpack.c.b16 %v1868, %v1862
    %v2523 = vpack.c.b16 %v1869, %v1863
    %v2524 = vpack.c.b16 %v1870, %v1864
    %v2525 = vpack.c.b16 %v1871, %v1865
    %v2526 = vpack.c.b16 %v1872, %v1866
    %v2527 = vpack.c.b16 %v1879, %v1873
    %v2528 = vpack.c.b16 %v1880, %v1874
    %v2529 = vpack.c.b16 %v1881, %v1875
    %v2530 = vpack.c.b16 %v1882, %v1876
    %v2531 = vpack.c.b16 %v1883, %v1877
    %v2532 = vpack.c.b16 %v1884, %v1878
    %v2533 = vpack.c.b16 %v1891, %v1885
    %v2534 = vpack.c.b16 %v1892, %v1886
    %v2535 = vpack.c.b16 %v1893, %v1887
    %v2536 = vpack.c.b16 %v1894, %v1888
    %v2537 = vpack.c.b16 %v1895, %v1889
    %v2538 = vpack.c.b16 %v1896, %v1890
    %v2539 = vpack.c.b16 %v1903, %v1897
    %v2540 = vpack.c.b16 %v1904, %v1898
    %v2541 = vpack.c.b16 %v1905, %v1899
    %v2542 = vpack.c.b16 %v1906, %v1900
    %v2543 = vpack.c.b16 %v1907, %v1901
    %v2544 = vpack.c.b16 %v1908, %v1902
    %v2545 = vpack.c.b16 %v1915, %v1909
    %v2546 = vpack.c.b16 %v1916, %v1910
    %v2547 = vpack.c.b16 %v1917, %v1911
    %v2548 = vpack.c.b16 %v1918, %v1912
    %v2549 = vpack.c.b16 %v1919, %v1913
    %v2550 = vpack.c.b16 %v1920, %v1914
    %v2551 = vpack.c.b16 %v1927, %v1921
    %v2552 = vpack.c.b16 %v1928, %v1922
    %v2553 = vpack.c.b16 %v1929, %v1923
    %v2554 = vpack.c.b16 %v1930, %v1924
    %v2555 = vpack.c.b16 %v1931, %v1925
    %v2556 = vpack.c.b16 %v1932, %v1926
    %v2557 = vpack.c.b16 %v1939, %v1933
    %v2558 = vpack.c.b16 %v1940, %v1934
    %v2559 = vpack.c.b16 %v1941, %v1935
    %v2560 = vpack.c.b16 %v1942, %v1936
    %v2561 = vpack.c.b16 %v1943, %v1937
    %v2562 = vpack.c.b16 %v1944, %v1938
    %v2563 = vpack.c.b16 %v1951, %v1945
    %v2564 = vpack.c.b16 %v1952, %v1946
    %v2565 = vpack.c.b16 %v1953, %v1947
    %v2566 = vpack.c.b16 %v1954, %v1948
    %v2567 = vpack.c.b16 %v1955, %v1949
    %v2568 = vpack.c.b16 %v1956, %v1950
    %v2569 = vpack.c.b16 %v1963, %v1957
    %v2570 = vpack.c.b16 %v1964, %v1958
    %v2571 = vpack.c.b16 %v1965, %v1959
    %v2572 = vpack.c.b16 %v1966, %v1960
    %v2573 = vpack.c.b16 %v1967, %v1961
    %v2574 = vpack.c.b16 %v1968, %v1962
    %v2575 = vpack.c.b16 %v1975, %v1969
    %v2576 = vpack.c.b16 %v1976, %v1970
    %v2577 = vpack.c.b16 %v1977, %v1971
    %v2578 = vpack.c.b16 %v1978, %v1972
    %v2579 = vpack.c.b16 %v1979, %v1973
    %v2580 = vpack.c.b16 %v1980, %v1974
    %v2581 = vpack.c.b16 %v1987, %v1981
    %v2582 = vpack.c.b16 %v1988, %v1982
    %v2583 = vpack.c.b16 %v1989, %v1983
    %v2584 = vpack.c.b16 %v1990, %v1984
    %v2585 = vpack.c.b16 %v1991, %v1985
    %v2586 = vpack.c.b16 %v1992, %v1986
    %v2587 = vpack.c.b16 %v1999, %v1993
    %v2588 = vpack.c.b16 %v2000, %v1994
    %v2589 = vpack.c.b16 %v2001, %v1995
    %v2590 = vpack.c.b16 %v2002, %v1996
    %v2591 = vpack.c.b16 %v2003, %v1997
    %v2592 = vpack.c.b16 %v2004, %v1998
    %v2593 = vpack.c.b16 %v2011, %v2005
    %v2594 = vpack.c.b16 %v2012, %v2006
    %v2595 = vpack.c.b16 %v2013, %v2007
    %v2596 = vpack.c.b16 %v2014, %v2008
    %v2597 = vpack.c.b16 %v2015, %v2009
    %v2598 = vpack.c.b16 %v2016, %v2010
    %v2599 = vpack.c.b16 %v2023, %v2017
    %v2600 = vpack.c.b16 %v2024, %v2018
    %v2601 = vpack.c.b16 %v2025, %v2019
    %v2602 = vpack.c.b16 %v2026, %v2020
    %v2603 = vpack.c.b16 %v2027, %v2021
    %v2604 = vpack.c.b16 %v2028, %v2022
    %v2605 = vpack.c.b16 %v2035, %v2029
    %v2606 = vpack.c.b16 %v2036, %v2030
    %v2607 = vpack.c.b16 %v2037, %v2031
    %v2608 = vpack.c.b16 %v2038, %v2032
    %v2609 = vpack.c.b16 %v2039, %v2033
    %v2610 = vpack.c.b16 %v2040, %v2034
    %v2611 = vpack.c.b16 %v2047, %v2041
    %v2612 = vpack.c.b16 %v2048, %v2042
    %v2613 = vpack.c.b16 %v2049, %v2043
    %v2614 = vpack.c.b16 %v2050, %v2044
    %v2615 = vpack.c.b16 %v2051, %v2045
    %v2616 = vpack.c.b16 %v2052, %v2046
    %v2617 = vpack.c.b16 %v2059, %v2053
    %v2618 = vpack.c.b16 %v2060, %v2054
    %v2619 = vpack.c.b16 %v2061, %v2055
    %v2620 = vpack.c.b16 %v2062, %v2056
    %v2621 = vpack.c.b16 %v2063, %v2057
    %v2622 = vpack.c.b16 %v2064, %v2058
    %v2623 = vpack.c.b16 %v2071, %v2065
    %v2624 = vpack.c.b16 %v2072, %v2066
    %v2625 = vpack.c.b16 %v2073, %v2067
    %v2626 = vpack.c.b16 %v2074, %v2068
    %v2627 = vpack.c.b16 %v2075, %v2069
    %v2628 = vpack.c.b16 %v2076, %v2070
    %v2629 = vpack.c.b16 %v2083, %v2077
    %v2630 = vpack.c.b16 %v2084, %v2078
    %v2631 = vpack.c.b16 %v2085, %v2079
    %v2632 = vpack.c.b16 %v2086, %v2080
    %v2633 = vpack.c.b16 %v2087, %v2081
    %v2634 = vpack.c.b16 %v2088, %v2082
    %v2635 = vpack.c.b16 %v2095, %v2089
    %v2636 = vpack.c.b16 %v2096, %v2090
    %v2637 = vpack.c.b16 %v2097, %v2091
    %v2638 = vpack.c.b16 %v2098, %v2092
    %v2639 = vpack.c.b16 %v2099, %v2093
    %v2640 = vpack.c.b16 %v2100, %v2094
    %v2641 = vpack.c.b16 %v2107, %v2101
    %v2642 = vpack.c.b16 %v2108, %v2102
    %v2643 = vpack.c.b16 %v2109, %v2103
    %v2644 = vpack.c.b16 %v2110, %v2104
    %v2645 = vpack.c.b16 %v2111, %v2105
    %v2646 = vpack.c.b16 %v2112, %v2106
    %v2647 = vpack.c.b16 %v2119, %v2113
    %v2648 = vpack.c.b16 %v2120, %v2114
    %v2649 = vpack.c.b16 %v2121, %v2115
    %v2650 = vpack.c.b16 %v2122, %v2116
    %v2651 = vpack.c.b16 %v2123, %v2117
    %v2652 = vpack.c.b16 %v2124, %v2118
    %v2653 = vpack.c.b16 %v2131, %v2125
    %v2654 = vpack.c.b16 %v2132, %v2126
    %v2655 = vpack.c.b16 %v2133, %v2127
    %v2656 = vpack.c.b16 %v2134, %v2128
    %v2657 = vpack.c.b16 %v2135, %v2129
    %v2658 = vpack.c.b16 %v2136, %v2130
    %v2659 = vpack.c.b16 %v2143, %v2137
    %v2660 = vpack.c.b16 %v2144, %v2138
    %v2661 = vpack.c.b16 %v2145, %v2139
    %v2662 = vpack.c.b16 %v2146, %v2140
    %v2663 = vpack.c.b16 %v2147, %v2141
    %v2664 = vpack.c.b16 %v2148, %v2142
    %v2665 = vpack.c.b16 %v2155, %v2149
    %v2666 = vpack.c.b16 %v2156, %v2150
    %v2667 = vpack.c.b16 %v2157, %v2151
    %v2668 = vpack.c.b16 %v2158, %v2152
    %v2669 = vpack.c.b16 %v2159, %v2153
    %v2670 = vpack.c.b16 %v2160, %v2154
    %v2671 = vpack.c.b16 %v2167, %v2161
    %v2672 = vpack.c.b16 %v2168, %v2162
    %v2673 = vpack.c.b16 %v2169, %v2163
    %v2674 = vpack.c.b16 %v2170, %v2164
    %v2675 = vpack.c.b16 %v2171, %v2165
    %v2676 = vpack.c.b16 %v2172, %v2166
    %v2677 = vpack.c.b16 %v2179, %v2173
    %v2678 = vpack.c.b16 %v2180, %v2174
    %v2679 = vpack.c.b16 %v2181, %v2175
    %v2680 = vpack.c.b16 %v2182, %v2176
    %v2681 = vpack.c.b16 %v2183, %v2177
    %v2682 = vpack.c.b16 %v2184, %v2178
    %v2683 = vpack.c.b16 %v2191, %v2185
    %v2684 = vpack.c.b16 %v2192, %v2186
    %v2685 = vpack.c.b16 %v2193, %v2187
    %v2686 = vpack.c.b16 %v2194, %v2188
    %v2687 = vpack.c.b16 %v2195, %v2189
    %v2688 = vpack.c.b16 %v2196, %v2190
    %v2689 = vpack.c.b16 %v2203, %v2197
    %v2690 = vpack.c.b16 %v2204, %v2198
    %v2691 = vpack.c.b16 %v2205, %v2199
    %v2692 = vpack.c.b16 %v2206, %v2200
    %v2693 = vpack.c.b16 %v2207, %v2201
    %v2694 = vpack.c.b16 %v2208, %v2202
    %v2695 = vpack.c.b16 %v2215, %v2209
    %v2696 = vpack.c.b16 %v2216, %v2210
    %v2697 = vpack.c.b16 %v2217, %v2211
    %v2698 = vpack.c.b16 %v2218, %v2212
    %v2699 = vpack.c.b16 %v2219, %v2213
    %v2700 = vpack.c.b16 %v2220, %v2214
    %3181 = vmatpush.bf16.msra.mxu0 %v2263
    %3182 = vmatpush.bf16.msra.mxu0 %v2257
    %3183 = vmatpush.bf16.msra.mxu0 %v2251
    %3184 = vmatpush.bf16.msra.mxu0 %v2245
    %3185 = vmatpush.bf16.msra.mxu0 %v2239
    %3186 = vmatpush.bf16.msra.mxu0 %v2233
    %3187 = vmatpush.bf16.msra.mxu0 %v2227
    %3188 = vmatpush.bf16.msra.mxu0 %v2221
    %3189 = vmatmul.bf16.gmra.mxu0 %v291
    %v3190 = vpop.f32.mrf.mxu0
    %v3191 = vadd.f32 0.0, %v3190
    %v3192 = vpop.f32.mrf.mxu0
    %v3193 = vadd.f32 0.0, %v3192
    %3194 = vdwg.mxu0
    %3195 = vmatpush.bf16.msra.mxu0 %v2311
    %3196 = vmatpush.bf16.msra.mxu0 %v2305
    %3197 = vmatpush.bf16.msra.mxu0 %v2299
    %3198 = vmatpush.bf16.msra.mxu0 %v2293
    %3199 = vmatpush.bf16.msra.mxu0 %v2287
    %3200 = vmatpush.bf16.msra.mxu0 %v2281
    %3201 = vmatpush.bf16.msra.mxu0 %v2275
    %3202 = vmatpush.bf16.msra.mxu0 %v2269
    %3203 = vmatmul.bf16.gmra.mxu0 %v292
    %v3204 = vpop.f32.mrf.mxu0
    %v3205 = vadd.f32 %v3191, %v3204
    %v3206 = vpop.f32.mrf.mxu0
    %v3207 = vadd.f32 %v3193, %v3206
    %3208 = vdwg.mxu0
    %3209 = vmatpush.bf16.msra.mxu0 %v2359
    %3210 = vmatpush.bf16.msra.mxu0 %v2353
    %3211 = vmatpush.bf16.msra.mxu0 %v2347
    %3212 = vmatpush.bf16.msra.mxu0 %v2341
    %3213 = vmatpush.bf16.msra.mxu0 %v2335
    %3214 = vmatpush.bf16.msra.mxu0 %v2329
    %3215 = vmatpush.bf16.msra.mxu0 %v2323
    %3216 = vmatpush.bf16.msra.mxu0 %v2317
    %3217 = vmatmul.bf16.gmra.mxu0 %v293
    %v3218 = vpop.f32.mrf.mxu0
    %v3219 = vadd.f32 %v3205, %v3218
    %v3220 = vpop.f32.mrf.mxu0
    %v3221 = vadd.f32 %v3207, %v3220
    %3222 = vdwg.mxu0
    %3223 = vmatpush.bf16.msra.mxu0 %v2407
    %3224 = vmatpush.bf16.msra.mxu0 %v2401
    %3225 = vmatpush.bf16.msra.mxu0 %v2395
    %3226 = vmatpush.bf16.msra.mxu0 %v2389
    %3227 = vmatpush.bf16.msra.mxu0 %v2383
    %3228 = vmatpush.bf16.msra.mxu0 %v2377
    %3229 = vmatpush.bf16.msra.mxu0 %v2371
    %3230 = vmatpush.bf16.msra.mxu0 %v2365
    %3231 = vmatmul.bf16.gmra.mxu0 %v294
    %v3232 = vpop.f32.mrf.mxu0
    %v3233 = vadd.f32 %v3219, %v3232
    %v3234 = vpop.f32.mrf.mxu0
    %v3235 = vadd.f32 %v3221, %v3234
    %3236 = vdwg.mxu0
    %3237 = vmatpush.bf16.msra.mxu0 %v2455
    %3238 = vmatpush.bf16.msra.mxu0 %v2449
    %3239 = vmatpush.bf16.msra.mxu0 %v2443
    %3240 = vmatpush.bf16.msra.mxu0 %v2437
    %3241 = vmatpush.bf16.msra.mxu0 %v2431
    %3242 = vmatpush.bf16.msra.mxu0 %v2425
    %3243 = vmatpush.bf16.msra.mxu0 %v2419
    %3244 = vmatpush.bf16.msra.mxu0 %v2413
    %3245 = vmatmul.bf16.gmra.mxu0 %v295
    %v3246 = vpop.f32.mrf.mxu0
    %v3247 = vadd.f32 %v3233, %v3246
    %v3248 = vpop.f32.mrf.mxu0
    %v3249 = vadd.f32 %v3235, %v3248
    %3250 = vdwg.mxu0
    %3251 = vmatpush.bf16.msra.mxu0 %v2503
    %3252 = vmatpush.bf16.msra.mxu0 %v2497
    %3253 = vmatpush.bf16.msra.mxu0 %v2491
    %3254 = vmatpush.bf16.msra.mxu0 %v2485
    %3255 = vmatpush.bf16.msra.mxu0 %v2479
    %3256 = vmatpush.bf16.msra.mxu0 %v2473
    %3257 = vmatpush.bf16.msra.mxu0 %v2467
    %3258 = vmatpush.bf16.msra.mxu0 %v2461
    %3259 = vmatmul.bf16.gmra.mxu0 %v296
    %v3260 = vpop.f32.mrf.mxu0
    %v3261 = vadd.f32 %v3247, %v3260
    %v3262 = vpop.f32.mrf.mxu0
    %v3263 = vadd.f32 %v3249, %v3262
    %3264 = vdwg.mxu0
    %3265 = vmatpush.bf16.msra.mxu0 %v2551
    %3266 = vmatpush.bf16.msra.mxu0 %v2545
    %3267 = vmatpush.bf16.msra.mxu0 %v2539
    %3268 = vmatpush.bf16.msra.mxu0 %v2533
    %3269 = vmatpush.bf16.msra.mxu0 %v2527
    %3270 = vmatpush.bf16.msra.mxu0 %v2521
    %3271 = vmatpush.bf16.msra.mxu0 %v2515
    %3272 = vmatpush.bf16.msra.mxu0 %v2509
    %3273 = vmatmul.bf16.gmra.mxu0 %v297
    %v3274 = vpop.f32.mrf.mxu0
    %v3275 = vadd.f32 %v3261, %v3274
    %v3276 = vpop.f32.mrf.mxu0
    %v3277 = vadd.f32 %v3263, %v3276
    %3278 = vdwg.mxu0
    %3279 = vmatpush.bf16.msra.mxu0 %v2599
    %3280 = vmatpush.bf16.msra.mxu0 %v2593
    %3281 = vmatpush.bf16.msra.mxu0 %v2587
    %3282 = vmatpush.bf16.msra.mxu0 %v2581
    %3283 = vmatpush.bf16.msra.mxu0 %v2575
    %3284 = vmatpush.bf16.msra.mxu0 %v2569
    %3285 = vmatpush.bf16.msra.mxu0 %v2563
    %3286 = vmatpush.bf16.msra.mxu0 %v2557
    %3287 = vmatmul.bf16.gmra.mxu0 %v298
    %v3288 = vpop.f32.mrf.mxu0
    %v3289 = vadd.f32 %v3275, %v3288
    %v3290 = vpop.f32.mrf.mxu0
    %v3291 = vadd.f32 %v3277, %v3290
    %3292 = vdwg.mxu0
    %3293 = vmatpush.bf16.msra.mxu0 %v2647
    %3294 = vmatpush.bf16.msra.mxu0 %v2641
    %3295 = vmatpush.bf16.msra.mxu0 %v2635
    %3296 = vmatpush.bf16.msra.mxu0 %v2629
    %3297 = vmatpush.bf16.msra.mxu0 %v2623
    %3298 = vmatpush.bf16.msra.mxu0 %v2617
    %3299 = vmatpush.bf16.msra.mxu0 %v2611
    %3300 = vmatpush.bf16.msra.mxu0 %v2605
    %3301 = vmatmul.bf16.gmra.mxu0 %v299
    %v3302 = vpop.f32.mrf.mxu0
    %v3303 = vadd.f32 %v3289, %v3302
    %v3304 = vpop.f32.mrf.mxu0
    %v3305 = vadd.f32 %v3291, %v3304
    %3306 = vdwg.mxu0
    %3307 = vmatpush.bf16.msra.mxu0 %v2695
    %3308 = vmatpush.bf16.msra.mxu0 %v2689
    %3309 = vmatpush.bf16.msra.mxu0 %v2683
    %3310 = vmatpush.bf16.msra.mxu0 %v2677
    %3311 = vmatpush.bf16.msra.mxu0 %v2671
    %3312 = vmatpush.bf16.msra.mxu0 %v2665
    %3313 = vmatpush.bf16.msra.mxu0 %v2659
    %3314 = vmatpush.bf16.msra.mxu0 %v2653
    %3315 = vmatmul.bf16.gmra.mxu0 %v300
    %v3316 = vpop.f32.mrf.mxu0
    %v3317 = vadd.f32 %v3303, %v3316
    %v3318 = vpop.f32.mrf.mxu0
    %v3319 = vadd.f32 %v3305, %v3318
    %3320 = vdwg.mxu0
    %3321 = vmatpush.bf16.msra.mxu0 %v2264
    %3322 = vmatpush.bf16.msra.mxu0 %v2258
    %3323 = vmatpush.bf16.msra.mxu0 %v2252
    %3324 = vmatpush.bf16.msra.mxu0 %v2246
    %3325 = vmatpush.bf16.msra.mxu0 %v2240
    %3326 = vmatpush.bf16.msra.mxu0 %v2234
    %3327 = vmatpush.bf16.msra.mxu0 %v2228
    %3328 = vmatpush.bf16.msra.mxu0 %v2222
    %3329 = vmatmul.bf16.gmra.mxu0 %v291
    %v3330 = vpop.f32.mrf.mxu0
    %v3331 = vadd.f32 0.0, %v3330
    %v3332 = vpop.f32.mrf.mxu0
    %v3333 = vadd.f32 0.0, %v3332
    %3334 = vdwg.mxu0
    %3335 = vmatpush.bf16.msra.mxu0 %v2312
    %3336 = vmatpush.bf16.msra.mxu0 %v2306
    %3337 = vmatpush.bf16.msra.mxu0 %v2300
    %3338 = vmatpush.bf16.msra.mxu0 %v2294
    %3339 = vmatpush.bf16.msra.mxu0 %v2288
    %3340 = vmatpush.bf16.msra.mxu0 %v2282
    %3341 = vmatpush.bf16.msra.mxu0 %v2276
    %3342 = vmatpush.bf16.msra.mxu0 %v2270
    %3343 = vmatmul.bf16.gmra.mxu0 %v292
    %v3344 = vpop.f32.mrf.mxu0
    %v3345 = vadd.f32 %v3331, %v3344
    %v3346 = vpop.f32.mrf.mxu0
    %v3347 = vadd.f32 %v3333, %v3346
    %3348 = vdwg.mxu0
    %3349 = vmatpush.bf16.msra.mxu0 %v2360
    %3350 = vmatpush.bf16.msra.mxu0 %v2354
    %3351 = vmatpush.bf16.msra.mxu0 %v2348
    %3352 = vmatpush.bf16.msra.mxu0 %v2342
    %3353 = vmatpush.bf16.msra.mxu0 %v2336
    %3354 = vmatpush.bf16.msra.mxu0 %v2330
    %3355 = vmatpush.bf16.msra.mxu0 %v2324
    %3356 = vmatpush.bf16.msra.mxu0 %v2318
    %3357 = vmatmul.bf16.gmra.mxu0 %v293
    %v3358 = vpop.f32.mrf.mxu0
    %v3359 = vadd.f32 %v3345, %v3358
    %v3360 = vpop.f32.mrf.mxu0
    %v3361 = vadd.f32 %v3347, %v3360
    %3362 = vdwg.mxu0
    %3363 = vmatpush.bf16.msra.mxu0 %v2408
    %3364 = vmatpush.bf16.msra.mxu0 %v2402
    %3365 = vmatpush.bf16.msra.mxu0 %v2396
    %3366 = vmatpush.bf16.msra.mxu0 %v2390
    %3367 = vmatpush.bf16.msra.mxu0 %v2384
    %3368 = vmatpush.bf16.msra.mxu0 %v2378
    %3369 = vmatpush.bf16.msra.mxu0 %v2372
    %3370 = vmatpush.bf16.msra.mxu0 %v2366
    %3371 = vmatmul.bf16.gmra.mxu0 %v294
    %v3372 = vpop.f32.mrf.mxu0
    %v3373 = vadd.f32 %v3359, %v3372
    %v3374 = vpop.f32.mrf.mxu0
    %v3375 = vadd.f32 %v3361, %v3374
    %3376 = vdwg.mxu0
    %3377 = vmatpush.bf16.msra.mxu0 %v2456
    %3378 = vmatpush.bf16.msra.mxu0 %v2450
    %3379 = vmatpush.bf16.msra.mxu0 %v2444
    %3380 = vmatpush.bf16.msra.mxu0 %v2438
    %3381 = vmatpush.bf16.msra.mxu0 %v2432
    %3382 = vmatpush.bf16.msra.mxu0 %v2426
    %3383 = vmatpush.bf16.msra.mxu0 %v2420
    %3384 = vmatpush.bf16.msra.mxu0 %v2414
    %3385 = vmatmul.bf16.gmra.mxu0 %v295
    %v3386 = vpop.f32.mrf.mxu0
    %v3387 = vadd.f32 %v3373, %v3386
    %v3388 = vpop.f32.mrf.mxu0
    %v3389 = vadd.f32 %v3375, %v3388
    %3390 = vdwg.mxu0
    %3391 = vmatpush.bf16.msra.mxu0 %v2504
    %3392 = vmatpush.bf16.msra.mxu0 %v2498
    %3393 = vmatpush.bf16.msra.mxu0 %v2492
    %3394 = vmatpush.bf16.msra.mxu0 %v2486
    %3395 = vmatpush.bf16.msra.mxu0 %v2480
    %3396 = vmatpush.bf16.msra.mxu0 %v2474
    %3397 = vmatpush.bf16.msra.mxu0 %v2468
    %3398 = vmatpush.bf16.msra.mxu0 %v2462
    %3399 = vmatmul.bf16.gmra.mxu0 %v296
    %v3400 = vpop.f32.mrf.mxu0
    %v3401 = vadd.f32 %v3387, %v3400
    %v3402 = vpop.f32.mrf.mxu0
    %v3403 = vadd.f32 %v3389, %v3402
    %3404 = vdwg.mxu0
    %3405 = vmatpush.bf16.msra.mxu0 %v2552
    %3406 = vmatpush.bf16.msra.mxu0 %v2546
    %3407 = vmatpush.bf16.msra.mxu0 %v2540
    %3408 = vmatpush.bf16.msra.mxu0 %v2534
    %3409 = vmatpush.bf16.msra.mxu0 %v2528
    %3410 = vmatpush.bf16.msra.mxu0 %v2522
    %3411 = vmatpush.bf16.msra.mxu0 %v2516
    %3412 = vmatpush.bf16.msra.mxu0 %v2510
    %3413 = vmatmul.bf16.gmra.mxu0 %v297
    %v3414 = vpop.f32.mrf.mxu0
    %v3415 = vadd.f32 %v3401, %v3414
    %v3416 = vpop.f32.mrf.mxu0
    %v3417 = vadd.f32 %v3403, %v3416
    %3418 = vdwg.mxu0
    %3419 = vmatpush.bf16.msra.mxu0 %v2600
    %3420 = vmatpush.bf16.msra.mxu0 %v2594
    %3421 = vmatpush.bf16.msra.mxu0 %v2588
    %3422 = vmatpush.bf16.msra.mxu0 %v2582
    %3423 = vmatpush.bf16.msra.mxu0 %v2576
    %3424 = vmatpush.bf16.msra.mxu0 %v2570
    %3425 = vmatpush.bf16.msra.mxu0 %v2564
    %3426 = vmatpush.bf16.msra.mxu0 %v2558
    %3427 = vmatmul.bf16.gmra.mxu0 %v298
    %v3428 = vpop.f32.mrf.mxu0
    %v3429 = vadd.f32 %v3415, %v3428
    %v3430 = vpop.f32.mrf.mxu0
    %v3431 = vadd.f32 %v3417, %v3430
    %3432 = vdwg.mxu0
    %3433 = vmatpush.bf16.msra.mxu0 %v2648
    %3434 = vmatpush.bf16.msra.mxu0 %v2642
    %3435 = vmatpush.bf16.msra.mxu0 %v2636
    %3436 = vmatpush.bf16.msra.mxu0 %v2630
    %3437 = vmatpush.bf16.msra.mxu0 %v2624
    %3438 = vmatpush.bf16.msra.mxu0 %v2618
    %3439 = vmatpush.bf16.msra.mxu0 %v2612
    %3440 = vmatpush.bf16.msra.mxu0 %v2606
    %3441 = vmatmul.bf16.gmra.mxu0 %v299
    %v3442 = vpop.f32.mrf.mxu0
    %v3443 = vadd.f32 %v3429, %v3442
    %v3444 = vpop.f32.mrf.mxu0
    %v3445 = vadd.f32 %v3431, %v3444
    %3446 = vdwg.mxu0
    %3447 = vmatpush.bf16.msra.mxu0 %v2696
    %3448 = vmatpush.bf16.msra.mxu0 %v2690
    %3449 = vmatpush.bf16.msra.mxu0 %v2684
    %3450 = vmatpush.bf16.msra.mxu0 %v2678
    %3451 = vmatpush.bf16.msra.mxu0 %v2672
    %3452 = vmatpush.bf16.msra.mxu0 %v2666
    %3453 = vmatpush.bf16.msra.mxu0 %v2660
    %3454 = vmatpush.bf16.msra.mxu0 %v2654
    %3455 = vmatmul.bf16.gmra.mxu0 %v300
    %v3456 = vpop.f32.mrf.mxu0
    %v3457 = vadd.f32 %v3443, %v3456
    %v3458 = vpop.f32.mrf.mxu0
    %v3459 = vadd.f32 %v3445, %v3458
    %3460 = vdwg.mxu0
    %3461 = vmatpush.bf16.msra.mxu0 %v2265
    %3462 = vmatpush.bf16.msra.mxu0 %v2259
    %3463 = vmatpush.bf16.msra.mxu0 %v2253
    %3464 = vmatpush.bf16.msra.mxu0 %v2247
    %3465 = vmatpush.bf16.msra.mxu0 %v2241
    %3466 = vmatpush.bf16.msra.mxu0 %v2235
    %3467 = vmatpush.bf16.msra.mxu0 %v2229
    %3468 = vmatpush.bf16.msra.mxu0 %v2223
    %3469 = vmatmul.bf16.gmra.mxu0 %v291
    %v3470 = vpop.f32.mrf.mxu0
    %v3471 = vadd.f32 0.0, %v3470
    %v3472 = vpop.f32.mrf.mxu0
    %v3473 = vadd.f32 0.0, %v3472
    %3474 = vdwg.mxu0
    %3475 = vmatpush.bf16.msra.mxu0 %v2313
    %3476 = vmatpush.bf16.msra.mxu0 %v2307
    %3477 = vmatpush.bf16.msra.mxu0 %v2301
    %3478 = vmatpush.bf16.msra.mxu0 %v2295
    %3479 = vmatpush.bf16.msra.mxu0 %v2289
    %3480 = vmatpush.bf16.msra.mxu0 %v2283
    %3481 = vmatpush.bf16.msra.mxu0 %v2277
    %3482 = vmatpush.bf16.msra.mxu0 %v2271
    %3483 = vmatmul.bf16.gmra.mxu0 %v292
    %v3484 = vpop.f32.mrf.mxu0
    %v3485 = vadd.f32 %v3471, %v3484
    %v3486 = vpop.f32.mrf.mxu0
    %v3487 = vadd.f32 %v3473, %v3486
    %3488 = vdwg.mxu0
    %3489 = vmatpush.bf16.msra.mxu0 %v2361
    %3490 = vmatpush.bf16.msra.mxu0 %v2355
    %3491 = vmatpush.bf16.msra.mxu0 %v2349
    %3492 = vmatpush.bf16.msra.mxu0 %v2343
    %3493 = vmatpush.bf16.msra.mxu0 %v2337
    %3494 = vmatpush.bf16.msra.mxu0 %v2331
    %3495 = vmatpush.bf16.msra.mxu0 %v2325
    %3496 = vmatpush.bf16.msra.mxu0 %v2319
    %3497 = vmatmul.bf16.gmra.mxu0 %v293
    %v3498 = vpop.f32.mrf.mxu0
    %v3499 = vadd.f32 %v3485, %v3498
    %v3500 = vpop.f32.mrf.mxu0
    %v3501 = vadd.f32 %v3487, %v3500
    %3502 = vdwg.mxu0
    %3503 = vmatpush.bf16.msra.mxu0 %v2409
    %3504 = vmatpush.bf16.msra.mxu0 %v2403
    %3505 = vmatpush.bf16.msra.mxu0 %v2397
    %3506 = vmatpush.bf16.msra.mxu0 %v2391
    %3507 = vmatpush.bf16.msra.mxu0 %v2385
    %3508 = vmatpush.bf16.msra.mxu0 %v2379
    %3509 = vmatpush.bf16.msra.mxu0 %v2373
    %3510 = vmatpush.bf16.msra.mxu0 %v2367
    %3511 = vmatmul.bf16.gmra.mxu0 %v294
    %v3512 = vpop.f32.mrf.mxu0
    %v3513 = vadd.f32 %v3499, %v3512
    %v3514 = vpop.f32.mrf.mxu0
    %v3515 = vadd.f32 %v3501, %v3514
    %3516 = vdwg.mxu0
    %3517 = vmatpush.bf16.msra.mxu0 %v2457
    %3518 = vmatpush.bf16.msra.mxu0 %v2451
    %3519 = vmatpush.bf16.msra.mxu0 %v2445
    %3520 = vmatpush.bf16.msra.mxu0 %v2439
    %3521 = vmatpush.bf16.msra.mxu0 %v2433
    %3522 = vmatpush.bf16.msra.mxu0 %v2427
    %3523 = vmatpush.bf16.msra.mxu0 %v2421
    %3524 = vmatpush.bf16.msra.mxu0 %v2415
    %3525 = vmatmul.bf16.gmra.mxu0 %v295
    %v3526 = vpop.f32.mrf.mxu0
    %v3527 = vadd.f32 %v3513, %v3526
    %v3528 = vpop.f32.mrf.mxu0
    %v3529 = vadd.f32 %v3515, %v3528
    %3530 = vdwg.mxu0
    %3531 = vmatpush.bf16.msra.mxu0 %v2505
    %3532 = vmatpush.bf16.msra.mxu0 %v2499
    %3533 = vmatpush.bf16.msra.mxu0 %v2493
    %3534 = vmatpush.bf16.msra.mxu0 %v2487
    %3535 = vmatpush.bf16.msra.mxu0 %v2481
    %3536 = vmatpush.bf16.msra.mxu0 %v2475
    %3537 = vmatpush.bf16.msra.mxu0 %v2469
    %3538 = vmatpush.bf16.msra.mxu0 %v2463
    %3539 = vmatmul.bf16.gmra.mxu0 %v296
    %v3540 = vpop.f32.mrf.mxu0
    %v3541 = vadd.f32 %v3527, %v3540
    %v3542 = vpop.f32.mrf.mxu0
    %v3543 = vadd.f32 %v3529, %v3542
    %3544 = vdwg.mxu0
    %3545 = vmatpush.bf16.msra.mxu0 %v2553
    %3546 = vmatpush.bf16.msra.mxu0 %v2547
    %3547 = vmatpush.bf16.msra.mxu0 %v2541
    %3548 = vmatpush.bf16.msra.mxu0 %v2535
    %3549 = vmatpush.bf16.msra.mxu0 %v2529
    %3550 = vmatpush.bf16.msra.mxu0 %v2523
    %3551 = vmatpush.bf16.msra.mxu0 %v2517
    %3552 = vmatpush.bf16.msra.mxu0 %v2511
    %3553 = vmatmul.bf16.gmra.mxu0 %v297
    %v3554 = vpop.f32.mrf.mxu0
    %v3555 = vadd.f32 %v3541, %v3554
    %v3556 = vpop.f32.mrf.mxu0
    %v3557 = vadd.f32 %v3543, %v3556
    %3558 = vdwg.mxu0
    %3559 = vmatpush.bf16.msra.mxu0 %v2601
    %3560 = vmatpush.bf16.msra.mxu0 %v2595
    %3561 = vmatpush.bf16.msra.mxu0 %v2589
    %3562 = vmatpush.bf16.msra.mxu0 %v2583
    %3563 = vmatpush.bf16.msra.mxu0 %v2577
    %3564 = vmatpush.bf16.msra.mxu0 %v2571
    %3565 = vmatpush.bf16.msra.mxu0 %v2565
    %3566 = vmatpush.bf16.msra.mxu0 %v2559
    %3567 = vmatmul.bf16.gmra.mxu0 %v298
    %v3568 = vpop.f32.mrf.mxu0
    %v3569 = vadd.f32 %v3555, %v3568
    %v3570 = vpop.f32.mrf.mxu0
    %v3571 = vadd.f32 %v3557, %v3570
    %3572 = vdwg.mxu0
    %3573 = vmatpush.bf16.msra.mxu0 %v2649
    %3574 = vmatpush.bf16.msra.mxu0 %v2643
    %3575 = vmatpush.bf16.msra.mxu0 %v2637
    %3576 = vmatpush.bf16.msra.mxu0 %v2631
    %3577 = vmatpush.bf16.msra.mxu0 %v2625
    %3578 = vmatpush.bf16.msra.mxu0 %v2619
    %3579 = vmatpush.bf16.msra.mxu0 %v2613
    %3580 = vmatpush.bf16.msra.mxu0 %v2607
    %3581 = vmatmul.bf16.gmra.mxu0 %v299
    %v3582 = vpop.f32.mrf.mxu0
    %v3583 = vadd.f32 %v3569, %v3582
    %v3584 = vpop.f32.mrf.mxu0
    %v3585 = vadd.f32 %v3571, %v3584
    %3586 = vdwg.mxu0
    %3587 = vmatpush.bf16.msra.mxu0 %v2697
    %3588 = vmatpush.bf16.msra.mxu0 %v2691
    %3589 = vmatpush.bf16.msra.mxu0 %v2685
    %3590 = vmatpush.bf16.msra.mxu0 %v2679
    %3591 = vmatpush.bf16.msra.mxu0 %v2673
    %3592 = vmatpush.bf16.msra.mxu0 %v2667
    %3593 = vmatpush.bf16.msra.mxu0 %v2661
    %3594 = vmatpush.bf16.msra.mxu0 %v2655
    %3595 = vmatmul.bf16.gmra.mxu0 %v300
    %v3596 = vpop.f32.mrf.mxu0
    %v3597 = vadd.f32 %v3583, %v3596
    %v3598 = vpop.f32.mrf.mxu0
    %v3599 = vadd.f32 %v3585, %v3598
    %3600 = vdwg.mxu0
    %3601 = vmatpush.bf16.msra.mxu0 %v2266
    %3602 = vmatpush.bf16.msra.mxu0 %v2260
    %3603 = vmatpush.bf16.msra.mxu0 %v2254
    %3604 = vmatpush.bf16.msra.mxu0 %v2248
    %3605 = vmatpush.bf16.msra.mxu0 %v2242
    %3606 = vmatpush.bf16.msra.mxu0 %v2236
    %3607 = vmatpush.bf16.msra.mxu0 %v2230
    %3608 = vmatpush.bf16.msra.mxu0 %v2224
    %3609 = vmatmul.bf16.gmra.mxu0 %v291
    %v3610 = vpop.f32.mrf.mxu0
    %v3611 = vadd.f32 0.0, %v3610
    %v3612 = vpop.f32.mrf.mxu0
    %v3613 = vadd.f32 0.0, %v3612
    %3614 = vdwg.mxu0
    %3615 = vmatpush.bf16.msra.mxu0 %v2314
    %3616 = vmatpush.bf16.msra.mxu0 %v2308
    %3617 = vmatpush.bf16.msra.mxu0 %v2302
    %3618 = vmatpush.bf16.msra.mxu0 %v2296
    %3619 = vmatpush.bf16.msra.mxu0 %v2290
    %3620 = vmatpush.bf16.msra.mxu0 %v2284
    %3621 = vmatpush.bf16.msra.mxu0 %v2278
    %3622 = vmatpush.bf16.msra.mxu0 %v2272
    %3623 = vmatmul.bf16.gmra.mxu0 %v292
    %v3624 = vpop.f32.mrf.mxu0
    %v3625 = vadd.f32 %v3611, %v3624
    %v3626 = vpop.f32.mrf.mxu0
    %v3627 = vadd.f32 %v3613, %v3626
    %3628 = vdwg.mxu0
    %3629 = vmatpush.bf16.msra.mxu0 %v2362
    %3630 = vmatpush.bf16.msra.mxu0 %v2356
    %3631 = vmatpush.bf16.msra.mxu0 %v2350
    %3632 = vmatpush.bf16.msra.mxu0 %v2344
    %3633 = vmatpush.bf16.msra.mxu0 %v2338
    %3634 = vmatpush.bf16.msra.mxu0 %v2332
    %3635 = vmatpush.bf16.msra.mxu0 %v2326
    %3636 = vmatpush.bf16.msra.mxu0 %v2320
    %3637 = vmatmul.bf16.gmra.mxu0 %v293
    %v3638 = vpop.f32.mrf.mxu0
    %v3639 = vadd.f32 %v3625, %v3638
    %v3640 = vpop.f32.mrf.mxu0
    %v3641 = vadd.f32 %v3627, %v3640
    %3642 = vdwg.mxu0
    %3643 = vmatpush.bf16.msra.mxu0 %v2410
    %3644 = vmatpush.bf16.msra.mxu0 %v2404
    %3645 = vmatpush.bf16.msra.mxu0 %v2398
    %3646 = vmatpush.bf16.msra.mxu0 %v2392
    %3647 = vmatpush.bf16.msra.mxu0 %v2386
    %3648 = vmatpush.bf16.msra.mxu0 %v2380
    %3649 = vmatpush.bf16.msra.mxu0 %v2374
    %3650 = vmatpush.bf16.msra.mxu0 %v2368
    %3651 = vmatmul.bf16.gmra.mxu0 %v294
    %v3652 = vpop.f32.mrf.mxu0
    %v3653 = vadd.f32 %v3639, %v3652
    %v3654 = vpop.f32.mrf.mxu0
    %v3655 = vadd.f32 %v3641, %v3654
    %3656 = vdwg.mxu0
    %3657 = vmatpush.bf16.msra.mxu0 %v2458
    %3658 = vmatpush.bf16.msra.mxu0 %v2452
    %3659 = vmatpush.bf16.msra.mxu0 %v2446
    %3660 = vmatpush.bf16.msra.mxu0 %v2440
    %3661 = vmatpush.bf16.msra.mxu0 %v2434
    %3662 = vmatpush.bf16.msra.mxu0 %v2428
    %3663 = vmatpush.bf16.msra.mxu0 %v2422
    %3664 = vmatpush.bf16.msra.mxu0 %v2416
    %3665 = vmatmul.bf16.gmra.mxu0 %v295
    %v3666 = vpop.f32.mrf.mxu0
    %v3667 = vadd.f32 %v3653, %v3666
    %v3668 = vpop.f32.mrf.mxu0
    %v3669 = vadd.f32 %v3655, %v3668
    %3670 = vdwg.mxu0
    %3671 = vmatpush.bf16.msra.mxu0 %v2506
    %3672 = vmatpush.bf16.msra.mxu0 %v2500
    %3673 = vmatpush.bf16.msra.mxu0 %v2494
    %3674 = vmatpush.bf16.msra.mxu0 %v2488
    %3675 = vmatpush.bf16.msra.mxu0 %v2482
    %3676 = vmatpush.bf16.msra.mxu0 %v2476
    %3677 = vmatpush.bf16.msra.mxu0 %v2470
    %3678 = vmatpush.bf16.msra.mxu0 %v2464
    %3679 = vmatmul.bf16.gmra.mxu0 %v296
    %v3680 = vpop.f32.mrf.mxu0
    %v3681 = vadd.f32 %v3667, %v3680
    %v3682 = vpop.f32.mrf.mxu0
    %v3683 = vadd.f32 %v3669, %v3682
    %3684 = vdwg.mxu0
    %3685 = vmatpush.bf16.msra.mxu0 %v2554
    %3686 = vmatpush.bf16.msra.mxu0 %v2548
    %3687 = vmatpush.bf16.msra.mxu0 %v2542
    %3688 = vmatpush.bf16.msra.mxu0 %v2536
    %3689 = vmatpush.bf16.msra.mxu0 %v2530
    %3690 = vmatpush.bf16.msra.mxu0 %v2524
    %3691 = vmatpush.bf16.msra.mxu0 %v2518
    %3692 = vmatpush.bf16.msra.mxu0 %v2512
    %3693 = vmatmul.bf16.gmra.mxu0 %v297
    %v3694 = vpop.f32.mrf.mxu0
    %v3695 = vadd.f32 %v3681, %v3694
    %v3696 = vpop.f32.mrf.mxu0
    %v3697 = vadd.f32 %v3683, %v3696
    %3698 = vdwg.mxu0
    %3699 = vmatpush.bf16.msra.mxu0 %v2602
    %3700 = vmatpush.bf16.msra.mxu0 %v2596
    %3701 = vmatpush.bf16.msra.mxu0 %v2590
    %3702 = vmatpush.bf16.msra.mxu0 %v2584
    %3703 = vmatpush.bf16.msra.mxu0 %v2578
    %3704 = vmatpush.bf16.msra.mxu0 %v2572
    %3705 = vmatpush.bf16.msra.mxu0 %v2566
    %3706 = vmatpush.bf16.msra.mxu0 %v2560
    %3707 = vmatmul.bf16.gmra.mxu0 %v298
    %v3708 = vpop.f32.mrf.mxu0
    %v3709 = vadd.f32 %v3695, %v3708
    %v3710 = vpop.f32.mrf.mxu0
    %v3711 = vadd.f32 %v3697, %v3710
    %3712 = vdwg.mxu0
    %3713 = vmatpush.bf16.msra.mxu0 %v2650
    %3714 = vmatpush.bf16.msra.mxu0 %v2644
    %3715 = vmatpush.bf16.msra.mxu0 %v2638
    %3716 = vmatpush.bf16.msra.mxu0 %v2632
    %3717 = vmatpush.bf16.msra.mxu0 %v2626
    %3718 = vmatpush.bf16.msra.mxu0 %v2620
    %3719 = vmatpush.bf16.msra.mxu0 %v2614
    %3720 = vmatpush.bf16.msra.mxu0 %v2608
    %3721 = vmatmul.bf16.gmra.mxu0 %v299
    %v3722 = vpop.f32.mrf.mxu0
    %v3723 = vadd.f32 %v3709, %v3722
    %v3724 = vpop.f32.mrf.mxu0
    %v3725 = vadd.f32 %v3711, %v3724
    %3726 = vdwg.mxu0
    %3727 = vmatpush.bf16.msra.mxu0 %v2698
    %3728 = vmatpush.bf16.msra.mxu0 %v2692
    %3729 = vmatpush.bf16.msra.mxu0 %v2686
    %3730 = vmatpush.bf16.msra.mxu0 %v2680
    %3731 = vmatpush.bf16.msra.mxu0 %v2674
    %3732 = vmatpush.bf16.msra.mxu0 %v2668
    %3733 = vmatpush.bf16.msra.mxu0 %v2662
    %3734 = vmatpush.bf16.msra.mxu0 %v2656
    %3735 = vmatmul.bf16.gmra.mxu0 %v300
    %v3736 = vpop.f32.mrf.mxu0
    %v3737 = vadd.f32 %v3723, %v3736
    %v3738 = vpop.f32.mrf.mxu0
    %v3739 = vadd.f32 %v3725, %v3738
    %3740 = vdwg.mxu0
    %3741 = vmatpush.bf16.msra.mxu0 %v2267
    %3742 = vmatpush.bf16.msra.mxu0 %v2261
    %3743 = vmatpush.bf16.msra.mxu0 %v2255
    %3744 = vmatpush.bf16.msra.mxu0 %v2249
    %3745 = vmatpush.bf16.msra.mxu0 %v2243
    %3746 = vmatpush.bf16.msra.mxu0 %v2237
    %3747 = vmatpush.bf16.msra.mxu0 %v2231
    %3748 = vmatpush.bf16.msra.mxu0 %v2225
    %3749 = vmatmul.bf16.gmra.mxu0 %v291
    %v3750 = vpop.f32.mrf.mxu0
    %v3751 = vadd.f32 0.0, %v3750
    %v3752 = vpop.f32.mrf.mxu0
    %v3753 = vadd.f32 0.0, %v3752
    %3754 = vdwg.mxu0
    %3755 = vmatpush.bf16.msra.mxu0 %v2315
    %3756 = vmatpush.bf16.msra.mxu0 %v2309
    %3757 = vmatpush.bf16.msra.mxu0 %v2303
    %3758 = vmatpush.bf16.msra.mxu0 %v2297
    %3759 = vmatpush.bf16.msra.mxu0 %v2291
    %3760 = vmatpush.bf16.msra.mxu0 %v2285
    %3761 = vmatpush.bf16.msra.mxu0 %v2279
    %3762 = vmatpush.bf16.msra.mxu0 %v2273
    %3763 = vmatmul.bf16.gmra.mxu0 %v292
    %v3764 = vpop.f32.mrf.mxu0
    %v3765 = vadd.f32 %v3751, %v3764
    %v3766 = vpop.f32.mrf.mxu0
    %v3767 = vadd.f32 %v3753, %v3766
    %3768 = vdwg.mxu0
    %3769 = vmatpush.bf16.msra.mxu0 %v2363
    %3770 = vmatpush.bf16.msra.mxu0 %v2357
    %3771 = vmatpush.bf16.msra.mxu0 %v2351
    %3772 = vmatpush.bf16.msra.mxu0 %v2345
    %3773 = vmatpush.bf16.msra.mxu0 %v2339
    %3774 = vmatpush.bf16.msra.mxu0 %v2333
    %3775 = vmatpush.bf16.msra.mxu0 %v2327
    %3776 = vmatpush.bf16.msra.mxu0 %v2321
    %3777 = vmatmul.bf16.gmra.mxu0 %v293
    %v3778 = vpop.f32.mrf.mxu0
    %v3779 = vadd.f32 %v3765, %v3778
    %v3780 = vpop.f32.mrf.mxu0
    %v3781 = vadd.f32 %v3767, %v3780
    %3782 = vdwg.mxu0
    %3783 = vmatpush.bf16.msra.mxu0 %v2411
    %3784 = vmatpush.bf16.msra.mxu0 %v2405
    %3785 = vmatpush.bf16.msra.mxu0 %v2399
    %3786 = vmatpush.bf16.msra.mxu0 %v2393
    %3787 = vmatpush.bf16.msra.mxu0 %v2387
    %3788 = vmatpush.bf16.msra.mxu0 %v2381
    %3789 = vmatpush.bf16.msra.mxu0 %v2375
    %3790 = vmatpush.bf16.msra.mxu0 %v2369
    %3791 = vmatmul.bf16.gmra.mxu0 %v294
    %v3792 = vpop.f32.mrf.mxu0
    %v3793 = vadd.f32 %v3779, %v3792
    %v3794 = vpop.f32.mrf.mxu0
    %v3795 = vadd.f32 %v3781, %v3794
    %3796 = vdwg.mxu0
    %3797 = vmatpush.bf16.msra.mxu0 %v2459
    %3798 = vmatpush.bf16.msra.mxu0 %v2453
    %3799 = vmatpush.bf16.msra.mxu0 %v2447
    %3800 = vmatpush.bf16.msra.mxu0 %v2441
    %3801 = vmatpush.bf16.msra.mxu0 %v2435
    %3802 = vmatpush.bf16.msra.mxu0 %v2429
    %3803 = vmatpush.bf16.msra.mxu0 %v2423
    %3804 = vmatpush.bf16.msra.mxu0 %v2417
    %3805 = vmatmul.bf16.gmra.mxu0 %v295
    %v3806 = vpop.f32.mrf.mxu0
    %v3807 = vadd.f32 %v3793, %v3806
    %v3808 = vpop.f32.mrf.mxu0
    %v3809 = vadd.f32 %v3795, %v3808
    %3810 = vdwg.mxu0
    %3811 = vmatpush.bf16.msra.mxu0 %v2507
    %3812 = vmatpush.bf16.msra.mxu0 %v2501
    %3813 = vmatpush.bf16.msra.mxu0 %v2495
    %3814 = vmatpush.bf16.msra.mxu0 %v2489
    %3815 = vmatpush.bf16.msra.mxu0 %v2483
    %3816 = vmatpush.bf16.msra.mxu0 %v2477
    %3817 = vmatpush.bf16.msra.mxu0 %v2471
    %3818 = vmatpush.bf16.msra.mxu0 %v2465
    %3819 = vmatmul.bf16.gmra.mxu0 %v296
    %v3820 = vpop.f32.mrf.mxu0
    %v3821 = vadd.f32 %v3807, %v3820
    %v3822 = vpop.f32.mrf.mxu0
    %v3823 = vadd.f32 %v3809, %v3822
    %3824 = vdwg.mxu0
    %3825 = vmatpush.bf16.msra.mxu0 %v2555
    %3826 = vmatpush.bf16.msra.mxu0 %v2549
    %3827 = vmatpush.bf16.msra.mxu0 %v2543
    %3828 = vmatpush.bf16.msra.mxu0 %v2537
    %3829 = vmatpush.bf16.msra.mxu0 %v2531
    %3830 = vmatpush.bf16.msra.mxu0 %v2525
    %3831 = vmatpush.bf16.msra.mxu0 %v2519
    %3832 = vmatpush.bf16.msra.mxu0 %v2513
    %3833 = vmatmul.bf16.gmra.mxu0 %v297
    %v3834 = vpop.f32.mrf.mxu0
    %v3835 = vadd.f32 %v3821, %v3834
    %v3836 = vpop.f32.mrf.mxu0
    %v3837 = vadd.f32 %v3823, %v3836
    %3838 = vdwg.mxu0
    %3839 = vmatpush.bf16.msra.mxu0 %v2603
    %3840 = vmatpush.bf16.msra.mxu0 %v2597
    %3841 = vmatpush.bf16.msra.mxu0 %v2591
    %3842 = vmatpush.bf16.msra.mxu0 %v2585
    %3843 = vmatpush.bf16.msra.mxu0 %v2579
    %3844 = vmatpush.bf16.msra.mxu0 %v2573
    %3845 = vmatpush.bf16.msra.mxu0 %v2567
    %3846 = vmatpush.bf16.msra.mxu0 %v2561
    %3847 = vmatmul.bf16.gmra.mxu0 %v298
    %v3848 = vpop.f32.mrf.mxu0
    %v3849 = vadd.f32 %v3835, %v3848
    %v3850 = vpop.f32.mrf.mxu0
    %v3851 = vadd.f32 %v3837, %v3850
    %3852 = vdwg.mxu0
    %3853 = vmatpush.bf16.msra.mxu0 %v2651
    %3854 = vmatpush.bf16.msra.mxu0 %v2645
    %3855 = vmatpush.bf16.msra.mxu0 %v2639
    %3856 = vmatpush.bf16.msra.mxu0 %v2633
    %3857 = vmatpush.bf16.msra.mxu0 %v2627
    %3858 = vmatpush.bf16.msra.mxu0 %v2621
    %3859 = vmatpush.bf16.msra.mxu0 %v2615
    %3860 = vmatpush.bf16.msra.mxu0 %v2609
    %3861 = vmatmul.bf16.gmra.mxu0 %v299
    %v3862 = vpop.f32.mrf.mxu0
    %v3863 = vadd.f32 %v3849, %v3862
    %v3864 = vpop.f32.mrf.mxu0
    %v3865 = vadd.f32 %v3851, %v3864
    %3866 = vdwg.mxu0
    %3867 = vmatpush.bf16.msra.mxu0 %v2699
    %3868 = vmatpush.bf16.msra.mxu0 %v2693
    %3869 = vmatpush.bf16.msra.mxu0 %v2687
    %3870 = vmatpush.bf16.msra.mxu0 %v2681
    %3871 = vmatpush.bf16.msra.mxu0 %v2675
    %3872 = vmatpush.bf16.msra.mxu0 %v2669
    %3873 = vmatpush.bf16.msra.mxu0 %v2663
    %3874 = vmatpush.bf16.msra.mxu0 %v2657
    %3875 = vmatmul.bf16.gmra.mxu0 %v300
    %v3876 = vpop.f32.mrf.mxu0
    %v3877 = vadd.f32 %v3863, %v3876
    %v3878 = vpop.f32.mrf.mxu0
    %v3879 = vadd.f32 %v3865, %v3878
    %3880 = vdwg.mxu0
    %3881 = vmatpush.bf16.msra.mxu0 %v2268
    %3882 = vmatpush.bf16.msra.mxu0 %v2262
    %3883 = vmatpush.bf16.msra.mxu0 %v2256
    %3884 = vmatpush.bf16.msra.mxu0 %v2250
    %3885 = vmatpush.bf16.msra.mxu0 %v2244
    %3886 = vmatpush.bf16.msra.mxu0 %v2238
    %3887 = vmatpush.bf16.msra.mxu0 %v2232
    %3888 = vmatpush.bf16.msra.mxu0 %v2226
    %3889 = vmatmul.bf16.gmra.mxu0 %v291
    %v3890 = vpop.f32.mrf.mxu0
    %v3891 = vadd.f32 0.0, %v3890
    %v3892 = vpop.f32.mrf.mxu0
    %v3893 = vadd.f32 0.0, %v3892
    %3894 = vdwg.mxu0
    %3895 = vmatpush.bf16.msra.mxu0 %v2316
    %3896 = vmatpush.bf16.msra.mxu0 %v2310
    %3897 = vmatpush.bf16.msra.mxu0 %v2304
    %3898 = vmatpush.bf16.msra.mxu0 %v2298
    %3899 = vmatpush.bf16.msra.mxu0 %v2292
    %3900 = vmatpush.bf16.msra.mxu0 %v2286
    %3901 = vmatpush.bf16.msra.mxu0 %v2280
    %3902 = vmatpush.bf16.msra.mxu0 %v2274
    %3903 = vmatmul.bf16.gmra.mxu0 %v292
    %v3904 = vpop.f32.mrf.mxu0
    %v3905 = vadd.f32 %v3891, %v3904
    %v3906 = vpop.f32.mrf.mxu0
    %v3907 = vadd.f32 %v3893, %v3906
    %3908 = vdwg.mxu0
    %3909 = vmatpush.bf16.msra.mxu0 %v2364
    %3910 = vmatpush.bf16.msra.mxu0 %v2358
    %3911 = vmatpush.bf16.msra.mxu0 %v2352
    %3912 = vmatpush.bf16.msra.mxu0 %v2346
    %3913 = vmatpush.bf16.msra.mxu0 %v2340
    %3914 = vmatpush.bf16.msra.mxu0 %v2334
    %3915 = vmatpush.bf16.msra.mxu0 %v2328
    %3916 = vmatpush.bf16.msra.mxu0 %v2322
    %3917 = vmatmul.bf16.gmra.mxu0 %v293
    %v3918 = vpop.f32.mrf.mxu0
    %v3919 = vadd.f32 %v3905, %v3918
    %v3920 = vpop.f32.mrf.mxu0
    %v3921 = vadd.f32 %v3907, %v3920
    %3922 = vdwg.mxu0
    %3923 = vmatpush.bf16.msra.mxu0 %v2412
    %3924 = vmatpush.bf16.msra.mxu0 %v2406
    %3925 = vmatpush.bf16.msra.mxu0 %v2400
    %3926 = vmatpush.bf16.msra.mxu0 %v2394
    %3927 = vmatpush.bf16.msra.mxu0 %v2388
    %3928 = vmatpush.bf16.msra.mxu0 %v2382
    %3929 = vmatpush.bf16.msra.mxu0 %v2376
    %3930 = vmatpush.bf16.msra.mxu0 %v2370
    %3931 = vmatmul.bf16.gmra.mxu0 %v294
    %v3932 = vpop.f32.mrf.mxu0
    %v3933 = vadd.f32 %v3919, %v3932
    %v3934 = vpop.f32.mrf.mxu0
    %v3935 = vadd.f32 %v3921, %v3934
    %3936 = vdwg.mxu0
    %3937 = vmatpush.bf16.msra.mxu0 %v2460
    %3938 = vmatpush.bf16.msra.mxu0 %v2454
    %3939 = vmatpush.bf16.msra.mxu0 %v2448
    %3940 = vmatpush.bf16.msra.mxu0 %v2442
    %3941 = vmatpush.bf16.msra.mxu0 %v2436
    %3942 = vmatpush.bf16.msra.mxu0 %v2430
    %3943 = vmatpush.bf16.msra.mxu0 %v2424
    %3944 = vmatpush.bf16.msra.mxu0 %v2418
    %3945 = vmatmul.bf16.gmra.mxu0 %v295
    %v3946 = vpop.f32.mrf.mxu0
    %v3947 = vadd.f32 %v3933, %v3946
    %v3948 = vpop.f32.mrf.mxu0
    %v3949 = vadd.f32 %v3935, %v3948
    %3950 = vdwg.mxu0
    %3951 = vmatpush.bf16.msra.mxu0 %v2508
    %3952 = vmatpush.bf16.msra.mxu0 %v2502
    %3953 = vmatpush.bf16.msra.mxu0 %v2496
    %3954 = vmatpush.bf16.msra.mxu0 %v2490
    %3955 = vmatpush.bf16.msra.mxu0 %v2484
    %3956 = vmatpush.bf16.msra.mxu0 %v2478
    %3957 = vmatpush.bf16.msra.mxu0 %v2472
    %3958 = vmatpush.bf16.msra.mxu0 %v2466
    %3959 = vmatmul.bf16.gmra.mxu0 %v296
    %v3960 = vpop.f32.mrf.mxu0
    %v3961 = vadd.f32 %v3947, %v3960
    %v3962 = vpop.f32.mrf.mxu0
    %v3963 = vadd.f32 %v3949, %v3962
    %3964 = vdwg.mxu0
    %3965 = vmatpush.bf16.msra.mxu0 %v2556
    %3966 = vmatpush.bf16.msra.mxu0 %v2550
    %3967 = vmatpush.bf16.msra.mxu0 %v2544
    %3968 = vmatpush.bf16.msra.mxu0 %v2538
    %3969 = vmatpush.bf16.msra.mxu0 %v2532
    %3970 = vmatpush.bf16.msra.mxu0 %v2526
    %3971 = vmatpush.bf16.msra.mxu0 %v2520
    %3972 = vmatpush.bf16.msra.mxu0 %v2514
    %3973 = vmatmul.bf16.gmra.mxu0 %v297
    %v3974 = vpop.f32.mrf.mxu0
    %v3975 = vadd.f32 %v3961, %v3974
    %v3976 = vpop.f32.mrf.mxu0
    %v3977 = vadd.f32 %v3963, %v3976
    %3978 = vdwg.mxu0
    %3979 = vmatpush.bf16.msra.mxu0 %v2604
    %3980 = vmatpush.bf16.msra.mxu0 %v2598
    %3981 = vmatpush.bf16.msra.mxu0 %v2592
    %3982 = vmatpush.bf16.msra.mxu0 %v2586
    %3983 = vmatpush.bf16.msra.mxu0 %v2580
    %3984 = vmatpush.bf16.msra.mxu0 %v2574
    %3985 = vmatpush.bf16.msra.mxu0 %v2568
    %3986 = vmatpush.bf16.msra.mxu0 %v2562
    %3987 = vmatmul.bf16.gmra.mxu0 %v298
    %v3988 = vpop.f32.mrf.mxu0
    %v3989 = vadd.f32 %v3975, %v3988
    %v3990 = vpop.f32.mrf.mxu0
    %v3991 = vadd.f32 %v3977, %v3990
    %3992 = vdwg.mxu0
    %3993 = vmatpush.bf16.msra.mxu0 %v2652
    %3994 = vmatpush.bf16.msra.mxu0 %v2646
    %3995 = vmatpush.bf16.msra.mxu0 %v2640
    %3996 = vmatpush.bf16.msra.mxu0 %v2634
    %3997 = vmatpush.bf16.msra.mxu0 %v2628
    %3998 = vmatpush.bf16.msra.mxu0 %v2622
    %3999 = vmatpush.bf16.msra.mxu0 %v2616
    %4000 = vmatpush.bf16.msra.mxu0 %v2610
    %4001 = vmatmul.bf16.gmra.mxu0 %v299
    %v4002 = vpop.f32.mrf.mxu0
    %v4003 = vadd.f32 %v3989, %v4002
    %v4004 = vpop.f32.mrf.mxu0
    %v4005 = vadd.f32 %v3991, %v4004
    %4006 = vdwg.mxu0
    %4007 = vmatpush.bf16.msra.mxu0 %v2700
    %4008 = vmatpush.bf16.msra.mxu0 %v2694
    %4009 = vmatpush.bf16.msra.mxu0 %v2688
    %4010 = vmatpush.bf16.msra.mxu0 %v2682
    %4011 = vmatpush.bf16.msra.mxu0 %v2676
    %4012 = vmatpush.bf16.msra.mxu0 %v2670
    %4013 = vmatpush.bf16.msra.mxu0 %v2664
    %4014 = vmatpush.bf16.msra.mxu0 %v2658
    %4015 = vmatmul.bf16.gmra.mxu0 %v300
    %v4016 = vpop.f32.mrf.mxu0
    %v4017 = vadd.f32 %v4003, %v4016
    %v4018 = vpop.f32.mrf.mxu0
    %v4019 = vadd.f32 %v4005, %v4018
    %4020 = vdwg.mxu0
    %v4021 = vld [vmem:[#allocation4] sm:$0x3f]
    %v4023 = vperm.slane %v4021, 0
    %v4024 = vperm.slane %v4021, 1
    %v4025 = vperm.slane %v4021, 2
    %v4026 = vperm.slane %v4021, 3
    %v4027 = vperm.slane %v4021, 4
    %v4028 = vperm.slane %v4021, 5
    %v4035 = vmul.f32 %v3317, %v4023
    %v4036 = vmul.f32 %v3457, %v4024
    %v4037 = vmul.f32 %v3597, %v4025
    %v4038 = vmul.f32 %v3737, %v4026
    %v4039 = vmul.f32 %v3877, %v4027
    %v4040 = vmul.f32 %v4017, %v4028
    %v4041 = vmul.f32 %v3319, %v4023
    %v4042 = vmul.f32 %v3459, %v4024
    %v4043 = vmul.f32 %v3599, %v4025
    %v4044 = vmul.f32 %v3739, %v4026
    %v4045 = vmul.f32 %v3879, %v4027
    %v4046 = vmul.f32 %v4019, %v4028
    %v4047 = vld [vmem:[#allocation6] sm:$0x3f]
    %v4049 = vperm.slane %v4047, 0
    %v4050 = vperm.slane %v4047, 1
    %v4051 = vperm.slane %v4047, 2
    %v4052 = vperm.slane %v4047, 3
    %v4053 = vperm.slane %v4047, 4
    %v4054 = vperm.slane %v4047, 5
    %v4061 = vadd.f32 %v4035, %v4049
    %v4062 = vadd.f32 %v4036, %v4050
    %v4063 = vadd.f32 %v4037, %v4051
    %v4064 = vadd.f32 %v4038, %v4052
    %v4065 = vadd.f32 %v4039, %v4053
    %v4066 = vadd.f32 %v4040, %v4054
    %v4067 = vadd.f32 %v4041, %v4049
    %v4068 = vadd.f32 %v4042, %v4050
    %v4069 = vadd.f32 %v4043, %v4051
    %v4070 = vadd.f32 %v4044, %v4052
    %v4071 = vadd.f32 %v4045, %v4053
    %v4072 = vadd.f32 %v4046, %v4054
    %v4073 = vmax.f32 %v4061, 0.0
    %v4074 = vmax.f32 %v4062, 0.0
    %v4075 = vmax.f32 %v4063, 0.0
    %v4076 = vmax.f32 %v4064, 0.0
    %v4077 = vmax.f32 %v4065, 0.0
    %v4078 = vmax.f32 %v4066, 0.0
    %v4079 = vmax.f32 %v4067, 0.0
    %v4080 = vmax.f32 %v4068, 0.0
    %v4081 = vmax.f32 %v4069, 0.0
    %v4082 = vmax.f32 %v4070, 0.0
    %v4083 = vmax.f32 %v4071, 0.0
    %v4084 = vmax.f32 %v4072, 0.0
    %v4085 = vpack.c.bf16 %v4079, %v4073
    %v4086 = vpack.c.bf16 %v4080, %v4074
    %v4087 = vpack.c.bf16 %v4081, %v4075
    %v4088 = vpack.c.bf16 %v4082, %v4076
    %v4089 = vpack.c.bf16 %v4083, %v4077
    %v4090 = vpack.c.bf16 %v4084, %v4078
    %v4091 = vld [vmem:[#allocation7] sm:$0xff]
    %v4092 = vld [vmem:[#allocation7 + $0x8] sm:$0xf]
    %v4093 = vld [vmem:[#allocation7 + $0xc] sm:$0xff]
    %v4094 = vld [vmem:[#allocation7 + $0x14] sm:$0xf]
    %v4095 = vld [vmem:[#allocation7 + $0x18] sm:$0xff]
    %v4096 = vld [vmem:[#allocation7 + $0x20] sm:$0xf]
    %v4097 = vld [vmem:[#allocation7 + $0x24] sm:$0xff]
    %v4098 = vld [vmem:[#allocation7 + $0x2c] sm:$0xf]
    %v4099 = vld [vmem:[#allocation7 + $0x30] sm:$0xff]
    %v4100 = vld [vmem:[#allocation7 + $0x38] sm:$0xf]
    %v4101 = vld [vmem:[#allocation7 + $0x3c] sm:$0xff]
    %v4102 = vld [vmem:[#allocation7 + $0x44] sm:$0xf]
    %v4103 = vld [vmem:[#allocation7 + $0x48] sm:$0xff]
    %v4104 = vld [vmem:[#allocation7 + $0x50] sm:$0xf]
    %v4105 = vld [vmem:[#allocation7 + $0x54] sm:$0xff]
    %v4106 = vld [vmem:[#allocation7 + $0x5c] sm:$0xf]
    %v4107 = vld [vmem:[#allocation7 + $0x60] sm:$0xff]
    %v4108 = vld [vmem:[#allocation7 + $0x68] sm:$0xf]
    %v4109 = vld [vmem:[#allocation7 + $0x6c] sm:$0xff]
    %v4110 = vld [vmem:[#allocation7 + $0x74] sm:$0xf]
    %v4111 = vld [vmem:[#allocation7 + $0x78] sm:$0xff]
    %v4112 = vld [vmem:[#allocation7 + $0x80] sm:$0xf]
    %v4113 = vld [vmem:[#allocation7 + $0x84] sm:$0xff]
    %v4114 = vld [vmem:[#allocation7 + $0x8c] sm:$0xf]
    %v4115 = vld [vmem:[#allocation7 + $0x90] sm:$0xff]
    %v4116 = vld [vmem:[#allocation7 + $0x98] sm:$0xf]
    %v4117 = vld [vmem:[#allocation7 + $0x9c] sm:$0xff]
    %v4118 = vld [vmem:[#allocation7 + $0xa4] sm:$0xf]
    %v4119 = vld [vmem:[#allocation7 + $0xa8] sm:$0xff]
    %v4120 = vld [vmem:[#allocation7 + $0xb0] sm:$0xf]
    %v4121 = vld [vmem:[#allocation7 + $0xb4] sm:$0xff]
    %v4122 = vld [vmem:[#allocation7 + $0xbc] sm:$0xf]
    %v4123 = vld [vmem:[#allocation7 + $0xc0] sm:$0xff]
    %v4124 = vld [vmem:[#allocation7 + $0xc8] sm:$0xf]
    %v4125 = vld [vmem:[#allocation7 + $0xcc] sm:$0xff]
    %v4126 = vld [vmem:[#allocation7 + $0xd4] sm:$0xf]
    %v4127 = vld [vmem:[#allocation7 + $0xd8] sm:$0xff]
    %v4128 = vld [vmem:[#allocation7 + $0xe0] sm:$0xf]
    %v4129 = vld [vmem:[#allocation7 + $0xe4] sm:$0xff]
    %v4130 = vld [vmem:[#allocation7 + $0xec] sm:$0xf]
    %v4131 = vld [vmem:[#allocation7 + $0xf0] sm:$0xff]
    %v4132 = vld [vmem:[#allocation7 + $0xf8] sm:$0xf]
    %v4133 = vld [vmem:[#allocation7 + $0xfc] sm:$0xff]
    %v4134 = vld [vmem:[#allocation7 + $0x104] sm:$0xf]
    %v4135 = vld [vmem:[#allocation7 + $0x108] sm:$0xff]
    %v4136 = vld [vmem:[#allocation7 + $0x110] sm:$0xf]
    %v4137 = vld [vmem:[#allocation7 + $0x114] sm:$0xff]
    %v4138 = vld [vmem:[#allocation7 + $0x11c] sm:$0xf]
    %v4139 = vld [vmem:[#allocation7 + $0x120] sm:$0xff]
    %v4140 = vld [vmem:[#allocation7 + $0x128] sm:$0xf]
    %v4141 = vld [vmem:[#allocation7 + $0x12c] sm:$0xff]
    %v4142 = vld [vmem:[#allocation7 + $0x134] sm:$0xf]
    %v4143 = vld [vmem:[#allocation7 + $0x138] sm:$0xff]
    %v4144 = vld [vmem:[#allocation7 + $0x140] sm:$0xf]
    %v4145 = vld [vmem:[#allocation7 + $0x144] sm:$0xff]
    %v4146 = vld [vmem:[#allocation7 + $0x14c] sm:$0xf]
    %v4147 = vld [vmem:[#allocation7 + $0x150] sm:$0xff]
    %v4148 = vld [vmem:[#allocation7 + $0x158] sm:$0xf]
    %v4149 = vld [vmem:[#allocation7 + $0x15c] sm:$0xff]
    %v4150 = vld [vmem:[#allocation7 + $0x164] sm:$0xf]
    %v4151 = vld [vmem:[#allocation7 + $0x168] sm:$0xff]
    %v4152 = vld [vmem:[#allocation7 + $0x170] sm:$0xf]
    %v4153 = vld [vmem:[#allocation7 + $0x174] sm:$0xff]
    %v4154 = vld [vmem:[#allocation7 + $0x17c] sm:$0xf]
    %v4155 = vld [vmem:[#allocation7 + $0x180] sm:$0xff]
    %v4156 = vld [vmem:[#allocation7 + $0x188] sm:$0xf]
    %v4157 = vld [vmem:[#allocation7 + $0x18c] sm:$0xff]
    %v4158 = vld [vmem:[#allocation7 + $0x194] sm:$0xf]
    %v4159 = vld [vmem:[#allocation7 + $0x198] sm:$0xff]
    %v4160 = vld [vmem:[#allocation7 + $0x1a0] sm:$0xf]
    %v4161 = vld [vmem:[#allocation7 + $0x1a4] sm:$0xff]
    %v4162 = vld [vmem:[#allocation7 + $0x1ac] sm:$0xf]
    %v4163 = vld [vmem:[#allocation7 + $0x1b0] sm:$0xff]
    %v4164 = vld [vmem:[#allocation7 + $0x1b8] sm:$0xf]
    %v4165 = vld [vmem:[#allocation7 + $0x1bc] sm:$0xff]
    %v4166 = vld [vmem:[#allocation7 + $0x1c4] sm:$0xf]
    %v4167 = vld [vmem:[#allocation7 + $0x1c8] sm:$0xff]
    %v4168 = vld [vmem:[#allocation7 + $0x1d0] sm:$0xf]
    %v4169 = vld [vmem:[#allocation7 + $0x1d4] sm:$0xff]
    %v4170 = vld [vmem:[#allocation7 + $0x1dc] sm:$0xf]
    %v4171 = vld [vmem:[#allocation7 + $0x1e0] sm:$0xff]
    %v4172 = vld [vmem:[#allocation7 + $0x1e8] sm:$0xf]
    %v4173 = vld [vmem:[#allocation7 + $0x1ec] sm:$0xff]
    %v4174 = vld [vmem:[#allocation7 + $0x1f4] sm:$0xf]
    %v4175 = vld [vmem:[#allocation7 + $0x1f8] sm:$0xff]
    %v4176 = vld [vmem:[#allocation7 + $0x200] sm:$0xf]
    %v4177 = vld [vmem:[#allocation7 + $0x204] sm:$0xff]
    %v4178 = vld [vmem:[#allocation7 + $0x20c] sm:$0xf]
    %v4179 = vld [vmem:[#allocation7 + $0x210] sm:$0xff]
    %v4180 = vld [vmem:[#allocation7 + $0x218] sm:$0xf]
    %v4181 = vld [vmem:[#allocation7 + $0x21c] sm:$0xff]
    %v4182 = vld [vmem:[#allocation7 + $0x224] sm:$0xf]
    %v4183 = vld [vmem:[#allocation7 + $0x228] sm:$0xff]
    %v4184 = vld [vmem:[#allocation7 + $0x230] sm:$0xf]
    %v4185 = vld [vmem:[#allocation7 + $0x234] sm:$0xff]
    %v4186 = vld [vmem:[#allocation7 + $0x23c] sm:$0xf]
    %v4187 = vld [vmem:[#allocation7 + $0x240] sm:$0xff]
    %v4188 = vld [vmem:[#allocation7 + $0x248] sm:$0xf]
    %v4189 = vld [vmem:[#allocation7 + $0x24c] sm:$0xff]
    %v4190 = vld [vmem:[#allocation7 + $0x254] sm:$0xf]
    %v4191 = vld [vmem:[#allocation7 + $0x258] sm:$0xff]
    %v4192 = vld [vmem:[#allocation7 + $0x260] sm:$0xf]
    %v4193 = vld [vmem:[#allocation7 + $0x264] sm:$0xff]
    %v4194 = vld [vmem:[#allocation7 + $0x26c] sm:$0xf]
    %v4195 = vld [vmem:[#allocation7 + $0x270] sm:$0xff]
    %v4196 = vld [vmem:[#allocation7 + $0x278] sm:$0xf]
    %v4197 = vld [vmem:[#allocation7 + $0x27c] sm:$0xff]
    %v4198 = vld [vmem:[#allocation7 + $0x284] sm:$0xf]
    %v4199 = vld [vmem:[#allocation7 + $0x288] sm:$0xff]
    %v4200 = vld [vmem:[#allocation7 + $0x290] sm:$0xf]
    %v4201 = vld [vmem:[#allocation7 + $0x294] sm:$0xff]
    %v4202 = vld [vmem:[#allocation7 + $0x29c] sm:$0xf]
    %v4203 = vld [vmem:[#allocation7 + $0x2a0] sm:$0xff]
    %v4204 = vld [vmem:[#allocation7 + $0x2a8] sm:$0xf]
    %v4205 = vld [vmem:[#allocation7 + $0x2ac] sm:$0xff]
    %v4206 = vld [vmem:[#allocation7 + $0x2b4] sm:$0xf]
    %v4207 = vld [vmem:[#allocation7 + $0x2b8] sm:$0xff]
    %v4208 = vld [vmem:[#allocation7 + $0x2c0] sm:$0xf]
    %v4209 = vld [vmem:[#allocation7 + $0x2c4] sm:$0xff]
    %v4210 = vld [vmem:[#allocation7 + $0x2cc] sm:$0xf]
    %v4211 = vld [vmem:[#allocation7 + $0x2d0] sm:$0xff]
    %v4212 = vld [vmem:[#allocation7 + $0x2d8] sm:$0xf]
    %v4213 = vld [vmem:[#allocation7 + $0x2dc] sm:$0xff]
    %v4214 = vld [vmem:[#allocation7 + $0x2e4] sm:$0xf]
    %v4215 = vld [vmem:[#allocation7 + $0x2e8] sm:$0xff]
    %v4216 = vld [vmem:[#allocation7 + $0x2f0] sm:$0xf]
    %v4217 = vld [vmem:[#allocation7 + $0x2f4] sm:$0xff]
    %v4218 = vld [vmem:[#allocation7 + $0x2fc] sm:$0xf]
    %v4219 = vld [vmem:[#allocation7 + $0x300] sm:$0xff]
    %v4220 = vld [vmem:[#allocation7 + $0x308] sm:$0xf]
    %v4221 = vld [vmem:[#allocation7 + $0x30c] sm:$0xff]
    %v4222 = vld [vmem:[#allocation7 + $0x314] sm:$0xf]
    %v4223 = vld [vmem:[#allocation7 + $0x318] sm:$0xff]
    %v4224 = vld [vmem:[#allocation7 + $0x320] sm:$0xf]
    %v4225 = vld [vmem:[#allocation7 + $0x324] sm:$0xff]
    %v4226 = vld [vmem:[#allocation7 + $0x32c] sm:$0xf]
    %v4227 = vld [vmem:[#allocation7 + $0x330] sm:$0xff]
    %v4228 = vld [vmem:[#allocation7 + $0x338] sm:$0xf]
    %v4229 = vld [vmem:[#allocation7 + $0x33c] sm:$0xff]
    %v4230 = vld [vmem:[#allocation7 + $0x344] sm:$0xf]
    %v4231 = vld [vmem:[#allocation7 + $0x348] sm:$0xff]
    %v4232 = vld [vmem:[#allocation7 + $0x350] sm:$0xf]
    %v4233 = vld [vmem:[#allocation7 + $0x354] sm:$0xff]
    %v4234 = vld [vmem:[#allocation7 + $0x35c] sm:$0xf]
    %v4235 = vld [vmem:[#allocation7 + $0x360] sm:$0xff]
    %v4236 = vld [vmem:[#allocation7 + $0x368] sm:$0xf]
    %v4237 = vld [vmem:[#allocation7 + $0x36c] sm:$0xff]
    %v4238 = vld [vmem:[#allocation7 + $0x374] sm:$0xf]
    %v4239 = vld [vmem:[#allocation7 + $0x378] sm:$0xff]
    %v4240 = vld [vmem:[#allocation7 + $0x380] sm:$0xf]
    %v4241 = vld [vmem:[#allocation7 + $0x384] sm:$0xff]
    %v4242 = vld [vmem:[#allocation7 + $0x38c] sm:$0xf]
    %v4243 = vld [vmem:[#allocation7 + $0x390] sm:$0xff]
    %v4244 = vld [vmem:[#allocation7 + $0x398] sm:$0xf]
    %v4245 = vld [vmem:[#allocation7 + $0x39c] sm:$0xff]
    %v4246 = vld [vmem:[#allocation7 + $0x3a4] sm:$0xf]
    %v4247 = vld [vmem:[#allocation7 + $0x3a8] sm:$0xff]
    %v4248 = vld [vmem:[#allocation7 + $0x3b0] sm:$0xf]
    %v4249 = vld [vmem:[#allocation7 + $0x3b4] sm:$0xff]
    %v4250 = vld [vmem:[#allocation7 + $0x3bc] sm:$0xf]
    %v4251 = vld [vmem:[#allocation7 + $0x3c0] sm:$0xff]
    %v4252 = vld [vmem:[#allocation7 + $0x3c8] sm:$0xf]
    %v4253 = vld [vmem:[#allocation7 + $0x3cc] sm:$0xff]
    %v4254 = vld [vmem:[#allocation7 + $0x3d4] sm:$0xf]
    %v4255 = vld [vmem:[#allocation7 + $0x3d8] sm:$0xff]
    %v4256 = vld [vmem:[#allocation7 + $0x3e0] sm:$0xf]
    %v4257 = vld [vmem:[#allocation7 + $0x3e4] sm:$0xff]
    %v4258 = vld [vmem:[#allocation7 + $0x3ec] sm:$0xf]
    %v4259 = vld [vmem:[#allocation7 + $0x3f0] sm:$0xff]
    %v4260 = vld [vmem:[#allocation7 + $0x3f8] sm:$0xf]
    %v4261 = vld [vmem:[#allocation7 + $0x3fc] sm:$0xff]
    %v4262 = vld [vmem:[#allocation7 + $0x404] sm:$0xf]
    %v4263 = vld [vmem:[#allocation7 + $0x408] sm:$0xff]
    %v4264 = vld [vmem:[#allocation7 + $0x410] sm:$0xf]
    %v4265 = vld [vmem:[#allocation7 + $0x414] sm:$0xff]
    %v4266 = vld [vmem:[#allocation7 + $0x41c] sm:$0xf]
    %v4267 = vld [vmem:[#allocation7 + $0x420] sm:$0xff]
    %v4268 = vld [vmem:[#allocation7 + $0x428] sm:$0xf]
    %v4269 = vld [vmem:[#allocation7 + $0x42c] sm:$0xff]
    %v4270 = vld [vmem:[#allocation7 + $0x434] sm:$0xf]
    %v4271 = vld [vmem:[#allocation7 + $0x438] sm:$0xff]
    %v4272 = vld [vmem:[#allocation7 + $0x440] sm:$0xf]
    %v4273 = vld [vmem:[#allocation7 + $0x444] sm:$0xff]
    %v4274 = vld [vmem:[#allocation7 + $0x44c] sm:$0xf]
    %v4275 = vld [vmem:[#allocation7 + $0x450] sm:$0xff]
    %v4276 = vld [vmem:[#allocation7 + $0x458] sm:$0xf]
    %v4277 = vld [vmem:[#allocation7 + $0x45c] sm:$0xff]
    %v4278 = vld [vmem:[#allocation7 + $0x464] sm:$0xf]
    %v4279 = vld [vmem:[#allocation7 + $0x468] sm:$0xff]
    %v4280 = vld [vmem:[#allocation7 + $0x470] sm:$0xf]
    %v4281 = vld [vmem:[#allocation7 + $0x474] sm:$0xff]
    %v4282 = vld [vmem:[#allocation7 + $0x47c] sm:$0xf]
    %v4475 = vunpack.c.l.b16 %v4091
    %v4476 = vunpack.c.h.b16 %v4091
    %v4477 = vunpack.c.l.b16 %v4092
    %v4478 = vunpack.c.l.b16 %v4093
    %v4479 = vunpack.c.h.b16 %v4093
    %v4480 = vunpack.c.l.b16 %v4094
    %v4481 = vunpack.c.l.b16 %v4095
    %v4482 = vunpack.c.h.b16 %v4095
    %v4483 = vunpack.c.l.b16 %v4096
    %v4484 = vunpack.c.l.b16 %v4097
    %v4485 = vunpack.c.h.b16 %v4097
    %v4486 = vunpack.c.l.b16 %v4098
    %v4487 = vunpack.c.l.b16 %v4099
    %v4488 = vunpack.c.h.b16 %v4099
    %v4489 = vunpack.c.l.b16 %v4100
    %v4490 = vunpack.c.l.b16 %v4101
    %v4491 = vunpack.c.h.b16 %v4101
    %v4492 = vunpack.c.l.b16 %v4102
    %v4493 = vunpack.c.l.b16 %v4103
    %v4494 = vunpack.c.h.b16 %v4103
    %v4495 = vunpack.c.l.b16 %v4104
    %v4496 = vunpack.c.l.b16 %v4105
    %v4497 = vunpack.c.h.b16 %v4105
    %v4498 = vunpack.c.l.b16 %v4106
    %v4499 = vunpack.c.l.b16 %v4107
    %v4500 = vunpack.c.h.b16 %v4107
    %v4501 = vunpack.c.l.b16 %v4108
    %v4502 = vunpack.c.l.b16 %v4109
    %v4503 = vunpack.c.h.b16 %v4109
    %v4504 = vunpack.c.l.b16 %v4110
    %v4505 = vunpack.c.l.b16 %v4111
    %v4506 = vunpack.c.h.b16 %v4111
    %v4507 = vunpack.c.l.b16 %v4112
    %v4508 = vunpack.c.l.b16 %v4113
    %v4509 = vunpack.c.h.b16 %v4113
    %v4510 = vunpack.c.l.b16 %v4114
    %v4511 = vunpack.c.l.b16 %v4115
    %v4512 = vunpack.c.h.b16 %v4115
    %v4513 = vunpack.c.l.b16 %v4116
    %v4514 = vunpack.c.l.b16 %v4117
    %v4515 = vunpack.c.h.b16 %v4117
    %v4516 = vunpack.c.l.b16 %v4118
    %v4517 = vunpack.c.l.b16 %v4119
    %v4518 = vunpack.c.h.b16 %v4119
    %v4519 = vunpack.c.l.b16 %v4120
    %v4520 = vunpack.c.l.b16 %v4121
    %v4521 = vunpack.c.h.b16 %v4121
    %v4522 = vunpack.c.l.b16 %v4122
    %v4523 = vunpack.c.l.b16 %v4123
    %v4524 = vunpack.c.h.b16 %v4123
    %v4525 = vunpack.c.l.b16 %v4124
    %v4526 = vunpack.c.l.b16 %v4125
    %v4527 = vunpack.c.h.b16 %v4125
    %v4528 = vunpack.c.l.b16 %v4126
    %v4529 = vunpack.c.l.b16 %v4127
    %v4530 = vunpack.c.h.b16 %v4127
    %v4531 = vunpack.c.l.b16 %v4128
    %v4532 = vunpack.c.l.b16 %v4129
    %v4533 = vunpack.c.h.b16 %v4129
    %v4534 = vunpack.c.l.b16 %v4130
    %v4535 = vunpack.c.l.b16 %v4131
    %v4536 = vunpack.c.h.b16 %v4131
    %v4537 = vunpack.c.l.b16 %v4132
    %v4538 = vunpack.c.l.b16 %v4133
    %v4539 = vunpack.c.h.b16 %v4133
    %v4540 = vunpack.c.l.b16 %v4134
    %v4541 = vunpack.c.l.b16 %v4135
    %v4542 = vunpack.c.h.b16 %v4135
    %v4543 = vunpack.c.l.b16 %v4136
    %v4544 = vunpack.c.l.b16 %v4137
    %v4545 = vunpack.c.h.b16 %v4137
    %v4546 = vunpack.c.l.b16 %v4138
    %v4547 = vunpack.c.l.b16 %v4139
    %v4548 = vunpack.c.h.b16 %v4139
    %v4549 = vunpack.c.l.b16 %v4140
    %v4550 = vunpack.c.l.b16 %v4141
    %v4551 = vunpack.c.h.b16 %v4141
    %v4552 = vunpack.c.l.b16 %v4142
    %v4553 = vunpack.c.l.b16 %v4143
    %v4554 = vunpack.c.h.b16 %v4143
    %v4555 = vunpack.c.l.b16 %v4144
    %v4556 = vunpack.c.l.b16 %v4145
    %v4557 = vunpack.c.h.b16 %v4145
    %v4558 = vunpack.c.l.b16 %v4146
    %v4559 = vunpack.c.l.b16 %v4147
    %v4560 = vunpack.c.h.b16 %v4147
    %v4561 = vunpack.c.l.b16 %v4148
    %v4562 = vunpack.c.l.b16 %v4149
    %v4563 = vunpack.c.h.b16 %v4149
    %v4564 = vunpack.c.l.b16 %v4150
    %v4565 = vunpack.c.l.b16 %v4151
    %v4566 = vunpack.c.h.b16 %v4151
    %v4567 = vunpack.c.l.b16 %v4152
    %v4568 = vunpack.c.l.b16 %v4153
    %v4569 = vunpack.c.h.b16 %v4153
    %v4570 = vunpack.c.l.b16 %v4154
    %v4571 = vunpack.c.l.b16 %v4155
    %v4572 = vunpack.c.h.b16 %v4155
    %v4573 = vunpack.c.l.b16 %v4156
    %v4574 = vunpack.c.l.b16 %v4157
    %v4575 = vunpack.c.h.b16 %v4157
    %v4576 = vunpack.c.l.b16 %v4158
    %v4577 = vunpack.c.l.b16 %v4159
    %v4578 = vunpack.c.h.b16 %v4159
    %v4579 = vunpack.c.l.b16 %v4160
    %v4580 = vunpack.c.l.b16 %v4161
    %v4581 = vunpack.c.h.b16 %v4161
    %v4582 = vunpack.c.l.b16 %v4162
    %v4583 = vunpack.c.l.b16 %v4163
    %v4584 = vunpack.c.h.b16 %v4163
    %v4585 = vunpack.c.l.b16 %v4164
    %v4586 = vunpack.c.l.b16 %v4165
    %v4587 = vunpack.c.h.b16 %v4165
    %v4588 = vunpack.c.l.b16 %v4166
    %v4589 = vunpack.c.l.b16 %v4167
    %v4590 = vunpack.c.h.b16 %v4167
    %v4591 = vunpack.c.l.b16 %v4168
    %v4592 = vunpack.c.l.b16 %v4169
    %v4593 = vunpack.c.h.b16 %v4169
    %v4594 = vunpack.c.l.b16 %v4170
    %v4595 = vunpack.c.l.b16 %v4171
    %v4596 = vunpack.c.h.b16 %v4171
    %v4597 = vunpack.c.l.b16 %v4172
    %v4598 = vunpack.c.l.b16 %v4173
    %v4599 = vunpack.c.h.b16 %v4173
    %v4600 = vunpack.c.l.b16 %v4174
    %v4601 = vunpack.c.l.b16 %v4175
    %v4602 = vunpack.c.h.b16 %v4175
    %v4603 = vunpack.c.l.b16 %v4176
    %v4604 = vunpack.c.l.b16 %v4177
    %v4605 = vunpack.c.h.b16 %v4177
    %v4606 = vunpack.c.l.b16 %v4178
    %v4607 = vunpack.c.l.b16 %v4179
    %v4608 = vunpack.c.h.b16 %v4179
    %v4609 = vunpack.c.l.b16 %v4180
    %v4610 = vunpack.c.l.b16 %v4181
    %v4611 = vunpack.c.h.b16 %v4181
    %v4612 = vunpack.c.l.b16 %v4182
    %v4613 = vunpack.c.l.b16 %v4183
    %v4614 = vunpack.c.h.b16 %v4183
    %v4615 = vunpack.c.l.b16 %v4184
    %v4616 = vunpack.c.l.b16 %v4185
    %v4617 = vunpack.c.h.b16 %v4185
    %v4618 = vunpack.c.l.b16 %v4186
    %v4619 = vunpack.c.l.b16 %v4187
    %v4620 = vunpack.c.h.b16 %v4187
    %v4621 = vunpack.c.l.b16 %v4188
    %v4622 = vunpack.c.l.b16 %v4189
    %v4623 = vunpack.c.h.b16 %v4189
    %v4624 = vunpack.c.l.b16 %v4190
    %v4625 = vunpack.c.l.b16 %v4191
    %v4626 = vunpack.c.h.b16 %v4191
    %v4627 = vunpack.c.l.b16 %v4192
    %v4628 = vunpack.c.l.b16 %v4193
    %v4629 = vunpack.c.h.b16 %v4193
    %v4630 = vunpack.c.l.b16 %v4194
    %v4631 = vunpack.c.l.b16 %v4195
    %v4632 = vunpack.c.h.b16 %v4195
    %v4633 = vunpack.c.l.b16 %v4196
    %v4634 = vunpack.c.l.b16 %v4197
    %v4635 = vunpack.c.h.b16 %v4197
    %v4636 = vunpack.c.l.b16 %v4198
    %v4637 = vunpack.c.l.b16 %v4199
    %v4638 = vunpack.c.h.b16 %v4199
    %v4639 = vunpack.c.l.b16 %v4200
    %v4640 = vunpack.c.l.b16 %v4201
    %v4641 = vunpack.c.h.b16 %v4201
    %v4642 = vunpack.c.l.b16 %v4202
    %v4643 = vunpack.c.l.b16 %v4203
    %v4644 = vunpack.c.h.b16 %v4203
    %v4645 = vunpack.c.l.b16 %v4204
    %v4646 = vunpack.c.l.b16 %v4205
    %v4647 = vunpack.c.h.b16 %v4205
    %v4648 = vunpack.c.l.b16 %v4206
    %v4649 = vunpack.c.l.b16 %v4207
    %v4650 = vunpack.c.h.b16 %v4207
    %v4651 = vunpack.c.l.b16 %v4208
    %v4652 = vunpack.c.l.b16 %v4209
    %v4653 = vunpack.c.h.b16 %v4209
    %v4654 = vunpack.c.l.b16 %v4210
    %v4655 = vunpack.c.l.b16 %v4211
    %v4656 = vunpack.c.h.b16 %v4211
    %v4657 = vunpack.c.l.b16 %v4212
    %v4658 = vunpack.c.l.b16 %v4213
    %v4659 = vunpack.c.h.b16 %v4213
    %v4660 = vunpack.c.l.b16 %v4214
    %v4661 = vunpack.c.l.b16 %v4215
    %v4662 = vunpack.c.h.b16 %v4215
    %v4663 = vunpack.c.l.b16 %v4216
    %v4664 = vunpack.c.l.b16 %v4217
    %v4665 = vunpack.c.h.b16 %v4217
    %v4666 = vunpack.c.l.b16 %v4218
    %v4667 = vunpack.c.l.b16 %v4219
    %v4668 = vunpack.c.h.b16 %v4219
    %v4669 = vunpack.c.l.b16 %v4220
    %v4670 = vunpack.c.l.b16 %v4221
    %v4671 = vunpack.c.h.b16 %v4221
    %v4672 = vunpack.c.l.b16 %v4222
    %v4673 = vunpack.c.l.b16 %v4223
    %v4674 = vunpack.c.h.b16 %v4223
    %v4675 = vunpack.c.l.b16 %v4224
    %v4676 = vunpack.c.l.b16 %v4225
    %v4677 = vunpack.c.h.b16 %v4225
    %v4678 = vunpack.c.l.b16 %v4226
    %v4679 = vunpack.c.l.b16 %v4227
    %v4680 = vunpack.c.h.b16 %v4227
    %v4681 = vunpack.c.l.b16 %v4228
    %v4682 = vunpack.c.l.b16 %v4229
    %v4683 = vunpack.c.h.b16 %v4229
    %v4684 = vunpack.c.l.b16 %v4230
    %v4685 = vunpack.c.l.b16 %v4231
    %v4686 = vunpack.c.h.b16 %v4231
    %v4687 = vunpack.c.l.b16 %v4232
    %v4688 = vunpack.c.l.b16 %v4233
    %v4689 = vunpack.c.h.b16 %v4233
    %v4690 = vunpack.c.l.b16 %v4234
    %v4691 = vunpack.c.l.b16 %v4235
    %v4692 = vunpack.c.h.b16 %v4235
    %v4693 = vunpack.c.l.b16 %v4236
    %v4694 = vunpack.c.l.b16 %v4237
    %v4695 = vunpack.c.h.b16 %v4237
    %v4696 = vunpack.c.l.b16 %v4238
    %v4697 = vunpack.c.l.b16 %v4239
    %v4698 = vunpack.c.h.b16 %v4239
    %v4699 = vunpack.c.l.b16 %v4240
    %v4700 = vunpack.c.l.b16 %v4241
    %v4701 = vunpack.c.h.b16 %v4241
    %v4702 = vunpack.c.l.b16 %v4242
    %v4703 = vunpack.c.l.b16 %v4243
    %v4704 = vunpack.c.h.b16 %v4243
    %v4705 = vunpack.c.l.b16 %v4244
    %v4706 = vunpack.c.l.b16 %v4245
    %v4707 = vunpack.c.h.b16 %v4245
    %v4708 = vunpack.c.l.b16 %v4246
    %v4709 = vunpack.c.l.b16 %v4247
    %v4710 = vunpack.c.h.b16 %v4247
    %v4711 = vunpack.c.l.b16 %v4248
    %v4712 = vunpack.c.l.b16 %v4249
    %v4713 = vunpack.c.h.b16 %v4249
    %v4714 = vunpack.c.l.b16 %v4250
    %v4715 = vunpack.c.l.b16 %v4251
    %v4716 = vunpack.c.h.b16 %v4251
    %v4717 = vunpack.c.l.b16 %v4252
    %v4718 = vunpack.c.l.b16 %v4253
    %v4719 = vunpack.c.h.b16 %v4253
    %v4720 = vunpack.c.l.b16 %v4254
    %v4721 = vunpack.c.l.b16 %v4255
    %v4722 = vunpack.c.h.b16 %v4255
    %v4723 = vunpack.c.l.b16 %v4256
    %v4724 = vunpack.c.l.b16 %v4257
    %v4725 = vunpack.c.h.b16 %v4257
    %v4726 = vunpack.c.l.b16 %v4258
    %v4727 = vunpack.c.l.b16 %v4259
    %v4728 = vunpack.c.h.b16 %v4259
    %v4729 = vunpack.c.l.b16 %v4260
    %v4730 = vunpack.c.l.b16 %v4261
    %v4731 = vunpack.c.h.b16 %v4261
    %v4732 = vunpack.c.l.b16 %v4262
    %v4733 = vunpack.c.l.b16 %v4263
    %v4734 = vunpack.c.h.b16 %v4263
    %v4735 = vunpack.c.l.b16 %v4264
    %v4736 = vunpack.c.l.b16 %v4265
    %v4737 = vunpack.c.h.b16 %v4265
    %v4738 = vunpack.c.l.b16 %v4266
    %v4739 = vunpack.c.l.b16 %v4267
    %v4740 = vunpack.c.h.b16 %v4267
    %v4741 = vunpack.c.l.b16 %v4268
    %v4742 = vunpack.c.l.b16 %v4269
    %v4743 = vunpack.c.h.b16 %v4269
    %v4744 = vunpack.c.l.b16 %v4270
    %v4745 = vunpack.c.l.b16 %v4271
    %v4746 = vunpack.c.h.b16 %v4271
    %v4747 = vunpack.c.l.b16 %v4272
    %v4748 = vunpack.c.l.b16 %v4273
    %v4749 = vunpack.c.h.b16 %v4273
    %v4750 = vunpack.c.l.b16 %v4274
    %v4751 = vunpack.c.l.b16 %v4275
    %v4752 = vunpack.c.h.b16 %v4275
    %v4753 = vunpack.c.l.b16 %v4276
    %v4754 = vunpack.c.l.b16 %v4277
    %v4755 = vunpack.c.h.b16 %v4277
    %v4756 = vunpack.c.l.b16 %v4278
    %v4757 = vunpack.c.l.b16 %v4279
    %v4758 = vunpack.c.h.b16 %v4279
    %v4759 = vunpack.c.l.b16 %v4280
    %v4760 = vunpack.c.l.b16 %v4281
    %v4761 = vunpack.c.h.b16 %v4281
    %v4762 = vunpack.c.l.b16 %v4282
    %v4763 = vpack.c.b16 %v4478, %v4475
    %v4764 = vpack.c.b16 %v4479, %v4476
    %v4765 = vpack.c.b16 %v4480, %v4477
    %v4766 = vpack.c.b16 %v4484, %v4481
    %v4767 = vpack.c.b16 %v4485, %v4482
    %v4768 = vpack.c.b16 %v4486, %v4483
    %v4769 = vpack.c.b16 %v4490, %v4487
    %v4770 = vpack.c.b16 %v4491, %v4488
    %v4771 = vpack.c.b16 %v4492, %v4489
    %v4772 = vpack.c.b16 %v4496, %v4493
    %v4773 = vpack.c.b16 %v4497, %v4494
    %v4774 = vpack.c.b16 %v4498, %v4495
    %v4775 = vpack.c.b16 %v4502, %v4499
    %v4776 = vpack.c.b16 %v4503, %v4500
    %v4777 = vpack.c.b16 %v4504, %v4501
    %v4778 = vpack.c.b16 %v4508, %v4505
    %v4779 = vpack.c.b16 %v4509, %v4506
    %v4780 = vpack.c.b16 %v4510, %v4507
    %v4781 = vpack.c.b16 %v4514, %v4511
    %v4782 = vpack.c.b16 %v4515, %v4512
    %v4783 = vpack.c.b16 %v4516, %v4513
    %v4784 = vpack.c.b16 %v4520, %v4517
    %v4785 = vpack.c.b16 %v4521, %v4518
    %v4786 = vpack.c.b16 %v4522, %v4519
    %v4787 = vpack.c.b16 %v4526, %v4523
    %v4788 = vpack.c.b16 %v4527, %v4524
    %v4789 = vpack.c.b16 %v4528, %v4525
    %v4790 = vpack.c.b16 %v4532, %v4529
    %v4791 = vpack.c.b16 %v4533, %v4530
    %v4792 = vpack.c.b16 %v4534, %v4531
    %v4793 = vpack.c.b16 %v4538, %v4535
    %v4794 = vpack.c.b16 %v4539, %v4536
    %v4795 = vpack.c.b16 %v4540, %v4537
    %v4796 = vpack.c.b16 %v4544, %v4541
    %v4797 = vpack.c.b16 %v4545, %v4542
    %v4798 = vpack.c.b16 %v4546, %v4543
    %v4799 = vpack.c.b16 %v4550, %v4547
    %v4800 = vpack.c.b16 %v4551, %v4548
    %v4801 = vpack.c.b16 %v4552, %v4549
    %v4802 = vpack.c.b16 %v4556, %v4553
    %v4803 = vpack.c.b16 %v4557, %v4554
    %v4804 = vpack.c.b16 %v4558, %v4555
    %v4805 = vpack.c.b16 %v4562, %v4559
    %v4806 = vpack.c.b16 %v4563, %v4560
    %v4807 = vpack.c.b16 %v4564, %v4561
    %v4808 = vpack.c.b16 %v4568, %v4565
    %v4809 = vpack.c.b16 %v4569, %v4566
    %v4810 = vpack.c.b16 %v4570, %v4567
    %v4811 = vpack.c.b16 %v4574, %v4571
    %v4812 = vpack.c.b16 %v4575, %v4572
    %v4813 = vpack.c.b16 %v4576, %v4573
    %v4814 = vpack.c.b16 %v4580, %v4577
    %v4815 = vpack.c.b16 %v4581, %v4578
    %v4816 = vpack.c.b16 %v4582, %v4579
    %v4817 = vpack.c.b16 %v4586, %v4583
    %v4818 = vpack.c.b16 %v4587, %v4584
    %v4819 = vpack.c.b16 %v4588, %v4585
    %v4820 = vpack.c.b16 %v4592, %v4589
    %v4821 = vpack.c.b16 %v4593, %v4590
    %v4822 = vpack.c.b16 %v4594, %v4591
    %v4823 = vpack.c.b16 %v4598, %v4595
    %v4824 = vpack.c.b16 %v4599, %v4596
    %v4825 = vpack.c.b16 %v4600, %v4597
    %v4826 = vpack.c.b16 %v4604, %v4601
    %v4827 = vpack.c.b16 %v4605, %v4602
    %v4828 = vpack.c.b16 %v4606, %v4603
    %v4829 = vpack.c.b16 %v4610, %v4607
    %v4830 = vpack.c.b16 %v4611, %v4608
    %v4831 = vpack.c.b16 %v4612, %v4609
    %v4832 = vpack.c.b16 %v4616, %v4613
    %v4833 = vpack.c.b16 %v4617, %v4614
    %v4834 = vpack.c.b16 %v4618, %v4615
    %v4835 = vpack.c.b16 %v4622, %v4619
    %v4836 = vpack.c.b16 %v4623, %v4620
    %v4837 = vpack.c.b16 %v4624, %v4621
    %v4838 = vpack.c.b16 %v4628, %v4625
    %v4839 = vpack.c.b16 %v4629, %v4626
    %v4840 = vpack.c.b16 %v4630, %v4627
    %v4841 = vpack.c.b16 %v4634, %v4631
    %v4842 = vpack.c.b16 %v4635, %v4632
    %v4843 = vpack.c.b16 %v4636, %v4633
    %v4844 = vpack.c.b16 %v4640, %v4637
    %v4845 = vpack.c.b16 %v4641, %v4638
    %v4846 = vpack.c.b16 %v4642, %v4639
    %v4847 = vpack.c.b16 %v4646, %v4643
    %v4848 = vpack.c.b16 %v4647, %v4644
    %v4849 = vpack.c.b16 %v4648, %v4645
    %v4850 = vpack.c.b16 %v4652, %v4649
    %v4851 = vpack.c.b16 %v4653, %v4650
    %v4852 = vpack.c.b16 %v4654, %v4651
    %v4853 = vpack.c.b16 %v4658, %v4655
    %v4854 = vpack.c.b16 %v4659, %v4656
    %v4855 = vpack.c.b16 %v4660, %v4657
    %v4856 = vpack.c.b16 %v4664, %v4661
    %v4857 = vpack.c.b16 %v4665, %v4662
    %v4858 = vpack.c.b16 %v4666, %v4663
    %v4859 = vpack.c.b16 %v4670, %v4667
    %v4860 = vpack.c.b16 %v4671, %v4668
    %v4861 = vpack.c.b16 %v4672, %v4669
    %v4862 = vpack.c.b16 %v4676, %v4673
    %v4863 = vpack.c.b16 %v4677, %v4674
    %v4864 = vpack.c.b16 %v4678, %v4675
    %v4865 = vpack.c.b16 %v4682, %v4679
    %v4866 = vpack.c.b16 %v4683, %v4680
    %v4867 = vpack.c.b16 %v4684, %v4681
    %v4868 = vpack.c.b16 %v4688, %v4685
    %v4869 = vpack.c.b16 %v4689, %v4686
    %v4870 = vpack.c.b16 %v4690, %v4687
    %v4871 = vpack.c.b16 %v4694, %v4691
    %v4872 = vpack.c.b16 %v4695, %v4692
    %v4873 = vpack.c.b16 %v4696, %v4693
    %v4874 = vpack.c.b16 %v4700, %v4697
    %v4875 = vpack.c.b16 %v4701, %v4698
    %v4876 = vpack.c.b16 %v4702, %v4699
    %v4877 = vpack.c.b16 %v4706, %v4703
    %v4878 = vpack.c.b16 %v4707, %v4704
    %v4879 = vpack.c.b16 %v4708, %v4705
    %v4880 = vpack.c.b16 %v4712, %v4709
    %v4881 = vpack.c.b16 %v4713, %v4710
    %v4882 = vpack.c.b16 %v4714, %v4711
    %v4883 = vpack.c.b16 %v4718, %v4715
    %v4884 = vpack.c.b16 %v4719, %v4716
    %v4885 = vpack.c.b16 %v4720, %v4717
    %v4886 = vpack.c.b16 %v4724, %v4721
    %v4887 = vpack.c.b16 %v4725, %v4722
    %v4888 = vpack.c.b16 %v4726, %v4723
    %v4889 = vpack.c.b16 %v4730, %v4727
    %v4890 = vpack.c.b16 %v4731, %v4728
    %v4891 = vpack.c.b16 %v4732, %v4729
    %v4892 = vpack.c.b16 %v4736, %v4733
    %v4893 = vpack.c.b16 %v4737, %v4734
    %v4894 = vpack.c.b16 %v4738, %v4735
    %v4895 = vpack.c.b16 %v4742, %v4739
    %v4896 = vpack.c.b16 %v4743, %v4740
    %v4897 = vpack.c.b16 %v4744, %v4741
    %v4898 = vpack.c.b16 %v4748, %v4745
    %v4899 = vpack.c.b16 %v4749, %v4746
    %v4900 = vpack.c.b16 %v4750, %v4747
    %v4901 = vpack.c.b16 %v4754, %v4751
    %v4902 = vpack.c.b16 %v4755, %v4752
    %v4903 = vpack.c.b16 %v4756, %v4753
    %v4904 = vpack.c.b16 %v4760, %v4757
    %v4905 = vpack.c.b16 %v4761, %v4758
    %v4906 = vpack.c.b16 %v4762, %v4759
    %5051 = vmatpush.bf16.msra.mxu0 %v4784
    %5052 = vmatpush.bf16.msra.mxu0 %v4781
    %5053 = vmatpush.bf16.msra.mxu0 %v4778
    %5054 = vmatpush.bf16.msra.mxu0 %v4775
    %5055 = vmatpush.bf16.msra.mxu0 %v4772
    %5056 = vmatpush.bf16.msra.mxu0 %v4769
    %5057 = vmatpush.bf16.msra.mxu0 %v4766
    %5058 = vmatpush.bf16.msra.mxu0 %v4763
    %5059 = vmatmul.bf16.gmra.mxu0 %v4085
    %v5060 = vpop.f32.mrf.mxu0
    %v5061 = vadd.f32 0.0, %v5060
    %v5062 = vpop.f32.mrf.mxu0
    %v5063 = vadd.f32 0.0, %v5062
    %5064 = vdwg.mxu0
    %5065 = vmatpush.bf16.msra.mxu0 %v4808
    %5066 = vmatpush.bf16.msra.mxu0 %v4805
    %5067 = vmatpush.bf16.msra.mxu0 %v4802
    %5068 = vmatpush.bf16.msra.mxu0 %v4799
    %5069 = vmatpush.bf16.msra.mxu0 %v4796
    %5070 = vmatpush.bf16.msra.mxu0 %v4793
    %5071 = vmatpush.bf16.msra.mxu0 %v4790
    %5072 = vmatpush.bf16.msra.mxu0 %v4787
    %5073 = vmatmul.bf16.gmra.mxu0 %v4086
    %v5074 = vpop.f32.mrf.mxu0
    %v5075 = vadd.f32 %v5061, %v5074
    %v5076 = vpop.f32.mrf.mxu0
    %v5077 = vadd.f32 %v5063, %v5076
    %5078 = vdwg.mxu0
    %5079 = vmatpush.bf16.msra.mxu0 %v4832
    %5080 = vmatpush.bf16.msra.mxu0 %v4829
    %5081 = vmatpush.bf16.msra.mxu0 %v4826
    %5082 = vmatpush.bf16.msra.mxu0 %v4823
    %5083 = vmatpush.bf16.msra.mxu0 %v4820
    %5084 = vmatpush.bf16.msra.mxu0 %v4817
    %5085 = vmatpush.bf16.msra.mxu0 %v4814
    %5086 = vmatpush.bf16.msra.mxu0 %v4811
    %5087 = vmatmul.bf16.gmra.mxu0 %v4087
    %v5088 = vpop.f32.mrf.mxu0
    %v5089 = vadd.f32 %v5075, %v5088
    %v5090 = vpop.f32.mrf.mxu0
    %v5091 = vadd.f32 %v5077, %v5090
    %5092 = vdwg.mxu0
    %5093 = vmatpush.bf16.msra.mxu0 %v4856
    %5094 = vmatpush.bf16.msra.mxu0 %v4853
    %5095 = vmatpush.bf16.msra.mxu0 %v4850
    %5096 = vmatpush.bf16.msra.mxu0 %v4847
    %5097 = vmatpush.bf16.msra.mxu0 %v4844
    %5098 = vmatpush.bf16.msra.mxu0 %v4841
    %5099 = vmatpush.bf16.msra.mxu0 %v4838
    %5100 = vmatpush.bf16.msra.mxu0 %v4835
    %5101 = vmatmul.bf16.gmra.mxu0 %v4088
    %v5102 = vpop.f32.mrf.mxu0
    %v5103 = vadd.f32 %v5089, %v5102
    %v5104 = vpop.f32.mrf.mxu0
    %v5105 = vadd.f32 %v5091, %v5104
    %5106 = vdwg.mxu0
    %5107 = vmatpush.bf16.msra.mxu0 %v4880
    %5108 = vmatpush.bf16.msra.mxu0 %v4877
    %5109 = vmatpush.bf16.msra.mxu0 %v4874
    %5110 = vmatpush.bf16.msra.mxu0 %v4871
    %5111 = vmatpush.bf16.msra.mxu0 %v4868
    %5112 = vmatpush.bf16.msra.mxu0 %v4865
    %5113 = vmatpush.bf16.msra.mxu0 %v4862
    %5114 = vmatpush.bf16.msra.mxu0 %v4859
    %5115 = vmatmul.bf16.gmra.mxu0 %v4089
    %v5116 = vpop.f32.mrf.mxu0
    %v5117 = vadd.f32 %v5103, %v5116
    %v5118 = vpop.f32.mrf.mxu0
    %v5119 = vadd.f32 %v5105, %v5118
    %5120 = vdwg.mxu0
    %5121 = vmatpush.bf16.msra.mxu0 %v4904
    %5122 = vmatpush.bf16.msra.mxu0 %v4901
    %5123 = vmatpush.bf16.msra.mxu0 %v4898
    %5124 = vmatpush.bf16.msra.mxu0 %v4895
    %5125 = vmatpush.bf16.msra.mxu0 %v4892
    %5126 = vmatpush.bf16.msra.mxu0 %v4889
    %5127 = vmatpush.bf16.msra.mxu0 %v4886
    %5128 = vmatpush.bf16.msra.mxu0 %v4883
    %5129 = vmatmul.bf16.gmra.mxu0 %v4090
    %v5130 = vpop.f32.mrf.mxu0
    %v5131 = vadd.f32 %v5117, %v5130
    %v5132 = vpop.f32.mrf.mxu0
    %v5133 = vadd.f32 %v5119, %v5132
    %5134 = vdwg.mxu0
    %5135 = vmatpush.bf16.msra.mxu0 %v4785
    %5136 = vmatpush.bf16.msra.mxu0 %v4782
    %5137 = vmatpush.bf16.msra.mxu0 %v4779
    %5138 = vmatpush.bf16.msra.mxu0 %v4776
    %5139 = vmatpush.bf16.msra.mxu0 %v4773
    %5140 = vmatpush.bf16.msra.mxu0 %v4770
    %5141 = vmatpush.bf16.msra.mxu0 %v4767
    %5142 = vmatpush.bf16.msra.mxu0 %v4764
    %5143 = vmatmul.bf16.gmra.mxu0 %v4085
    %v5144 = vpop.f32.mrf.mxu0
    %v5145 = vadd.f32 0.0, %v5144
    %v5146 = vpop.f32.mrf.mxu0
    %v5147 = vadd.f32 0.0, %v5146
    %5148 = vdwg.mxu0
    %5149 = vmatpush.bf16.msra.mxu0 %v4809
    %5150 = vmatpush.bf16.msra.mxu0 %v4806
    %5151 = vmatpush.bf16.msra.mxu0 %v4803
    %5152 = vmatpush.bf16.msra.mxu0 %v4800
    %5153 = vmatpush.bf16.msra.mxu0 %v4797
    %5154 = vmatpush.bf16.msra.mxu0 %v4794
    %5155 = vmatpush.bf16.msra.mxu0 %v4791
    %5156 = vmatpush.bf16.msra.mxu0 %v4788
    %5157 = vmatmul.bf16.gmra.mxu0 %v4086
    %v5158 = vpop.f32.mrf.mxu0
    %v5159 = vadd.f32 %v5145, %v5158
    %v5160 = vpop.f32.mrf.mxu0
    %v5161 = vadd.f32 %v5147, %v5160
    %5162 = vdwg.mxu0
    %5163 = vmatpush.bf16.msra.mxu0 %v4833
    %5164 = vmatpush.bf16.msra.mxu0 %v4830
    %5165 = vmatpush.bf16.msra.mxu0 %v4827
    %5166 = vmatpush.bf16.msra.mxu0 %v4824
    %5167 = vmatpush.bf16.msra.mxu0 %v4821
    %5168 = vmatpush.bf16.msra.mxu0 %v4818
    %5169 = vmatpush.bf16.msra.mxu0 %v4815
    %5170 = vmatpush.bf16.msra.mxu0 %v4812
    %5171 = vmatmul.bf16.gmra.mxu0 %v4087
    %v5172 = vpop.f32.mrf.mxu0
    %v5173 = vadd.f32 %v5159, %v5172
    %v5174 = vpop.f32.mrf.mxu0
    %v5175 = vadd.f32 %v5161, %v5174
    %5176 = vdwg.mxu0
    %5177 = vmatpush.bf16.msra.mxu0 %v4857
    %5178 = vmatpush.bf16.msra.mxu0 %v4854
    %5179 = vmatpush.bf16.msra.mxu0 %v4851
    %5180 = vmatpush.bf16.msra.mxu0 %v4848
    %5181 = vmatpush.bf16.msra.mxu0 %v4845
    %5182 = vmatpush.bf16.msra.mxu0 %v4842
    %5183 = vmatpush.bf16.msra.mxu0 %v4839
    %5184 = vmatpush.bf16.msra.mxu0 %v4836
    %5185 = vmatmul.bf16.gmra.mxu0 %v4088
    %v5186 = vpop.f32.mrf.mxu0
    %v5187 = vadd.f32 %v5173, %v5186
    %v5188 = vpop.f32.mrf.mxu0
    %v5189 = vadd.f32 %v5175, %v5188
    %5190 = vdwg.mxu0
    %5191 = vmatpush.bf16.msra.mxu0 %v4881
    %5192 = vmatpush.bf16.msra.mxu0 %v4878
    %5193 = vmatpush.bf16.msra.mxu0 %v4875
    %5194 = vmatpush.bf16.msra.mxu0 %v4872
    %5195 = vmatpush.bf16.msra.mxu0 %v4869
    %5196 = vmatpush.bf16.msra.mxu0 %v4866
    %5197 = vmatpush.bf16.msra.mxu0 %v4863
    %5198 = vmatpush.bf16.msra.mxu0 %v4860
    %5199 = vmatmul.bf16.gmra.mxu0 %v4089
    %v5200 = vpop.f32.mrf.mxu0
    %v5201 = vadd.f32 %v5187, %v5200
    %v5202 = vpop.f32.mrf.mxu0
    %v5203 = vadd.f32 %v5189, %v5202
    %5204 = vdwg.mxu0
    %5205 = vmatpush.bf16.msra.mxu0 %v4905
    %5206 = vmatpush.bf16.msra.mxu0 %v4902
    %5207 = vmatpush.bf16.msra.mxu0 %v4899
    %5208 = vmatpush.bf16.msra.mxu0 %v4896
    %5209 = vmatpush.bf16.msra.mxu0 %v4893
    %5210 = vmatpush.bf16.msra.mxu0 %v4890
    %5211 = vmatpush.bf16.msra.mxu0 %v4887
    %5212 = vmatpush.bf16.msra.mxu0 %v4884
    %5213 = vmatmul.bf16.gmra.mxu0 %v4090
    %v5214 = vpop.f32.mrf.mxu0
    %v5215 = vadd.f32 %v5201, %v5214
    %v5216 = vpop.f32.mrf.mxu0
    %v5217 = vadd.f32 %v5203, %v5216
    %5218 = vdwg.mxu0
    %5219 = vmatpush.bf16.msra.mxu0 %v4786
    %5220 = vmatpush.bf16.msra.mxu0 %v4783
    %5221 = vmatpush.bf16.msra.mxu0 %v4780
    %5222 = vmatpush.bf16.msra.mxu0 %v4777
    %5223 = vmatpush.bf16.msra.mxu0 %v4774
    %5224 = vmatpush.bf16.msra.mxu0 %v4771
    %5225 = vmatpush.bf16.msra.mxu0 %v4768
    %5226 = vmatpush.bf16.msra.mxu0 %v4765
    %5227 = vmatmul.bf16.gmra.mxu0 %v4085
    %v5228 = vpop.f32.mrf.mxu0
    %v5229 = vadd.f32 0.0, %v5228
    %v5230 = vpop.f32.mrf.mxu0
    %v5231 = vadd.f32 0.0, %v5230
    %5232 = vdwg.mxu0
    %5233 = vmatpush.bf16.msra.mxu0 %v4810
    %5234 = vmatpush.bf16.msra.mxu0 %v4807
    %5235 = vmatpush.bf16.msra.mxu0 %v4804
    %5236 = vmatpush.bf16.msra.mxu0 %v4801
    %5237 = vmatpush.bf16.msra.mxu0 %v4798
    %5238 = vmatpush.bf16.msra.mxu0 %v4795
    %5239 = vmatpush.bf16.msra.mxu0 %v4792
    %5240 = vmatpush.bf16.msra.mxu0 %v4789
    %5241 = vmatmul.bf16.gmra.mxu0 %v4086
    %v5242 = vpop.f32.mrf.mxu0
    %v5243 = vadd.f32 %v5229, %v5242
    %v5244 = vpop.f32.mrf.mxu0
    %v5245 = vadd.f32 %v5231, %v5244
    %5246 = vdwg.mxu0
    %5247 = vmatpush.bf16.msra.mxu0 %v4834
    %5248 = vmatpush.bf16.msra.mxu0 %v4831
    %5249 = vmatpush.bf16.msra.mxu0 %v4828
    %5250 = vmatpush.bf16.msra.mxu0 %v4825
    %5251 = vmatpush.bf16.msra.mxu0 %v4822
    %5252 = vmatpush.bf16.msra.mxu0 %v4819
    %5253 = vmatpush.bf16.msra.mxu0 %v4816
    %5254 = vmatpush.bf16.msra.mxu0 %v4813
    %5255 = vmatmul.bf16.gmra.mxu0 %v4087
    %v5256 = vpop.f32.mrf.mxu0
    %v5257 = vadd.f32 %v5243, %v5256
    %v5258 = vpop.f32.mrf.mxu0
    %v5259 = vadd.f32 %v5245, %v5258
    %5260 = vdwg.mxu0
    %5261 = vmatpush.bf16.msra.mxu0 %v4858
    %5262 = vmatpush.bf16.msra.mxu0 %v4855
    %5263 = vmatpush.bf16.msra.mxu0 %v4852
    %5264 = vmatpush.bf16.msra.mxu0 %v4849
    %5265 = vmatpush.bf16.msra.mxu0 %v4846
    %5266 = vmatpush.bf16.msra.mxu0 %v4843
    %5267 = vmatpush.bf16.msra.mxu0 %v4840
    %5268 = vmatpush.bf16.msra.mxu0 %v4837
    %5269 = vmatmul.bf16.gmra.mxu0 %v4088
    %v5270 = vpop.f32.mrf.mxu0
    %v5271 = vadd.f32 %v5257, %v5270
    %v5272 = vpop.f32.mrf.mxu0
    %v5273 = vadd.f32 %v5259, %v5272
    %5274 = vdwg.mxu0
    %5275 = vmatpush.bf16.msra.mxu0 %v4882
    %5276 = vmatpush.bf16.msra.mxu0 %v4879
    %5277 = vmatpush.bf16.msra.mxu0 %v4876
    %5278 = vmatpush.bf16.msra.mxu0 %v4873
    %5279 = vmatpush.bf16.msra.mxu0 %v4870
    %5280 = vmatpush.bf16.msra.mxu0 %v4867
    %5281 = vmatpush.bf16.msra.mxu0 %v4864
    %5282 = vmatpush.bf16.msra.mxu0 %v4861
    %5283 = vmatmul.bf16.gmra.mxu0 %v4089
    %v5284 = vpop.f32.mrf.mxu0
    %v5285 = vadd.f32 %v5271, %v5284
    %v5286 = vpop.f32.mrf.mxu0
    %v5287 = vadd.f32 %v5273, %v5286
    %5288 = vdwg.mxu0
    %5289 = vmatpush.bf16.msra.mxu0 %v4906
    %5290 = vmatpush.bf16.msra.mxu0 %v4903
    %5291 = vmatpush.bf16.msra.mxu0 %v4900
    %5292 = vmatpush.bf16.msra.mxu0 %v4897
    %5293 = vmatpush.bf16.msra.mxu0 %v4894
    %5294 = vmatpush.bf16.msra.mxu0 %v4891
    %5295 = vmatpush.bf16.msra.mxu0 %v4888
    %5296 = vmatpush.bf16.msra.mxu0 %v4885
    %5297 = vmatmul.bf16.gmra.mxu0 %v4090
    %v5298 = vpop.f32.mrf.mxu0
    %v5299 = vadd.f32 %v5285, %v5298
    %v5300 = vpop.f32.mrf.mxu0
    %v5301 = vadd.f32 %v5287, %v5300
    %5302 = vdwg.mxu0
    %v5303 = vld [vmem:[#allocation9] sm:$0x7]
    %v5305 = vperm.slane %v5303, 0
    %v5306 = vperm.slane %v5303, 1
    %v5307 = vperm.slane %v5303, 2
    %v5311 = vmul.f32 %v5131, %v5305
    %v5312 = vmul.f32 %v5215, %v5306
    %v5313 = vmul.f32 %v5299, %v5307
    %v5314 = vmul.f32 %v5133, %v5305
    %v5315 = vmul.f32 %v5217, %v5306
    %v5316 = vmul.f32 %v5301, %v5307
    %v5317 = vld [vmem:[#allocation10] sm:$0x7]
    %v5319 = vperm.slane %v5317, 0
    %v5320 = vperm.slane %v5317, 1
    %v5321 = vperm.slane %v5317, 2
    %v5325 = vadd.f32 %v5311, %v5319
    %v5326 = vadd.f32 %v5312, %v5320
    %v5327 = vadd.f32 %v5313, %v5321
    %v5328 = vadd.f32 %v5314, %v5319
    %v5329 = vadd.f32 %v5315, %v5320
    %v5330 = vadd.f32 %v5316, %v5321
    %v5331 = vmax.f32 %v5325, 0.0
    %v5332 = vmax.f32 %v5326, 0.0
    %v5333 = vmax.f32 %v5327, 0.0
    %v5334 = vmax.f32 %v5328, 0.0
    %v5335 = vmax.f32 %v5329, 0.0
    %v5336 = vmax.f32 %v5330, 0.0
    %v5337 = vpack.c.bf16 %v5334, %v5331
    %v5338 = vpack.c.bf16 %v5335, %v5332
    %v5339 = vpack.c.bf16 %v5336, %v5333
    %v5340 = vld [vmem:[#allocation12] sm:$0xf]
    %v5341 = vld [vmem:[#allocation12 + $0x4] sm:$0xf]
    %v5342 = vld [vmem:[#allocation12 + $0x8] sm:$0xf]
    %v5343 = vld [vmem:[#allocation12 + $0xc] sm:$0xf]
    %v5344 = vld [vmem:[#allocation12 + $0x10] sm:$0xf]
    %v5345 = vld [vmem:[#allocation12 + $0x14] sm:$0xf]
    %v5346 = vld [vmem:[#allocation12 + $0x18] sm:$0xf]
    %v5347 = vld [vmem:[#allocation12 + $0x1c] sm:$0xf]
    %v5348 = vld [vmem:[#allocation12 + $0x20] sm:$0xf]
    %v5349 = vld [vmem:[#allocation12 + $0x24] sm:$0xf]
    %v5350 = vld [vmem:[#allocation12 + $0x28] sm:$0xf]
    %v5351 = vld [vmem:[#allocation12 + $0x2c] sm:$0xf]
    %v5352 = vld [vmem:[#allocation12 + $0x30] sm:$0xf]
    %v5353 = vld [vmem:[#allocation12 + $0x34] sm:$0xf]
    %v5354 = vld [vmem:[#allocation12 + $0x38] sm:$0xf]
    %v5355 = vld [vmem:[#allocation12 + $0x3c] sm:$0xf]
    %v5356 = vld [vmem:[#allocation12 + $0x40] sm:$0xf]
    %v5357 = vld [vmem:[#allocation12 + $0x44] sm:$0xf]
    %v5358 = vld [vmem:[#allocation12 + $0x48] sm:$0xf]
    %v5359 = vld [vmem:[#allocation12 + $0x4c] sm:$0xf]
    %v5360 = vld [vmem:[#allocation12 + $0x50] sm:$0xf]
    %v5361 = vld [vmem:[#allocation12 + $0x54] sm:$0xf]
    %v5362 = vld [vmem:[#allocation12 + $0x58] sm:$0xf]
    %v5363 = vld [vmem:[#allocation12 + $0x5c] sm:$0xf]
    %v5364 = vld [vmem:[#allocation12 + $0x60] sm:$0xf]
    %v5365 = vld [vmem:[#allocation12 + $0x64] sm:$0xf]
    %v5366 = vld [vmem:[#allocation12 + $0x68] sm:$0xf]
    %v5367 = vld [vmem:[#allocation12 + $0x6c] sm:$0xf]
    %v5368 = vld [vmem:[#allocation12 + $0x70] sm:$0xf]
    %v5369 = vld [vmem:[#allocation12 + $0x74] sm:$0xf]
    %v5370 = vld [vmem:[#allocation12 + $0x78] sm:$0xf]
    %v5371 = vld [vmem:[#allocation12 + $0x7c] sm:$0xf]
    %v5372 = vld [vmem:[#allocation12 + $0x80] sm:$0xf]
    %v5373 = vld [vmem:[#allocation12 + $0x84] sm:$0xf]
    %v5374 = vld [vmem:[#allocation12 + $0x88] sm:$0xf]
    %v5375 = vld [vmem:[#allocation12 + $0x8c] sm:$0xf]
    %v5376 = vld [vmem:[#allocation12 + $0x90] sm:$0xf]
    %v5377 = vld [vmem:[#allocation12 + $0x94] sm:$0xf]
    %v5378 = vld [vmem:[#allocation12 + $0x98] sm:$0xf]
    %v5379 = vld [vmem:[#allocation12 + $0x9c] sm:$0xf]
    %v5380 = vld [vmem:[#allocation12 + $0xa0] sm:$0xf]
    %v5381 = vld [vmem:[#allocation12 + $0xa4] sm:$0xf]
    %v5382 = vld [vmem:[#allocation12 + $0xa8] sm:$0xf]
    %v5383 = vld [vmem:[#allocation12 + $0xac] sm:$0xf]
    %v5384 = vld [vmem:[#allocation12 + $0xb0] sm:$0xf]
    %v5385 = vld [vmem:[#allocation12 + $0xb4] sm:$0xf]
    %v5386 = vld [vmem:[#allocation12 + $0xb8] sm:$0xf]
    %v5387 = vld [vmem:[#allocation12 + $0xbc] sm:$0xf]
    %v5436 = vunpack.c.l.b16 %v5340
    %v5437 = vunpack.c.l.b16 %v5341
    %v5438 = vunpack.c.l.b16 %v5342
    %v5439 = vunpack.c.l.b16 %v5343
    %v5440 = vunpack.c.l.b16 %v5344
    %v5441 = vunpack.c.l.b16 %v5345
    %v5442 = vunpack.c.l.b16 %v5346
    %v5443 = vunpack.c.l.b16 %v5347
    %v5444 = vunpack.c.l.b16 %v5348
    %v5445 = vunpack.c.l.b16 %v5349
    %v5446 = vunpack.c.l.b16 %v5350
    %v5447 = vunpack.c.l.b16 %v5351
    %v5448 = vunpack.c.l.b16 %v5352
    %v5449 = vunpack.c.l.b16 %v5353
    %v5450 = vunpack.c.l.b16 %v5354
    %v5451 = vunpack.c.l.b16 %v5355
    %v5452 = vunpack.c.l.b16 %v5356
    %v5453 = vunpack.c.l.b16 %v5357
    %v5454 = vunpack.c.l.b16 %v5358
    %v5455 = vunpack.c.l.b16 %v5359
    %v5456 = vunpack.c.l.b16 %v5360
    %v5457 = vunpack.c.l.b16 %v5361
    %v5458 = vunpack.c.l.b16 %v5362
    %v5459 = vunpack.c.l.b16 %v5363
    %v5460 = vunpack.c.l.b16 %v5364
    %v5461 = vunpack.c.l.b16 %v5365
    %v5462 = vunpack.c.l.b16 %v5366
    %v5463 = vunpack.c.l.b16 %v5367
    %v5464 = vunpack.c.l.b16 %v5368
    %v5465 = vunpack.c.l.b16 %v5369
    %v5466 = vunpack.c.l.b16 %v5370
    %v5467 = vunpack.c.l.b16 %v5371
    %v5468 = vunpack.c.l.b16 %v5372
    %v5469 = vunpack.c.l.b16 %v5373
    %v5470 = vunpack.c.l.b16 %v5374
    %v5471 = vunpack.c.l.b16 %v5375
    %v5472 = vunpack.c.l.b16 %v5376
    %v5473 = vunpack.c.l.b16 %v5377
    %v5474 = vunpack.c.l.b16 %v5378
    %v5475 = vunpack.c.l.b16 %v5379
    %v5476 = vunpack.c.l.b16 %v5380
    %v5477 = vunpack.c.l.b16 %v5381
    %v5478 = vunpack.c.l.b16 %v5382
    %v5479 = vunpack.c.l.b16 %v5383
    %v5480 = vunpack.c.l.b16 %v5384
    %v5481 = vunpack.c.l.b16 %v5385
    %v5482 = vunpack.c.l.b16 %v5386
    %v5483 = vunpack.c.l.b16 %v5387
    %v5484 = vpack.c.b16 %v5437, %v5436
    %v5485 = vpack.c.b16 %v5439, %v5438
    %v5486 = vpack.c.b16 %v5441, %v5440
    %v5487 = vpack.c.b16 %v5443, %v5442
    %v5488 = vpack.c.b16 %v5445, %v5444
    %v5489 = vpack.c.b16 %v5447, %v5446
    %v5490 = vpack.c.b16 %v5449, %v5448
    %v5491 = vpack.c.b16 %v5451, %v5450
    %v5492 = vpack.c.b16 %v5453, %v5452
    %v5493 = vpack.c.b16 %v5455, %v5454
    %v5494 = vpack.c.b16 %v5457, %v5456
    %v5495 = vpack.c.b16 %v5459, %v5458
    %v5496 = vpack.c.b16 %v5461, %v5460
    %v5497 = vpack.c.b16 %v5463, %v5462
    %v5498 = vpack.c.b16 %v5465, %v5464
    %v5499 = vpack.c.b16 %v5467, %v5466
    %v5500 = vpack.c.b16 %v5469, %v5468
    %v5501 = vpack.c.b16 %v5471, %v5470
    %v5502 = vpack.c.b16 %v5473, %v5472
    %v5503 = vpack.c.b16 %v5475, %v5474
    %v5504 = vpack.c.b16 %v5477, %v5476
    %v5505 = vpack.c.b16 %v5479, %v5478
    %v5506 = vpack.c.b16 %v5481, %v5480
    %v5507 = vpack.c.b16 %v5483, %v5482
    %5532 = vmatpush.bf16.msra.mxu0 %v5491
    %5533 = vmatpush.bf16.msra.mxu0 %v5490
    %5534 = vmatpush.bf16.msra.mxu0 %v5489
    %5535 = vmatpush.bf16.msra.mxu0 %v5488
    %5536 = vmatpush.bf16.msra.mxu0 %v5487
    %5537 = vmatpush.bf16.msra.mxu0 %v5486
    %5538 = vmatpush.bf16.msra.mxu0 %v5485
    %5539 = vmatpush.bf16.msra.mxu0 %v5484
    %5540 = vmatmul.bf16.gmra.mxu0 %v5337
    %v5541 = vpop.f32.mrf.mxu0
    %v5542 = vadd.f32 0.0, %v5541
    %v5543 = vpop.f32.mrf.mxu0
    %v5544 = vadd.f32 0.0, %v5543
    %5545 = vdwg.mxu0
    %5546 = vmatpush.bf16.msra.mxu0 %v5499
    %5547 = vmatpush.bf16.msra.mxu0 %v5498
    %5548 = vmatpush.bf16.msra.mxu0 %v5497
    %5549 = vmatpush.bf16.msra.mxu0 %v5496
    %5550 = vmatpush.bf16.msra.mxu0 %v5495
    %5551 = vmatpush.bf16.msra.mxu0 %v5494
    %5552 = vmatpush.bf16.msra.mxu0 %v5493
    %5553 = vmatpush.bf16.msra.mxu0 %v5492
    %5554 = vmatmul.bf16.gmra.mxu0 %v5338
    %v5555 = vpop.f32.mrf.mxu0
    %v5556 = vadd.f32 %v5542, %v5555
    %v5557 = vpop.f32.mrf.mxu0
    %v5558 = vadd.f32 %v5544, %v5557
    %5559 = vdwg.mxu0
    %5560 = vmatpush.bf16.msra.mxu0 %v5507
    %5561 = vmatpush.bf16.msra.mxu0 %v5506
    %5562 = vmatpush.bf16.msra.mxu0 %v5505
    %5563 = vmatpush.bf16.msra.mxu0 %v5504
    %5564 = vmatpush.bf16.msra.mxu0 %v5503
    %5565 = vmatpush.bf16.msra.mxu0 %v5502
    %5566 = vmatpush.bf16.msra.mxu0 %v5501
    %5567 = vmatpush.bf16.msra.mxu0 %v5500
    %5568 = vmatmul.bf16.gmra.mxu0 %v5339
    %v5569 = vpop.f32.mrf.mxu0
    %v5570 = vadd.f32 %v5556, %v5569
    %v5571 = vpop.f32.mrf.mxu0
    %v5572 = vadd.f32 %v5558, %v5571
    %5573 = vdwg.mxu0
    %v5574 = vld [vmem:[#allocation13] sm:$0x1]
    %v5576 = vperm.slane %v5574, 0
    %v5578 = vmul.f32 %v5570, %v5576
    %v5579 = vmul.f32 %v5572, %v5576
    %v5580 = vld [vmem:[#allocation15] sm:$0x1]
    %v5582 = vperm.slane %v5580, 0
    %v5584 = vadd.f32 %v5578, %v5582
    %v5585 = vadd.f32 %v5579, %v5582
    %v5586 = vmax.f32 %v5584, 0.0
    %v5587 = vmax.f32 %v5585, 0.0
    %v5588 = vpack.c.bf16 %v5587, %v5586
    %v5589 = vld [vmem:[#allocation16] sm:$0xff]
    %v5590 = vld [vmem:[#allocation16 + $0x8] sm:$0xff]
    %v5591 = vld [vmem:[#allocation16 + $0x10] sm:$0xff]
    %v5592 = vld [vmem:[#allocation16 + $0x18] sm:$0xff]
    %v5593 = vld [vmem:[#allocation16 + $0x20] sm:$0xff]
    %v5594 = vld [vmem:[#allocation16 + $0x28] sm:$0xff]
    %v5595 = vld [vmem:[#allocation16 + $0x30] sm:$0xff]
    %v5596 = vld [vmem:[#allocation16 + $0x38] sm:$0xff]
    %v5597 = vld [vmem:[#allocation16 + $0x40] sm:$0xff]
    %v5598 = vld [vmem:[#allocation16 + $0x48] sm:$0xff]
    %v5599 = vld [vmem:[#allocation16 + $0x50] sm:$0xff]
    %v5600 = vld [vmem:[#allocation16 + $0x58] sm:$0xff]
    %v5601 = vld [vmem:[#allocation16 + $0x60] sm:$0xff]
    %v5602 = vld [vmem:[#allocation16 + $0x68] sm:$0xff]
    %v5603 = vld [vmem:[#allocation16 + $0x70] sm:$0xff]
    %v5604 = vld [vmem:[#allocation16 + $0x78] sm:$0xff]
    %v5605 = vld [vmem:[%s1] sm:$0xff]
    %v5606 = vld [vmem:[%s1 + $0x8] sm:$0xff]
    %v5607 = vld [vmem:[%s1 + $0x10] sm:$0xff]
    %v5608 = vld [vmem:[%s1 + $0x18] sm:$0xff]
    %v5625 = vunpack.c.l.b16 %v5589
    %v5626 = vunpack.c.h.b16 %v5589
    %v5627 = vunpack.c.l.b16 %v5590
    %v5628 = vunpack.c.h.b16 %v5590
    %v5629 = vunpack.c.l.b16 %v5591
    %v5630 = vunpack.c.h.b16 %v5591
    %v5631 = vunpack.c.l.b16 %v5592
    %v5632 = vunpack.c.h.b16 %v5592
    %v5633 = vunpack.c.l.b16 %v5593
    %v5634 = vunpack.c.h.b16 %v5593
    %v5635 = vunpack.c.l.b16 %v5594
    %v5636 = vunpack.c.h.b16 %v5594
    %v5637 = vunpack.c.l.b16 %v5595
    %v5638 = vunpack.c.h.b16 %v5595
    %v5639 = vunpack.c.l.b16 %v5596
    %v5640 = vunpack.c.h.b16 %v5596
    %v5641 = vunpack.c.l.b16 %v5597
    %v5642 = vunpack.c.h.b16 %v5597
    %v5643 = vunpack.c.l.b16 %v5598
    %v5644 = vunpack.c.h.b16 %v5598
    %v5645 = vunpack.c.l.b16 %v5599
    %v5646 = vunpack.c.h.b16 %v5599
    %v5647 = vunpack.c.l.b16 %v5600
    %v5648 = vunpack.c.h.b16 %v5600
    %v5649 = vunpack.c.l.b16 %v5601
    %v5650 = vunpack.c.h.b16 %v5601
    %v5651 = vunpack.c.l.b16 %v5602
    %v5652 = vunpack.c.h.b16 %v5602
    %v5653 = vunpack.c.l.b16 %v5603
    %v5654 = vunpack.c.h.b16 %v5603
    %v5655 = vunpack.c.l.b16 %v5604
    %v5656 = vunpack.c.h.b16 %v5604
    %v5657 = vpack.c.b16 %v5627, %v5625
    %v5658 = vpack.c.b16 %v5628, %v5626
    %v5659 = vpack.c.b16 %v5631, %v5629
    %v5660 = vpack.c.b16 %v5632, %v5630
    %v5661 = vpack.c.b16 %v5635, %v5633
    %v5662 = vpack.c.b16 %v5636, %v5634
    %v5663 = vpack.c.b16 %v5639, %v5637
    %v5664 = vpack.c.b16 %v5640, %v5638
    %v5665 = vpack.c.b16 %v5643, %v5641
    %v5666 = vpack.c.b16 %v5644, %v5642
    %v5667 = vpack.c.b16 %v5647, %v5645
    %v5668 = vpack.c.b16 %v5648, %v5646
    %v5669 = vpack.c.b16 %v5651, %v5649
    %v5670 = vpack.c.b16 %v5652, %v5650
    %v5671 = vpack.c.b16 %v5655, %v5653
    %v5672 = vpack.c.b16 %v5656, %v5654
    %5689 = vmatpush.bf16.msra.mxu0 %v5671
    %5690 = vmatpush.bf16.msra.mxu0 %v5669
    %5691 = vmatpush.bf16.msra.mxu0 %v5667
    %5692 = vmatpush.bf16.msra.mxu0 %v5665
    %5693 = vmatpush.bf16.msra.mxu0 %v5663
    %5694 = vmatpush.bf16.msra.mxu0 %v5661
    %5695 = vmatpush.bf16.msra.mxu0 %v5659
    %5696 = vmatpush.bf16.msra.mxu0 %v5657
    %5697 = vmatmul.bf16.gmra.mxu0 %v5588
    %v5698 = vpop.f32.mrf.mxu0
    %v5699 = vadd.f32 %v5605, %v5698
    %v5700 = vpop.f32.mrf.mxu0
    %v5701 = vadd.f32 %v5607, %v5700
    %5702 = vdwg.mxu0
    %5703 = vmatpush.bf16.msra.mxu0 %v5672
    %5704 = vmatpush.bf16.msra.mxu0 %v5670
    %5705 = vmatpush.bf16.msra.mxu0 %v5668
    %5706 = vmatpush.bf16.msra.mxu0 %v5666
    %5707 = vmatpush.bf16.msra.mxu0 %v5664
    %5708 = vmatpush.bf16.msra.mxu0 %v5662
    %5709 = vmatpush.bf16.msra.mxu0 %v5660
    %5710 = vmatpush.bf16.msra.mxu0 %v5658
    %5711 = vmatmul.bf16.gmra.mxu0 %v5588
    %v5712 = vpop.f32.mrf.mxu0
    %v5713 = vadd.f32 %v5606, %v5712
    %v5714 = vpop.f32.mrf.mxu0
    %v5715 = vadd.f32 %v5608, %v5714
    %5716 = vdwg.mxu0
    %v5717 = vld [vmem:[#allocation18] sm:$0x3]
    %v5719 = vperm.slane %v5717, 0
    %v5720 = vperm.slane %v5717, 1
    %v5723 = vadd.f32 %v5699, %v5719
    %v5724 = vadd.f32 %v5713, %v5720
    %v5725 = vadd.f32 %v5701, %v5719
    %v5726 = vadd.f32 %v5715, %v5720
    %v5727 = vmax.f32 %v5723, 0.0
    %v5728 = vmax.f32 %v5724, 0.0
    %v5729 = vmax.f32 %v5725, 0.0
    %v5730 = vmax.f32 %v5726, 0.0
    %v5731 = vpack.c.bf16 %v5729, %v5727
    %v5732 = vpack.c.bf16 %v5730, %v5728
    %v5733 = vld [vmem:[#allocation19] sm:$0xf]
    %v5734 = vld [vmem:[#allocation19 + $0x4] sm:$0xf]
    %v5735 = vld [vmem:[#allocation19 + $0x8] sm:$0xf]
    %v5736 = vld [vmem:[#allocation19 + $0xc] sm:$0xf]
    %v5737 = vld [vmem:[#allocation19 + $0x10] sm:$0xf]
    %v5738 = vld [vmem:[#allocation19 + $0x14] sm:$0xf]
    %v5739 = vld [vmem:[#allocation19 + $0x18] sm:$0xf]
    %v5740 = vld [vmem:[#allocation19 + $0x1c] sm:$0xf]
    %v5741 = vld [vmem:[#allocation19 + $0x20] sm:$0xf]
    %v5742 = vld [vmem:[#allocation19 + $0x24] sm:$0xf]
    %v5743 = vld [vmem:[#allocation19 + $0x28] sm:$0xf]
    %v5744 = vld [vmem:[#allocation19 + $0x2c] sm:$0xf]
    %v5745 = vld [vmem:[#allocation19 + $0x30] sm:$0xf]
    %v5746 = vld [vmem:[#allocation19 + $0x34] sm:$0xf]
    %v5747 = vld [vmem:[#allocation19 + $0x38] sm:$0xf]
    %v5748 = vld [vmem:[#allocation19 + $0x3c] sm:$0xf]
    %v5749 = vld [vmem:[#allocation19 + $0x40] sm:$0xf]
    %v5750 = vld [vmem:[#allocation19 + $0x44] sm:$0xf]
    %v5751 = vld [vmem:[#allocation19 + $0x48] sm:$0xf]
    %v5752 = vld [vmem:[#allocation19 + $0x4c] sm:$0xf]
    %v5753 = vld [vmem:[#allocation19 + $0x50] sm:$0xf]
    %v5754 = vld [vmem:[#allocation19 + $0x54] sm:$0xf]
    %v5755 = vld [vmem:[#allocation19 + $0x58] sm:$0xf]
    %v5756 = vld [vmem:[#allocation19 + $0x5c] sm:$0xf]
    %v5757 = vld [vmem:[#allocation19 + $0x60] sm:$0xf]
    %v5758 = vld [vmem:[#allocation19 + $0x64] sm:$0xf]
    %v5759 = vld [vmem:[#allocation19 + $0x68] sm:$0xf]
    %v5760 = vld [vmem:[#allocation19 + $0x6c] sm:$0xf]
    %v5761 = vld [vmem:[#allocation19 + $0x70] sm:$0xf]
    %v5762 = vld [vmem:[#allocation19 + $0x74] sm:$0xf]
    %v5763 = vld [vmem:[#allocation19 + $0x78] sm:$0xf]
    %v5764 = vld [vmem:[#allocation19 + $0x7c] sm:$0xf]
    %v5765 = vld [vmem:[#allocation21] sm:$0x1]
    %v5767 = vperm.slane %v5765, 0
    %v5801 = vunpack.c.l.b16 %v5733
    %v5802 = vunpack.c.l.b16 %v5734
    %v5803 = vunpack.c.l.b16 %v5735
    %v5804 = vunpack.c.l.b16 %v5736
    %v5805 = vunpack.c.l.b16 %v5737
    %v5806 = vunpack.c.l.b16 %v5738
    %v5807 = vunpack.c.l.b16 %v5739
    %v5808 = vunpack.c.l.b16 %v5740
    %v5809 = vunpack.c.l.b16 %v5741
    %v5810 = vunpack.c.l.b16 %v5742
    %v5811 = vunpack.c.l.b16 %v5743
    %v5812 = vunpack.c.l.b16 %v5744
    %v5813 = vunpack.c.l.b16 %v5745
    %v5814 = vunpack.c.l.b16 %v5746
    %v5815 = vunpack.c.l.b16 %v5747
    %v5816 = vunpack.c.l.b16 %v5748
    %v5817 = vunpack.c.l.b16 %v5749
    %v5818 = vunpack.c.l.b16 %v5750
    %v5819 = vunpack.c.l.b16 %v5751
    %v5820 = vunpack.c.l.b16 %v5752
    %v5821 = vunpack.c.l.b16 %v5753
    %v5822 = vunpack.c.l.b16 %v5754
    %v5823 = vunpack.c.l.b16 %v5755
    %v5824 = vunpack.c.l.b16 %v5756
    %v5825 = vunpack.c.l.b16 %v5757
    %v5826 = vunpack.c.l.b16 %v5758
    %v5827 = vunpack.c.l.b16 %v5759
    %v5828 = vunpack.c.l.b16 %v5760
    %v5829 = vunpack.c.l.b16 %v5761
    %v5830 = vunpack.c.l.b16 %v5762
    %v5831 = vunpack.c.l.b16 %v5763
    %v5832 = vunpack.c.l.b16 %v5764
    %v5833 = vpack.c.b16 %v5802, %v5801
    %v5834 = vpack.c.b16 %v5804, %v5803
    %v5835 = vpack.c.b16 %v5806, %v5805
    %v5836 = vpack.c.b16 %v5808, %v5807
    %v5837 = vpack.c.b16 %v5810, %v5809
    %v5838 = vpack.c.b16 %v5812, %v5811
    %v5839 = vpack.c.b16 %v5814, %v5813
    %v5840 = vpack.c.b16 %v5816, %v5815
    %v5841 = vpack.c.b16 %v5818, %v5817
    %v5842 = vpack.c.b16 %v5820, %v5819
    %v5843 = vpack.c.b16 %v5822, %v5821
    %v5844 = vpack.c.b16 %v5824, %v5823
    %v5845 = vpack.c.b16 %v5826, %v5825
    %v5846 = vpack.c.b16 %v5828, %v5827
    %v5847 = vpack.c.b16 %v5830, %v5829
    %v5848 = vpack.c.b16 %v5832, %v5831
    %5865 = vmatpush.bf16.msra.mxu0 %v5840
    %5866 = vmatpush.bf16.msra.mxu0 %v5839
    %5867 = vmatpush.bf16.msra.mxu0 %v5838
    %5868 = vmatpush.bf16.msra.mxu0 %v5837
    %5869 = vmatpush.bf16.msra.mxu0 %v5836
    %5870 = vmatpush.bf16.msra.mxu0 %v5835
    %5871 = vmatpush.bf16.msra.mxu0 %v5834
    %5872 = vmatpush.bf16.msra.mxu0 %v5833
    %5873 = vmatmul.bf16.gmra.mxu0 %v5731
    %v5874 = vpop.f32.mrf.mxu0
    %v5875 = vadd.f32 %v5767, %v5874
    %v5876 = vpop.f32.mrf.mxu0
    %v5877 = vadd.f32 %v5767, %v5876
    %5878 = vdwg.mxu0
    %5879 = vmatpush.bf16.msra.mxu0 %v5848
    %5880 = vmatpush.bf16.msra.mxu0 %v5847
    %5881 = vmatpush.bf16.msra.mxu0 %v5846
    %5882 = vmatpush.bf16.msra.mxu0 %v5845
    %5883 = vmatpush.bf16.msra.mxu0 %v5844
    %5884 = vmatpush.bf16.msra.mxu0 %v5843
    %5885 = vmatpush.bf16.msra.mxu0 %v5842
    %5886 = vmatpush.bf16.msra.mxu0 %v5841
    %5887 = vmatmul.bf16.gmra.mxu0 %v5732
    %v5888 = vpop.f32.mrf.mxu0
    %v5889 = vadd.f32 %v5875, %v5888
    %v5890 = vpop.f32.mrf.mxu0
    %v5891 = vadd.f32 %v5877, %v5890
    %5892 = vdwg.mxu0
    %v5893 = vmax.f32 %v5889, 0.0
    %v5894 = vmax.f32 %v5891, 0.0
    %v5895 = vld [vmem:[#allocation22] sm:$0xff]
    %v5896 = vld [vmem:[#allocation22 + $0x8] sm:$0xff]
    %v5897 = vld [vmem:[#allocation22 + $0x10] sm:$0xff]
    %v5898 = vld [vmem:[#allocation22 + $0x18] sm:$0xff]
    %v5899 = vld [vmem:[#allocation22 + $0x20] sm:$0xff]
    %v5900 = vld [vmem:[#allocation22 + $0x28] sm:$0xff]
    %v5901 = vld [vmem:[#allocation22 + $0x30] sm:$0xff]
    %v5902 = vld [vmem:[#allocation22 + $0x38] sm:$0xff]
    %v5903 = vld [vmem:[#allocation22 + $0x40] sm:$0xff]
    %v5904 = vld [vmem:[#allocation22 + $0x48] sm:$0xff]
    %v5905 = vld [vmem:[#allocation22 + $0x50] sm:$0xff]
    %v5906 = vld [vmem:[#allocation22 + $0x58] sm:$0xff]
    %v5907 = vld [vmem:[#allocation22 + $0x60] sm:$0xff]
    %v5908 = vld [vmem:[#allocation22 + $0x68] sm:$0xff]
    %v5909 = vld [vmem:[#allocation22 + $0x70] sm:$0xff]
    %v5910 = vld [vmem:[#allocation22 + $0x78] sm:$0xff]
    %v5911 = vld [vmem:[#allocation24] sm:$0x1]
    %v5913 = vperm.slane %v5911, 0
    %5915 = vmatpush.msra.mxu0 %v5910
    %5916 = vmatpush.msra.mxu0 %v5909
    %5917 = vmatpush.msra.mxu0 %v5908
    %5918 = vmatpush.msra.mxu0 %v5907
    %5919 = vmatpush.msra.mxu0 %v5906
    %5920 = vmatpush.msra.mxu0 %v5905
    %5921 = vmatpush.msra.mxu0 %v5904
    %5922 = vmatpush.msra.mxu0 %v5903
    %5923 = vmatpush.msra.mxu0 %v5902
    %5924 = vmatpush.msra.mxu0 %v5901
    %5925 = vmatpush.msra.mxu0 %v5900
    %5926 = vmatpush.msra.mxu0 %v5899
    %5927 = vmatpush.msra.mxu0 %v5898
    %5928 = vmatpush.msra.mxu0 %v5897
    %5929 = vmatpush.msra.mxu0 %v5896
    %5930 = vmatpush.msra.mxu0 %v5895
    %5931 = vmatmul.f32.gmra.mxu0 %v5893
    %v5932 = vpop.f32.mrf.mxu0
    %v5933 = vadd.f32 %v5913, %v5932
    %5934 = vmatmul.f32.gmra.mxu0 %v5894
    %v5935 = vpop.f32.mrf.mxu0
    %v5936 = vadd.f32 %v5913, %v5935
    %5937 = vdwg.mxu0
    %v5938 = vand.u32 2147483647, %v5933
    %v5939 = vand.u32 2147483647, %v5936
    %v5940 = vsub.f32 0.0, %v5938
    %v5941 = vsub.f32 0.0, %v5939
    %v5942 = vmul.f32 %v5940, 1.442695
    %v5943 = vpow.pop %v5942
    %v5944 = vmul.f32 %v5941, 1.442695
    %v5945 = vpow.pop %v5944
    %v5946 = vadd.f32 %v5943, 1.0
    %v5947 = vadd.f32 %v5945, 1.0
    %v5948 = vrcp.pop %v5946
    %v5949 = vmul.f32 %v5946, %v5948
    %v5950 = vsub.f32 1.0, %v5949
    %v5951 = vmul.f32 %v5948, %v5950
    %v5952 = vadd.f32 %v5948, %v5951
    %vm5953 = vweird.f32 %v5946
    %vm5954 = vweird.f32 %v5948
    %vm5955 = vmor %vm5953, %vm5954
    %v5956 = vsel %vm5955, %v5948, %v5952
    %v5957 = vand.u32 2147483647, %v5946
    %vm5958 = vcmp.eq.f32.partialorder %v5957, 8.507059e+37
    %v5959 = vand.u32 %v5946, 2147483648
    %v5960 = vor.u32 1.1754944e-38, %v5959
    %v5961 = vsel %vm5958, %v5960, %v5956
    %v5962 = vmul.f32 1.0, %v5961
    %v5963 = vrcp.pop %v5947
    %v5964 = vmul.f32 %v5947, %v5963
    %v5965 = vsub.f32 1.0, %v5964
    %v5966 = vmul.f32 %v5963, %v5965
    %v5967 = vadd.f32 %v5963, %v5966
    %vm5968 = vweird.f32 %v5947
    %vm5969 = vweird.f32 %v5963
    %vm5970 = vmor %vm5968, %vm5969
    %v5971 = vsel %vm5970, %v5963, %v5967
    %v5972 = vand.u32 2147483647, %v5947
    %vm5973 = vcmp.eq.f32.partialorder %v5972, 8.507059e+37
    %v5974 = vand.u32 %v5947, 2147483648
    %v5975 = vor.u32 1.1754944e-38, %v5974
    %v5976 = vsel %vm5973, %v5975, %v5971
    %v5977 = vmul.f32 1.0, %v5976
    %vm5978 = vcmp.ge.f32.partialorder %v5933, 0.0
    %vm5979 = vcmp.ge.f32.partialorder %v5936, 0.0
    %v5980 = vmul.f32 %v5943, %v5962
    %v5981 = vmul.f32 %v5945, %v5977
    %v5982 = vsel %vm5978, %v5962, %v5980
    %v5983 = vsel %vm5979, %v5977, %v5981
    %5984 = vst [vmem:[%s17] sm:$0xff] %v5982
    %5985 = vst [vmem:[%s17 + $0x8] sm:$0xff] %v5983
    // Predicated region
    $region130: #{imu_lara_discriminator_forward.1} parent=1 // pred_check
      _
    $region131: #{imu_lara_discriminator_forward.1} parent=1 // pred_check_branch
      %5987 = sbr.rel (0) target = $region133
    $region132: #{imu_lara_discriminator_forward.1} parent=1 // pred_region
      _
    $region133: #{imu_lara_discriminator_forward.1} parent=1 // pred_fallthru
      _
    // Predicated region
    $region134: #{imu_lara_discriminator_forward.1} parent=1 // pred_check
      _
    $region135: #{imu_lara_discriminator_forward.1} parent=1 // pred_check_branch
      %5989 = sbr.rel (0) target = $region137
    $region136: #{imu_lara_discriminator_forward.1} parent=1 // pred_region
      _
    $region137: #{imu_lara_discriminator_forward.1} parent=1 // pred_fallthru
      _
    %5990 = vsyncpa [#allocation3], 1
    %5991 = vsyncpa [#allocation5], 1
    %5992 = vsyncpa [#allocation8], 1
    %5993 = vsyncpa [#allocation11], 1
    %5994 = vsyncpa [#allocation14], 1
    %5995 = vsyncpa [#allocation17], 1
    %5996 = vsyncpa [#allocation20], 1
    %5997 = vsyncpa [#allocation23], 1

</llo_original>
